<compile_context>
chip_gen: v7x
topology: tpu7x:2x2x1
jax: 0.10.0
libtpu: 0.0.40
codegen_flags: <defaults>
</compile_context>

<pallas_src>
import math

import jax
import jax.numpy as jnp
from jax import lax
from jax.experimental import pallas as pl
from jax.experimental.pallas import tpu as pltpu


def _round_up(v, m):
    return (v + m - 1) // m * m


def _pick_row_tile(H, L, target=8):
    """Largest divisor of H in [L, max(target, L)]; fall back to H (one tile)."""
    hi = min(H, max(target, L))
    for th in range(hi, L - 1, -1):
        if H % th == 0:
            return th
    return H


def _make_fused_kernel(*, num_layers, TH, W, Cp, Cout_p, dtype):
    L = num_layers
    SLAB = TH + 2 * L          # input rows held per tile (core rows + halo)

    def kernel(*refs):
        x_hbm = refs[0]                              # (N, H, W+2, Cp) in HBM
        params = refs[1:1 + 2 * L]                   # (w0, b0, w1, b1, ...)
        o_ref = refs[1 + 2 * L]                      # (1, TH, W, Cout_p)
        buf0, buf1, sem = refs[2 + 2 * L:]

        n = pl.program_id(0)
        h = pl.program_id(1)
        nh = pl.num_programs(1)
        r0 = pl.multiple_of(h * TH, TH)

        # ---- stage the (TH + 2L)-row input slab (with halo) into buf0 -------
        # The W frame columns (0 and W+1) arrive zero from the padded input;
        # image-boundary halo rows are zeroed explicitly below.
        body = pltpu.make_async_copy(
            x_hbm.at[n, pl.ds(r0, TH), :, :],
            buf0.at[pl.ds(L, TH), :, :],
            sem.at[0])
        body.start()

        @pl.when(h > 0)
        def _():
            c = pltpu.make_async_copy(
                x_hbm.at[n, pl.ds(r0 - L, L), :, :],
                buf0.at[pl.ds(0, L), :, :],
                sem.at[1])
            c.start()
            c.wait()

        @pl.when(h == 0)
        def _():
            buf0[0:L, :, :] = jnp.zeros((L, W + 2, Cp), dtype)

        @pl.when(h < nh - 1)
        def _():
            c = pltpu.make_async_copy(
                x_hbm.at[n, pl.ds(r0 + TH, L), :, :],
                buf0.at[pl.ds(L + TH, L), :, :],
                sem.at[2])
            c.start()
            c.wait()

        @pl.when(h == nh - 1)
        def _():
            buf0[L + TH:SLAB, :, :] = jnp.zeros((L, W + 2, Cp), dtype)

        # buf1 receives intermediate activations at columns [1, W+1); its frame
        # columns must read as conv zero-padding for the following layer.
        zcol = jnp.zeros((SLAB, 1, Cp), dtype)
        buf1[:, 0:1, :] = zcol
        buf1[:, W + 1:W + 2, :] = zcol

        body.wait()

        # ---- fused conv stack: ping-pong buf0 <-> buf1, all in VMEM ---------
        cur, nxt = buf0, buf1
        for j in range(L):
            r_in = TH + 2 * (L - j)      # rows of this layer's input slab
            r_out = r_in - 2             # rows this layer produces
            w_ref = params[2 * j]        # (9*Cp, cout)
            b_ref = params[2 * j + 1]    # (1, cout) f32

            x_l = cur[0:r_in, :, :]      # (r_in, W+2, Cp)
            # Full im2col -> a single MXU matmul with K = 9*Cp.
            cols = []
            for kh in range(3):
                for kw in range(3):
                    cols.append(
                        x_l[kh:kh + r_out, kw:kw + W, :].reshape(r_out * W, Cp))
            lhs = jnp.concatenate(cols, axis=-1)            # (r_out*W, 9*Cp)

            y = jnp.dot(lhs, w_ref[...],
                        preferred_element_type=jnp.float32) + b_ref[...]

            if j < L - 1:
                y = jnp.maximum(y, 0.0).reshape(r_out, W, Cp).astype(dtype)
                nxt[0:r_out, 1:W + 1, :] = y
                # Rows outside the image must read as conv zero-padding for the
                # next layer (above they were computed from partial data).
                halo = L - 1 - j

                @pl.when(h == 0)
                def _():
                    nxt[0:halo, :, :] = jnp.zeros((halo, W + 2, Cp), dtype)

                @pl.when(h == nh - 1)
                def _():
                    nxt[r_out - halo:r_out, :, :] = jnp.zeros(
                        (halo, W + 2, Cp), dtype)

                cur, nxt = nxt, cur
            else:
                y = jax.nn.sigmoid(y).reshape(TH, W, Cout_p)
                o_ref[0, :, :, :] = y.astype(o_ref.dtype)

    return kernel


def cls_head_forward(x_nhwc, stacked_params, head_params, num_anchors,
                     num_classes, *, row_tile=None):
    """Fused CLSHead forward.  x_nhwc: (N, H, W, Cin) channels-last.  Returns
    (N, H*W*num_anchors, num_classes), identical to the PyTorch module."""
    N, H, W, Cin = x_nhwc.shape
    feat = stacked_params[0][0].shape[-1]
    AC = num_anchors * num_classes
    L = len(stacked_params) + 1                   # stacked convs + head
    Cp = _round_up(max(Cin, feat), 128)           # lane-dense working width
    Cout_p = _round_up(AC, 128)                   # lane-dense head output width

    TH = row_tile if row_tile is not None else _pick_row_tile(H, L)
    assert H % TH == 0, (H, TH)
    assert TH >= L or H == TH, (TH, L)
    nh = H // TH
    SLAB = TH + 2 * L
    dt = x_nhwc.dtype

    # Single pad of the input: channel pad to Cp (lane density) + W frame of
    # zeros (conv padding).  H padding is handled in-kernel via the halo DMA.
    xp = jnp.pad(x_nhwc, ((0, 0), (0, 0), (1, 1), (0, Cp - Cin)))

    # Weights -> im2col layout (9*Cp, Cout), zero-padded; biases -> (1, Cout) f32.
    def prep(w, b, cout_p):
        _, _, ci, co = w.shape
        wp = jnp.zeros((3, 3, Cp, cout_p), dt).at[:, :, :ci, :co].set(
            w.astype(dt))
        bp = jnp.zeros((1, cout_p), jnp.float32).at[0, :co].set(
            b.astype(jnp.float32))
        return wp.reshape(9 * Cp, cout_p), bp

    layers = [prep(w, b, Cp) for (w, b) in stacked_params]
    layers.append(prep(head_params[0], head_params[1], Cout_p))

    in_specs = [pl.BlockSpec(memory_space=pl.ANY)]   # raw HBM ref; manual DMA
    flat = []
    for j, (wp, bp) in enumerate(layers):
        cout = Cp if j < L - 1 else Cout_p
        in_specs.append(pl.BlockSpec((9 * Cp, cout), lambda n, h: (0, 0)))
        in_specs.append(pl.BlockSpec((1, cout), lambda n, h: (0, 0)))
        flat += [wp, bp]

    kernel = _make_fused_kernel(num_layers=L, TH=TH, W=W, Cp=Cp,
                                Cout_p=Cout_p, dtype=dt)

    out = pl.pallas_call(
        kernel,
        out_shape=jax.ShapeDtypeStruct((N, H, W, Cout_p), dt),
        grid_spec=pltpu.PrefetchScalarGridSpec(
            num_scalar_prefetch=0,
            grid=(N, nh),
            in_specs=in_specs,
            out_specs=pl.BlockSpec((1, TH, W, Cout_p),
                                   lambda n, h: (n, h, 0, 0)),
            scratch_shapes=[
                pltpu.VMEM((SLAB, W + 2, Cp), dt),     # ping buffer
                pltpu.VMEM((SLAB, W + 2, Cp), dt),     # pong buffer
                pltpu.SemaphoreType.DMA((3,)),
            ],
        ),
        compiler_params=pltpu.CompilerParams(
            dimension_semantics=("parallel", "parallel")),
    )(xp, *flat)

    out = out[..., :AC]                    # drop lane padding (wrapper slice)
    return out.reshape(N, H * W * num_anchors, num_classes)


def _reference_forward(x_nhwc, stacked_params, head_params, num_anchors,
                       num_classes):
    """Pure-JAX reference (lax conv, NHWC) for the correctness check."""
    names = ("NHWC", "HWIO", "NHWC")
    x = x_nhwc
    for (w, b) in stacked_params:
        dn = lax.conv_dimension_numbers(x.shape, w.shape, names)
        x = lax.conv_general_dilated(x, w, (1, 1), "SAME",
                                     dimension_numbers=dn,
                                     precision=lax.Precision.HIGHEST)
        x = jnp.maximum(x + b, 0.0)
    hw, hb = head_params
    dn = lax.conv_dimension_numbers(x.shape, hw.shape, names)
    x = lax.conv_general_dilated(x, hw, (1, 1), "SAME", dimension_numbers=dn,
                                 precision=lax.Precision.HIGHEST)
    x = jax.nn.sigmoid(x + hb)
    return x.reshape(x.shape[0], -1, num_classes)


if __name__ == "__main__":
    # Small config consistent with the module.
    N, H, W = 2, 16, 16
    in_channels, feat_channels = 4, 8
    num_stacked, num_anchors, num_classes = 2, 3, 5
    AC = num_anchors * num_classes

    key = jax.random.PRNGKey(0)
    keys = jax.random.split(key, 2 * (num_stacked + 1) + 1)
    x = jax.random.normal(keys[0], (N, H, W, in_channels), jnp.float32)  # NHWC

    # Random NONZERO weights and biases for every layer (the PyTorch init zeros
    # the head weights / stacked biases, which would make the test trivially
    # insensitive); the kernel implements the forward pass, not the init.
    stacked_params = []
    for i in range(num_stacked):
        chns = in_channels if i == 0 else feat_channels
        kw_, kb_ = keys[1 + 2 * i], keys[2 + 2 * i]
        w = jax.random.normal(kw_, (3, 3, chns, feat_channels), jnp.float32) \
            * math.sqrt(2.0 / (9 * feat_channels))
        b = jax.random.normal(kb_, (feat_channels,), jnp.float32) * 0.1
        stacked_params.append((w, b))
    kw_, kb_ = keys[1 + 2 * num_stacked], keys[2 + 2 * num_stacked]
    head_w = jax.random.normal(kw_, (3, 3, feat_channels, AC), jnp.float32) \
        * math.sqrt(2.0 / (9 * AC))
    head_b = jax.random.normal(kb_, (AC,), jnp.float32) * 0.5
    head_params = (head_w, head_b)

    out = cls_head_forward(x, stacked_params, head_params,
                           num_anchors, num_classes)
    out = jax.block_until_ready(out)

    ref = _reference_forward(x, stacked_params, head_params,
                             num_anchors, num_classes)
    assert out.shape == (N, H * W * num_anchors, num_classes), out.shape
    err = float(jnp.max(jnp.abs(out - ref)))
    # Typical error is ~1e-6 (f32 vs f32); 2e-3 bound is still far below any
    # structural-bug scale (~5e-2) while immune to MXU pass-precision details.
    assert err < 2e-3, err
    print("KERNEL_OK")
</pallas_src>

<mosaic_0001>
module attributes {stable_mosaic.version = 11 : i64} {
  func.func @kernel(%arg0: i32, %arg1: i32, %arg2: memref<2x16x18x128xf32, #tpu.memory_space<any>>, %arg3: memref<1152x128xf32, #tpu.memory_space<vmem>>, %arg4: memref<1x128xf32, #tpu.memory_space<vmem>>, %arg5: memref<1152x128xf32, #tpu.memory_space<vmem>>, %arg6: memref<1x128xf32, #tpu.memory_space<vmem>>, %arg7: memref<1152x128xf32, #tpu.memory_space<vmem>>, %arg8: memref<1x128xf32, #tpu.memory_space<vmem>>, %arg9: memref<1x8x16x128xf32, #tpu.memory_space<vmem>>, %arg10: memref<14x18x128xf32, #tpu.memory_space<vmem>>, %arg11: memref<14x18x128xf32, #tpu.memory_space<vmem>>, %arg12: memref<3x!tpu.dma_semaphore, #tpu.memory_space<semaphore_mem>>) attributes {dimension_semantics = [#tpu.dimension_semantics<parallel>, #tpu.dimension_semantics<parallel>], iteration_bounds = array<i64: 2, 2>, scalar_prefetch = 0 : i64, scratch_operands = 3 : i64, tpu.core_type = #tpu.core_type<tc>, window_params = [{}, {pipeline_mode = #tpu.pipeline_mode<synchronous>, transform_indices = @transform_1, window_bounds = array<i64: 1152, 128>}, {pipeline_mode = #tpu.pipeline_mode<synchronous>, transform_indices = @transform_2, window_bounds = array<i64: 1, 128>}, {pipeline_mode = #tpu.pipeline_mode<synchronous>, transform_indices = @transform_3, window_bounds = array<i64: 1152, 128>}, {pipeline_mode = #tpu.pipeline_mode<synchronous>, transform_indices = @transform_4, window_bounds = array<i64: 1, 128>}, {pipeline_mode = #tpu.pipeline_mode<synchronous>, transform_indices = @transform_5, window_bounds = array<i64: 1152, 128>}, {pipeline_mode = #tpu.pipeline_mode<synchronous>, transform_indices = @transform_6, window_bounds = array<i64: 1, 128>}, {transform_indices = @transform_7, window_bounds = array<i64: 1, 8, 16, 128>}]} {
    %c8_i32 = arith.constant 8 : i32
    %0 = arith.muli %arg1, %c8_i32 : i32
    %1 = tpu.assume_multiple %0, 8 : i32
    %c0_i32 = arith.constant 0 : i32
    %c0_i32_0 = arith.constant 0 : i32
    %c0_i32_1 = arith.constant 0 : i32
    %2 = tpu.memref_slice %arg2[%arg0, %1, %c0_i32_0, %c0_i32_1] : memref<2x16x18x128xf32, #tpu.memory_space<any>> -> memref<1x8x18x128xf32, #tpu.memory_space<any>>
    %3 = tpu.memref_squeeze %2 : memref<1x8x18x128xf32, #tpu.memory_space<any>> -> memref<8x18x128xf32, #tpu.memory_space<any>>
    %c3_i32 = arith.constant 3 : i32
    %c0_i32_2 = arith.constant 0 : i32
    %c0_i32_3 = arith.constant 0 : i32
    %4 = tpu.memref_slice %arg10[%c3_i32, %c0_i32_2, %c0_i32_3] : memref<14x18x128xf32, #tpu.memory_space<vmem>> -> memref<8x18x128xf32, #tpu.memory_space<vmem>>
    %5 = tpu.memref_slice %arg12[%c0_i32] : memref<3x!tpu.dma_semaphore, #tpu.memory_space<semaphore_mem>> -> memref<1x!tpu.dma_semaphore, #tpu.memory_space<semaphore_mem>>
    %6 = tpu.memref_squeeze %5 : memref<1x!tpu.dma_semaphore, #tpu.memory_space<semaphore_mem>> -> memref<!tpu.dma_semaphore, #tpu.memory_space<semaphore_mem>>
    tpu.enqueue_dma source(%3 : memref<8x18x128xf32, #tpu.memory_space<any>>) target(%4 : memref<8x18x128xf32, #tpu.memory_space<vmem>>) target_semaphore(%6 : memref<!tpu.dma_semaphore, #tpu.memory_space<semaphore_mem>>)
    %c0_i32_4 = arith.constant 0 : i32
    %7 = arith.cmpi sgt, %arg1, %c0_i32_4 : i32
    %8 = arith.extui %7 : i1 to i32
    %c0_i32_5 = arith.constant 0 : i32
    %9 = arith.cmpi ne, %8, %c0_i32_5 : i32
    scf.if %9 {
      %c3_i32_65 = arith.constant 3 : i32
      %131 = arith.subi %1, %c3_i32_65 : i32
      %c1_i32_66 = arith.constant 1 : i32
      %c0_i32_67 = arith.constant 0 : i32
      %c0_i32_68 = arith.constant 0 : i32
      %132 = tpu.memref_slice %arg2[%arg0, %131, %c0_i32_67, %c0_i32_68] : memref<2x16x18x128xf32, #tpu.memory_space<any>> -> memref<1x3x18x128xf32, #tpu.memory_space<any>>
      %133 = tpu.memref_squeeze %132 : memref<1x3x18x128xf32, #tpu.memory_space<any>> -> memref<3x18x128xf32, #tpu.memory_space<any>>
      %c0_i32_69 = arith.constant 0 : i32
      %c0_i32_70 = arith.constant 0 : i32
      %c0_i32_71 = arith.constant 0 : i32
      %134 = tpu.memref_slice %arg10[%c0_i32_69, %c0_i32_70, %c0_i32_71] : memref<14x18x128xf32, #tpu.memory_space<vmem>> -> memref<3x18x128xf32, #tpu.memory_space<vmem>>
      %135 = tpu.memref_slice %arg12[%c1_i32_66] : memref<3x!tpu.dma_semaphore, #tpu.memory_space<semaphore_mem>> -> memref<1x!tpu.dma_semaphore, #tpu.memory_space<semaphore_mem>>
      %136 = tpu.memref_squeeze %135 : memref<1x!tpu.dma_semaphore, #tpu.memory_space<semaphore_mem>> -> memref<!tpu.dma_semaphore, #tpu.memory_space<semaphore_mem>>
      tpu.enqueue_dma source(%133 : memref<3x18x128xf32, #tpu.memory_space<any>>) target(%134 : memref<3x18x128xf32, #tpu.memory_space<vmem>>) target_semaphore(%136 : memref<!tpu.dma_semaphore, #tpu.memory_space<semaphore_mem>>)
      %c1_i32_72 = arith.constant 1 : i32
      %c0_i32_73 = arith.constant 0 : i32
      %c0_i32_74 = arith.constant 0 : i32
      %137 = tpu.memref_slice %arg2[%arg0, %131, %c0_i32_73, %c0_i32_74] : memref<2x16x18x128xf32, #tpu.memory_space<any>> -> memref<1x3x18x128xf32, #tpu.memory_space<any>>
      %138 = tpu.memref_squeeze %137 : memref<1x3x18x128xf32, #tpu.memory_space<any>> -> memref<3x18x128xf32, #tpu.memory_space<any>>
      %c0_i32_75 = arith.constant 0 : i32
      %c0_i32_76 = arith.constant 0 : i32
      %c0_i32_77 = arith.constant 0 : i32
      %139 = tpu.memref_slice %arg10[%c0_i32_75, %c0_i32_76, %c0_i32_77] : memref<14x18x128xf32, #tpu.memory_space<vmem>> -> memref<3x18x128xf32, #tpu.memory_space<vmem>>
      %140 = tpu.memref_slice %arg12[%c1_i32_72] : memref<3x!tpu.dma_semaphore, #tpu.memory_space<semaphore_mem>> -> memref<1x!tpu.dma_semaphore, #tpu.memory_space<semaphore_mem>>
      %141 = tpu.memref_squeeze %140 : memref<1x!tpu.dma_semaphore, #tpu.memory_space<semaphore_mem>> -> memref<!tpu.dma_semaphore, #tpu.memory_space<semaphore_mem>>
      tpu.wait_dma2 semaphore(%141 : memref<!tpu.dma_semaphore, #tpu.memory_space<semaphore_mem>>) src(%138 : memref<3x18x128xf32, #tpu.memory_space<any>>) dst(%139 : memref<3x18x128xf32, #tpu.memory_space<vmem>>)
    } else {
    }
    %c0_i32_6 = arith.constant 0 : i32
    %10 = arith.cmpi eq, %arg1, %c0_i32_6 : i32
    %11 = arith.extui %10 : i1 to i32
    %c0_i32_7 = arith.constant 0 : i32
    %12 = arith.cmpi ne, %11, %c0_i32_7 : i32
    scf.if %12 {
      %cst_65 = arith.constant 0.000000e+00 : f32
      %131 = vector.broadcast %cst_65 : f32 to vector<3x18x128xf32>
      %c0_66 = arith.constant 0 : index
      %c0_67 = arith.constant 0 : index
      %c0_68 = arith.constant 0 : index
      %132 = vector.load %arg10[%c0_66, %c0_67, %c0_68] : memref<14x18x128xf32, #tpu.memory_space<vmem>>, vector<3x18x128xf32>
      tpu.vector_store %arg10[%c0_66, %c0_67, %c0_68], %131 {strides = array<i32>} : memref<14x18x128xf32, #tpu.memory_space<vmem>>, vector<3x18x128xf32>,
    } else {
    }
    %c1_i32 = arith.constant 1 : i32
    %13 = arith.cmpi slt, %arg1, %c1_i32 : i32
    %14 = arith.extui %13 : i1 to i32
    %c0_i32_8 = arith.constant 0 : i32
    %15 = arith.cmpi ne, %14, %c0_i32_8 : i32
    scf.if %15 {
      %c8_i32_65 = arith.constant 8 : i32
      %131 = arith.addi %1, %c8_i32_65 : i32
      %c2_i32 = arith.constant 2 : i32
      %c0_i32_66 = arith.constant 0 : i32
      %c0_i32_67 = arith.constant 0 : i32
      %132 = tpu.memref_slice %arg2[%arg0, %131, %c0_i32_66, %c0_i32_67] : memref<2x16x18x128xf32, #tpu.memory_space<any>> -> memref<1x3x18x128xf32, #tpu.memory_space<any>>
      %133 = tpu.memref_squeeze %132 : memref<1x3x18x128xf32, #tpu.memory_space<any>> -> memref<3x18x128xf32, #tpu.memory_space<any>>
      %c11_i32 = arith.constant 11 : i32
      %c0_i32_68 = arith.constant 0 : i32
      %c0_i32_69 = arith.constant 0 : i32
      %134 = tpu.memref_slice %arg10[%c11_i32, %c0_i32_68, %c0_i32_69] : memref<14x18x128xf32, #tpu.memory_space<vmem>> -> memref<3x18x128xf32, #tpu.memory_space<vmem>>
      %135 = tpu.memref_slice %arg12[%c2_i32] : memref<3x!tpu.dma_semaphore, #tpu.memory_space<semaphore_mem>> -> memref<1x!tpu.dma_semaphore, #tpu.memory_space<semaphore_mem>>
      %136 = tpu.memref_squeeze %135 : memref<1x!tpu.dma_semaphore, #tpu.memory_space<semaphore_mem>> -> memref<!tpu.dma_semaphore, #tpu.memory_space<semaphore_mem>>
      tpu.enqueue_dma source(%133 : memref<3x18x128xf32, #tpu.memory_space<any>>) target(%134 : memref<3x18x128xf32, #tpu.memory_space<vmem>>) target_semaphore(%136 : memref<!tpu.dma_semaphore, #tpu.memory_space<semaphore_mem>>)
      %c2_i32_70 = arith.constant 2 : i32
      %c0_i32_71 = arith.constant 0 : i32
      %c0_i32_72 = arith.constant 0 : i32
      %137 = tpu.memref_slice %arg2[%arg0, %131, %c0_i32_71, %c0_i32_72] : memref<2x16x18x128xf32, #tpu.memory_space<any>> -> memref<1x3x18x128xf32, #tpu.memory_space<any>>
      %138 = tpu.memref_squeeze %137 : memref<1x3x18x128xf32, #tpu.memory_space<any>> -> memref<3x18x128xf32, #tpu.memory_space<any>>
      %c11_i32_73 = arith.constant 11 : i32
      %c0_i32_74 = arith.constant 0 : i32
      %c0_i32_75 = arith.constant 0 : i32
      %139 = tpu.memref_slice %arg10[%c11_i32_73, %c0_i32_74, %c0_i32_75] : memref<14x18x128xf32, #tpu.memory_space<vmem>> -> memref<3x18x128xf32, #tpu.memory_space<vmem>>
      %140 = tpu.memref_slice %arg12[%c2_i32_70] : memref<3x!tpu.dma_semaphore, #tpu.memory_space<semaphore_mem>> -> memref<1x!tpu.dma_semaphore, #tpu.memory_space<semaphore_mem>>
      %141 = tpu.memref_squeeze %140 : memref<1x!tpu.dma_semaphore, #tpu.memory_space<semaphore_mem>> -> memref<!tpu.dma_semaphore, #tpu.memory_space<semaphore_mem>>
      tpu.wait_dma2 semaphore(%141 : memref<!tpu.dma_semaphore, #tpu.memory_space<semaphore_mem>>) src(%138 : memref<3x18x128xf32, #tpu.memory_space<any>>) dst(%139 : memref<3x18x128xf32, #tpu.memory_space<vmem>>)
    } else {
    }
    %c1_i32_9 = arith.constant 1 : i32
    %16 = arith.cmpi eq, %arg1, %c1_i32_9 : i32
    %17 = arith.extui %16 : i1 to i32
    %c0_i32_10 = arith.constant 0 : i32
    %18 = arith.cmpi ne, %17, %c0_i32_10 : i32
    scf.if %18 {
      %cst_65 = arith.constant 0.000000e+00 : f32
      %131 = vector.broadcast %cst_65 : f32 to vector<3x18x128xf32>
      %c11 = arith.constant 11 : index
      %c0_66 = arith.constant 0 : index
      %c0_67 = arith.constant 0 : index
      %132 = vector.load %arg10[%c11, %c0_66, %c0_67] : memref<14x18x128xf32, #tpu.memory_space<vmem>>, vector<3x18x128xf32>
      tpu.vector_store %arg10[%c11, %c0_66, %c0_67], %131 {strides = array<i32>} : memref<14x18x128xf32, #tpu.memory_space<vmem>>, vector<3x18x128xf32>,
    } else {
    }
    %cst = arith.constant 0.000000e+00 : f32
    %19 = vector.broadcast %cst : f32 to vector<14x1x128xf32>
    %c0 = arith.constant 0 : index
    %c0_11 = arith.constant 0 : index
    %c0_12 = arith.constant 0 : index
    %20 = vector.load %arg11[%c0, %c0_11, %c0_12] : memref<14x18x128xf32, #tpu.memory_space<vmem>>, vector<14x1x128xf32>
    tpu.vector_store %arg11[%c0, %c0_11, %c0_12], %19 {strides = array<i32>} : memref<14x18x128xf32, #tpu.memory_space<vmem>>, vector<14x1x128xf32>,
    %c0_13 = arith.constant 0 : index
    %c17 = arith.constant 17 : index
    %c0_14 = arith.constant 0 : index
    %21 = vector.load %arg11[%c0_13, %c17, %c0_14] : memref<14x18x128xf32, #tpu.memory_space<vmem>>, vector<14x1x128xf32>
    tpu.vector_store %arg11[%c0_13, %c17, %c0_14], %19 {strides = array<i32>} : memref<14x18x128xf32, #tpu.memory_space<vmem>>, vector<14x1x128xf32>,
    %c0_i32_15 = arith.constant 0 : i32
    %c0_i32_16 = arith.constant 0 : i32
    %c0_i32_17 = arith.constant 0 : i32
    %22 = tpu.memref_slice %arg2[%arg0, %1, %c0_i32_16, %c0_i32_17] : memref<2x16x18x128xf32, #tpu.memory_space<any>> -> memref<1x8x18x128xf32, #tpu.memory_space<any>>
    %23 = tpu.memref_squeeze %22 : memref<1x8x18x128xf32, #tpu.memory_space<any>> -> memref<8x18x128xf32, #tpu.memory_space<any>>
    %c3_i32_18 = arith.constant 3 : i32
    %c0_i32_19 = arith.constant 0 : i32
    %c0_i32_20 = arith.constant 0 : i32
    %24 = tpu.memref_slice %arg10[%c3_i32_18, %c0_i32_19, %c0_i32_20] : memref<14x18x128xf32, #tpu.memory_space<vmem>> -> memref<8x18x128xf32, #tpu.memory_space<vmem>>
    %25 = tpu.memref_slice %arg12[%c0_i32_15] : memref<3x!tpu.dma_semaphore, #tpu.memory_space<semaphore_mem>> -> memref<1x!tpu.dma_semaphore, #tpu.memory_space<semaphore_mem>>
    %26 = tpu.memref_squeeze %25 : memref<1x!tpu.dma_semaphore, #tpu.memory_space<semaphore_mem>> -> memref<!tpu.dma_semaphore, #tpu.memory_space<semaphore_mem>>
    tpu.wait_dma2 semaphore(%26 : memref<!tpu.dma_semaphore, #tpu.memory_space<semaphore_mem>>) src(%23 : memref<8x18x128xf32, #tpu.memory_space<any>>) dst(%24 : memref<8x18x128xf32, #tpu.memory_space<vmem>>)
    %c0_21 = arith.constant 0 : index
    %c0_22 = arith.constant 0 : index
    %c0_23 = arith.constant 0 : index
    %27 = vector.load %arg10[%c0_21, %c0_22, %c0_23] : memref<14x18x128xf32, #tpu.memory_space<vmem>>, vector<14x18x128xf32>
    %28 = vector.extract_strided_slice %27 {offsets = [0, 0, 0], sizes = [12, 16, 128], strides = [1, 1, 1]} : vector<14x18x128xf32> to vector<12x16x128xf32>
    %29 = vector.shape_cast %28 : vector<12x16x128xf32> to vector<192x128xf32>
    %30 = vector.extract_strided_slice %27 {offsets = [0, 1, 0], sizes = [12, 16, 128], strides = [1, 1, 1]} : vector<14x18x128xf32> to vector<12x16x128xf32>
    %31 = vector.shape_cast %30 : vector<12x16x128xf32> to vector<192x128xf32>
    %32 = vector.extract_strided_slice %27 {offsets = [0, 2, 0], sizes = [12, 16, 128], strides = [1, 1, 1]} : vector<14x18x128xf32> to vector<12x16x128xf32>
    %33 = vector.shape_cast %32 : vector<12x16x128xf32> to vector<192x128xf32>
    %34 = vector.extract_strided_slice %27 {offsets = [1, 0, 0], sizes = [12, 16, 128], strides = [1, 1, 1]} : vector<14x18x128xf32> to vector<12x16x128xf32>
    %35 = vector.shape_cast %34 : vector<12x16x128xf32> to vector<192x128xf32>
    %36 = vector.extract_strided_slice %27 {offsets = [1, 1, 0], sizes = [12, 16, 128], strides = [1, 1, 1]} : vector<14x18x128xf32> to vector<12x16x128xf32>
    %37 = vector.shape_cast %36 : vector<12x16x128xf32> to vector<192x128xf32>
    %38 = vector.extract_strided_slice %27 {offsets = [1, 2, 0], sizes = [12, 16, 128], strides = [1, 1, 1]} : vector<14x18x128xf32> to vector<12x16x128xf32>
    %39 = vector.shape_cast %38 : vector<12x16x128xf32> to vector<192x128xf32>
    %40 = vector.extract_strided_slice %27 {offsets = [2, 0, 0], sizes = [12, 16, 128], strides = [1, 1, 1]} : vector<14x18x128xf32> to vector<12x16x128xf32>
    %41 = vector.shape_cast %40 : vector<12x16x128xf32> to vector<192x128xf32>
    %42 = vector.extract_strided_slice %27 {offsets = [2, 1, 0], sizes = [12, 16, 128], strides = [1, 1, 1]} : vector<14x18x128xf32> to vector<12x16x128xf32>
    %43 = vector.shape_cast %42 : vector<12x16x128xf32> to vector<192x128xf32>
    %44 = vector.extract_strided_slice %27 {offsets = [2, 2, 0], sizes = [12, 16, 128], strides = [1, 1, 1]} : vector<14x18x128xf32> to vector<12x16x128xf32>
    %45 = vector.shape_cast %44 : vector<12x16x128xf32> to vector<192x128xf32>
    %46 = tpu.concatenate %29, %31, %33, %35, %37, %39, %41, %43, %45 in 1 : vector<192x128xf32>, vector<192x128xf32>, vector<192x128xf32>, vector<192x128xf32>, vector<192x128xf32>, vector<192x128xf32>, vector<192x128xf32>, vector<192x128xf32>, vector<192x128xf32> -> vector<192x1152xf32>
    %c0_24 = arith.constant 0 : index
    %c0_25 = arith.constant 0 : index
    %47 = vector.load %arg3[%c0_24, %c0_25] : memref<1152x128xf32, #tpu.memory_space<vmem>>, vector<1152x128xf32>
    %cst_26 = arith.constant dense<0.000000e+00> : vector<192x128xf32>
    %48 = tpu.matmul %46, %47, %cst_26 {dimension_numbers = #tpu.dot_dimension_numbers<[1], [0], [0], [1], [0, 0, 1, 1], [], []>} : vector<192x1152xf32>, vector<1152x128xf32>, vector<192x128xf32> -> vector<192x128xf32>
    %c0_27 = arith.constant 0 : index
    %c0_28 = arith.constant 0 : index
    %49 = vector.load %arg4[%c0_27, %c0_28] : memref<1x128xf32, #tpu.memory_space<vmem>>, vector<1x128xf32>
    %50 = vector.broadcast %49 : vector<1x128xf32> to vector<192x128xf32>
    %51 = arith.addf %48, %50 : vector<192x128xf32>
    %cst_29 = arith.constant 0.000000e+00 : f32
    %52 = vector.broadcast %cst_29 : f32 to vector<192x128xf32>
    %53 = arith.maximumf %51, %52 : vector<192x128xf32>
    %54 = vector.shape_cast %53 : vector<192x128xf32> to vector<12x16x128xf32>
    %c0_30 = arith.constant 0 : index
    %c1 = arith.constant 1 : index
    %c0_31 = arith.constant 0 : index
    %55 = vector.load %arg11[%c0_30, %c1, %c0_31] : memref<14x18x128xf32, #tpu.memory_space<vmem>>, vector<12x16x128xf32>
    tpu.vector_store %arg11[%c0_30, %c1, %c0_31], %54 {strides = array<i32>} : memref<14x18x128xf32, #tpu.memory_space<vmem>>, vector<12x16x128xf32>,
    %c0_i32_32 = arith.constant 0 : i32
    %56 = arith.cmpi eq, %arg1, %c0_i32_32 : i32
    %57 = arith.extui %56 : i1 to i32
    %c0_i32_33 = arith.constant 0 : i32
    %58 = arith.cmpi ne, %57, %c0_i32_33 : i32
    scf.if %58 {
      %cst_65 = arith.constant 0.000000e+00 : f32
      %131 = vector.broadcast %cst_65 : f32 to vector<2x18x128xf32>
      %c0_66 = arith.constant 0 : index
      %c0_67 = arith.constant 0 : index
      %c0_68 = arith.constant 0 : index
      %132 = vector.load %arg11[%c0_66, %c0_67, %c0_68] : memref<14x18x128xf32, #tpu.memory_space<vmem>>, vector<2x18x128xf32>
      tpu.vector_store %arg11[%c0_66, %c0_67, %c0_68], %131 {strides = array<i32>} : memref<14x18x128xf32, #tpu.memory_space<vmem>>, vector<2x18x128xf32>,
    } else {
    }
    %c1_i32_34 = arith.constant 1 : i32
    %59 = arith.cmpi eq, %arg1, %c1_i32_34 : i32
    %60 = arith.extui %59 : i1 to i32
    %c0_i32_35 = arith.constant 0 : i32
    %61 = arith.cmpi ne, %60, %c0_i32_35 : i32
    scf.if %61 {
      %cst_65 = arith.constant 0.000000e+00 : f32
      %131 = vector.broadcast %cst_65 : f32 to vector<2x18x128xf32>
      %c10 = arith.constant 10 : index
      %c0_66 = arith.constant 0 : index
      %c0_67 = arith.constant 0 : index
      %132 = vector.load %arg11[%c10, %c0_66, %c0_67] : memref<14x18x128xf32, #tpu.memory_space<vmem>>, vector<2x18x128xf32>
      tpu.vector_store %arg11[%c10, %c0_66, %c0_67], %131 {strides = array<i32>} : memref<14x18x128xf32, #tpu.memory_space<vmem>>, vector<2x18x128xf32>,
    } else {
    }
    %c0_36 = arith.constant 0 : index
    %c0_37 = arith.constant 0 : index
    %c0_38 = arith.constant 0 : index
    %62 = vector.load %arg11[%c0_36, %c0_37, %c0_38] : memref<14x18x128xf32, #tpu.memory_space<vmem>>, vector<12x18x128xf32>
    %63 = vector.extract_strided_slice %62 {offsets = [0, 0, 0], sizes = [10, 16, 128], strides = [1, 1, 1]} : vector<12x18x128xf32> to vector<10x16x128xf32>
    %64 = vector.shape_cast %63 : vector<10x16x128xf32> to vector<160x128xf32>
    %65 = vector.extract_strided_slice %62 {offsets = [0, 1, 0], sizes = [10, 16, 128], strides = [1, 1, 1]} : vector<12x18x128xf32> to vector<10x16x128xf32>
    %66 = vector.shape_cast %65 : vector<10x16x128xf32> to vector<160x128xf32>
    %67 = vector.extract_strided_slice %62 {offsets = [0, 2, 0], sizes = [10, 16, 128], strides = [1, 1, 1]} : vector<12x18x128xf32> to vector<10x16x128xf32>
    %68 = vector.shape_cast %67 : vector<10x16x128xf32> to vector<160x128xf32>
    %69 = vector.extract_strided_slice %62 {offsets = [1, 0, 0], sizes = [10, 16, 128], strides = [1, 1, 1]} : vector<12x18x128xf32> to vector<10x16x128xf32>
    %70 = vector.shape_cast %69 : vector<10x16x128xf32> to vector<160x128xf32>
    %71 = vector.extract_strided_slice %62 {offsets = [1, 1, 0], sizes = [10, 16, 128], strides = [1, 1, 1]} : vector<12x18x128xf32> to vector<10x16x128xf32>
    %72 = vector.shape_cast %71 : vector<10x16x128xf32> to vector<160x128xf32>
    %73 = vector.extract_strided_slice %62 {offsets = [1, 2, 0], sizes = [10, 16, 128], strides = [1, 1, 1]} : vector<12x18x128xf32> to vector<10x16x128xf32>
    %74 = vector.shape_cast %73 : vector<10x16x128xf32> to vector<160x128xf32>
    %75 = vector.extract_strided_slice %62 {offsets = [2, 0, 0], sizes = [10, 16, 128], strides = [1, 1, 1]} : vector<12x18x128xf32> to vector<10x16x128xf32>
    %76 = vector.shape_cast %75 : vector<10x16x128xf32> to vector<160x128xf32>
    %77 = vector.extract_strided_slice %62 {offsets = [2, 1, 0], sizes = [10, 16, 128], strides = [1, 1, 1]} : vector<12x18x128xf32> to vector<10x16x128xf32>
    %78 = vector.shape_cast %77 : vector<10x16x128xf32> to vector<160x128xf32>
    %79 = vector.extract_strided_slice %62 {offsets = [2, 2, 0], sizes = [10, 16, 128], strides = [1, 1, 1]} : vector<12x18x128xf32> to vector<10x16x128xf32>
    %80 = vector.shape_cast %79 : vector<10x16x128xf32> to vector<160x128xf32>
    %81 = tpu.concatenate %64, %66, %68, %70, %72, %74, %76, %78, %80 in 1 : vector<160x128xf32>, vector<160x128xf32>, vector<160x128xf32>, vector<160x128xf32>, vector<160x128xf32>, vector<160x128xf32>, vector<160x128xf32>, vector<160x128xf32>, vector<160x128xf32> -> vector<160x1152xf32>
    %c0_39 = arith.constant 0 : index
    %c0_40 = arith.constant 0 : index
    %82 = vector.load %arg5[%c0_39, %c0_40] : memref<1152x128xf32, #tpu.memory_space<vmem>>, vector<1152x128xf32>
    %cst_41 = arith.constant dense<0.000000e+00> : vector<160x128xf32>
    %83 = tpu.matmul %81, %82, %cst_41 {dimension_numbers = #tpu.dot_dimension_numbers<[1], [0], [0], [1], [0, 0, 1, 1], [], []>} : vector<160x1152xf32>, vector<1152x128xf32>, vector<160x128xf32> -> vector<160x128xf32>
    %c0_42 = arith.constant 0 : index
    %c0_43 = arith.constant 0 : index
    %84 = vector.load %arg6[%c0_42, %c0_43] : memref<1x128xf32, #tpu.memory_space<vmem>>, vector<1x128xf32>
    %85 = vector.broadcast %84 : vector<1x128xf32> to vector<160x128xf32>
    %86 = arith.addf %83, %85 : vector<160x128xf32>
    %cst_44 = arith.constant 0.000000e+00 : f32
    %87 = vector.broadcast %cst_44 : f32 to vector<160x128xf32>
    %88 = arith.maximumf %86, %87 : vector<160x128xf32>
    %89 = vector.shape_cast %88 : vector<160x128xf32> to vector<10x16x128xf32>
    %c0_45 = arith.constant 0 : index
    %c1_46 = arith.constant 1 : index
    %c0_47 = arith.constant 0 : index
    %90 = vector.load %arg10[%c0_45, %c1_46, %c0_47] : memref<14x18x128xf32, #tpu.memory_space<vmem>>, vector<10x16x128xf32>
    tpu.vector_store %arg10[%c0_45, %c1_46, %c0_47], %89 {strides = array<i32>} : memref<14x18x128xf32, #tpu.memory_space<vmem>>, vector<10x16x128xf32>,
    %c0_i32_48 = arith.constant 0 : i32
    %91 = arith.cmpi eq, %arg1, %c0_i32_48 : i32
    %92 = arith.extui %91 : i1 to i32
    %c0_i32_49 = arith.constant 0 : i32
    %93 = arith.cmpi ne, %92, %c0_i32_49 : i32
    scf.if %93 {
      %cst_65 = arith.constant 0.000000e+00 : f32
      %131 = vector.broadcast %cst_65 : f32 to vector<1x18x128xf32>
      %c0_66 = arith.constant 0 : index
      %c0_67 = arith.constant 0 : index
      %c0_68 = arith.constant 0 : index
      %132 = vector.load %arg10[%c0_66, %c0_67, %c0_68] : memref<14x18x128xf32, #tpu.memory_space<vmem>>, vector<1x18x128xf32>
      tpu.vector_store %arg10[%c0_66, %c0_67, %c0_68], %131 {strides = array<i32>} : memref<14x18x128xf32, #tpu.memory_space<vmem>>, vector<1x18x128xf32>,
    } else {
    }
    %c1_i32_50 = arith.constant 1 : i32
    %94 = arith.cmpi eq, %arg1, %c1_i32_50 : i32
    %95 = arith.extui %94 : i1 to i32
    %c0_i32_51 = arith.constant 0 : i32
    %96 = arith.cmpi ne, %95, %c0_i32_51 : i32
    scf.if %96 {
      %cst_65 = arith.constant 0.000000e+00 : f32
      %131 = vector.broadcast %cst_65 : f32 to vector<1x18x128xf32>
      %c9 = arith.constant 9 : index
      %c0_66 = arith.constant 0 : index
      %c0_67 = arith.constant 0 : index
      %132 = vector.load %arg10[%c9, %c0_66, %c0_67] : memref<14x18x128xf32, #tpu.memory_space<vmem>>, vector<1x18x128xf32>
      tpu.vector_store %arg10[%c9, %c0_66, %c0_67], %131 {strides = array<i32>} : memref<14x18x128xf32, #tpu.memory_space<vmem>>, vector<1x18x128xf32>,
    } else {
    }
    %c0_52 = arith.constant 0 : index
    %c0_53 = arith.constant 0 : index
    %c0_54 = arith.constant 0 : index
    %97 = vector.load %arg10[%c0_52, %c0_53, %c0_54] : memref<14x18x128xf32, #tpu.memory_space<vmem>>, vector<10x18x128xf32>
    %98 = vector.extract_strided_slice %97 {offsets = [0, 0, 0], sizes = [8, 16, 128], strides = [1, 1, 1]} : vector<10x18x128xf32> to vector<8x16x128xf32>
    %99 = vector.shape_cast %98 : vector<8x16x128xf32> to vector<128x128xf32>
    %100 = vector.extract_strided_slice %97 {offsets = [0, 1, 0], sizes = [8, 16, 128], strides = [1, 1, 1]} : vector<10x18x128xf32> to vector<8x16x128xf32>
    %101 = vector.shape_cast %100 : vector<8x16x128xf32> to vector<128x128xf32>
    %102 = vector.extract_strided_slice %97 {offsets = [0, 2, 0], sizes = [8, 16, 128], strides = [1, 1, 1]} : vector<10x18x128xf32> to vector<8x16x128xf32>
    %103 = vector.shape_cast %102 : vector<8x16x128xf32> to vector<128x128xf32>
    %104 = vector.extract_strided_slice %97 {offsets = [1, 0, 0], sizes = [8, 16, 128], strides = [1, 1, 1]} : vector<10x18x128xf32> to vector<8x16x128xf32>
    %105 = vector.shape_cast %104 : vector<8x16x128xf32> to vector<128x128xf32>
    %106 = vector.extract_strided_slice %97 {offsets = [1, 1, 0], sizes = [8, 16, 128], strides = [1, 1, 1]} : vector<10x18x128xf32> to vector<8x16x128xf32>
    %107 = vector.shape_cast %106 : vector<8x16x128xf32> to vector<128x128xf32>
    %108 = vector.extract_strided_slice %97 {offsets = [1, 2, 0], sizes = [8, 16, 128], strides = [1, 1, 1]} : vector<10x18x128xf32> to vector<8x16x128xf32>
    %109 = vector.shape_cast %108 : vector<8x16x128xf32> to vector<128x128xf32>
    %110 = vector.extract_strided_slice %97 {offsets = [2, 0, 0], sizes = [8, 16, 128], strides = [1, 1, 1]} : vector<10x18x128xf32> to vector<8x16x128xf32>
    %111 = vector.shape_cast %110 : vector<8x16x128xf32> to vector<128x128xf32>
    %112 = vector.extract_strided_slice %97 {offsets = [2, 1, 0], sizes = [8, 16, 128], strides = [1, 1, 1]} : vector<10x18x128xf32> to vector<8x16x128xf32>
    %113 = vector.shape_cast %112 : vector<8x16x128xf32> to vector<128x128xf32>
    %114 = vector.extract_strided_slice %97 {offsets = [2, 2, 0], sizes = [8, 16, 128], strides = [1, 1, 1]} : vector<10x18x128xf32> to vector<8x16x128xf32>
    %115 = vector.shape_cast %114 : vector<8x16x128xf32> to vector<128x128xf32>
    %116 = tpu.concatenate %99, %101, %103, %105, %107, %109, %111, %113, %115 in 1 : vector<128x128xf32>, vector<128x128xf32>, vector<128x128xf32>, vector<128x128xf32>, vector<128x128xf32>, vector<128x128xf32>, vector<128x128xf32>, vector<128x128xf32>, vector<128x128xf32> -> vector<128x1152xf32>
    %c0_55 = arith.constant 0 : index
    %c0_56 = arith.constant 0 : index
    %117 = vector.load %arg7[%c0_55, %c0_56] : memref<1152x128xf32, #tpu.memory_space<vmem>>, vector<1152x128xf32>
    %cst_57 = arith.constant dense<0.000000e+00> : vector<128x128xf32>
    %118 = tpu.matmul %116, %117, %cst_57 {dimension_numbers = #tpu.dot_dimension_numbers<[1], [0], [0], [1], [0, 0, 1, 1], [], []>} : vector<128x1152xf32>, vector<1152x128xf32>, vector<128x128xf32> -> vector<128x128xf32>
    %c0_58 = arith.constant 0 : index
    %c0_59 = arith.constant 0 : index
    %119 = vector.load %arg8[%c0_58, %c0_59] : memref<1x128xf32, #tpu.memory_space<vmem>>, vector<1x128xf32>
    %120 = vector.broadcast %119 : vector<1x128xf32> to vector<128x128xf32>
    %121 = arith.addf %118, %120 : vector<128x128xf32>
    %122 = arith.negf %121 : vector<128x128xf32>
    %123 = math.exp %122 : vector<128x128xf32>
    %cst_60 = arith.constant 1.000000e+00 : f32
    %124 = vector.broadcast %cst_60 : f32 to vector<128x128xf32>
    %125 = arith.addf %124, %123 : vector<128x128xf32>
    %126 = arith.divf %124, %125 : vector<128x128xf32>
    %127 = vector.shape_cast %126 : vector<128x128xf32> to vector<8x16x128xf32>
    %c0_61 = arith.constant 0 : index
    %c0_62 = arith.constant 0 : index
    %c0_63 = arith.constant 0 : index
    %c0_64 = arith.constant 0 : index
    %128 = vector.load %arg9[%c0_61, %c0_62, %c0_63, %c0_64] : memref<1x8x16x128xf32, #tpu.memory_space<vmem>>, vector<1x8x16x128xf32>
    %129 = vector.shape_cast %128 : vector<1x8x16x128xf32> to vector<8x16x128xf32>
    %130 = vector.shape_cast %127 : vector<8x16x128xf32> to vector<1x8x16x128xf32>
    tpu.vector_store %arg9[%c0_61, %c0_62, %c0_63, %c0_64], %130 {strides = array<i32>} : memref<1x8x16x128xf32, #tpu.memory_space<vmem>>, vector<1x8x16x128xf32>,
    return
  }
  func.func @transform_1(%arg0: i32, %arg1: i32) -> (i32, i32) {
    %c0_i32 = arith.constant 0 : i32
    %c0_i32_0 = arith.constant 0 : i32
    %c0_i32_1 = arith.constant 0 : i32
    return %c0_i32, %c0_i32_0 : i32, i32
  }
  func.func @transform_2(%arg0: i32, %arg1: i32) -> (i32, i32) {
    %c0_i32 = arith.constant 0 : i32
    %c0_i32_0 = arith.constant 0 : i32
    %c0_i32_1 = arith.constant 0 : i32
    return %c0_i32, %c0_i32_0 : i32, i32
  }
  func.func @transform_3(%arg0: i32, %arg1: i32) -> (i32, i32) {
    %c0_i32 = arith.constant 0 : i32
    %c0_i32_0 = arith.constant 0 : i32
    %c0_i32_1 = arith.constant 0 : i32
    return %c0_i32, %c0_i32_0 : i32, i32
  }
  func.func @transform_4(%arg0: i32, %arg1: i32) -> (i32, i32) {
    %c0_i32 = arith.constant 0 : i32
    %c0_i32_0 = arith.constant 0 : i32
    %c0_i32_1 = arith.constant 0 : i32
    return %c0_i32, %c0_i32_0 : i32, i32
  }
  func.func @transform_5(%arg0: i32, %arg1: i32) -> (i32, i32) {
    %c0_i32 = arith.constant 0 : i32
    %c0_i32_0 = arith.constant 0 : i32
    %c0_i32_1 = arith.constant 0 : i32
    return %c0_i32, %c0_i32_0 : i32, i32
  }
  func.func @transform_6(%arg0: i32, %arg1: i32) -> (i32, i32) {
    %c0_i32 = arith.constant 0 : i32
    %c0_i32_0 = arith.constant 0 : i32
    %c0_i32_1 = arith.constant 0 : i32
    return %c0_i32, %c0_i32_0 : i32, i32
  }
  func.func @transform_7(%arg0: i32, %arg1: i32) -> (i32, i32, i32, i32) {
    %c0_i32 = arith.constant 0 : i32
    %c0_i32_0 = arith.constant 0 : i32
    %c0_i32_1 = arith.constant 0 : i32
    return %arg0, %arg1, %c0_i32, %c0_i32_0 : i32, i32, i32, i32
  }
}

</mosaic_0001>

<llo_original>
// kernel: tpu_custom_call.1
$region0: #{tpu_custom_call.1}
  #allocation0 [shape = 'u32[]', space=smem, size = 0x4, offset = 0x4, fixed_abs, tag = 'smem constant byte address 0x4 - core index']
  #allocation1 [shape = 'u32[144,128]{1,0:T(1,128)}', space=vmem, size = 0x12000, scoped, tag = 'internal scratch']
  #allocation2 [shape = 'f32[14,18,128]{2,1,0:T(8,128)}', space=vmem, size = 0x2a000, scoped, tag = 'scratch operand']
  #allocation3 [shape = 'f32[14,18,128]{2,1,0:T(8,128)}', space=vmem, size = 0x2a000, scoped, tag = 'scratch operand']
  #allocation4 [shape = 's32[3]{0}', space=sflag, size = 0xc, scoped, tag = 'scratch operand']
  #allocation11 [shape = 's32[]', space=sflag, size = 0x4, offset = 0, fixed_abs, tag = 'sflag constant byte address 0x0 - dummy sync flag']
  #allocation12 [shape = 's32[]', space=sflag, size = 0x4, offset = 0, fixed_abs, tag = 'sflag constant byte address 0x0 - dummy sync flag']
  #allocation13 [shape = 's32[]', space=sflag, size = 0x4, offset = 0, fixed_abs, tag = 'sflag constant byte address 0x0 - dummy sync flag']
  %s0 = inlined_call_operand.vmem [shape: f32[2,16,18,128], index: 0, kind: input, shape index: {}]
  %s1 = inlined_call_operand.vmem [shape: f32[1152,128], index: 1, kind: input, shape index: {}]
  %s2 = inlined_call_operand.vmem [shape: f32[1,128], index: 2, kind: input, shape index: {}]
  %s3 = inlined_call_operand.hbm [shape: f32[1152,128], index: 3, kind: input, shape index: {}]
  %s4 = inlined_call_operand.vmem [shape: f32[1,128], index: 4, kind: input, shape index: {}]
  %s5 = inlined_call_operand.hbm [shape: f32[1152,128], index: 5, kind: input, shape index: {}]
  %s6 = inlined_call_operand.vmem [shape: f32[1,128], index: 6, kind: input, shape index: {}]
  %s7 = inlined_call_operand.hbm [shape: f32[2,16,16,128], index: 7, kind: output, shape index: {}]
  %s8 = sld [smem:[#allocation0]]
  $region208: #{tpu_custom_call.1} parent=0
    _
  %s10 = ssub.s32 1, %s8
  %s11 = scalar_select 0, %s10, %s8
  $region1: #{tpu_custom_call.1} parent=0
    #allocation5 [shape = 'u8[589824]{0}', space=vmem, size = 0x90000, scoped, tag = 'input window, operand 3, single buffered']
    #allocation6 [shape = 's32[2]{0}', space=sflag, size = 0x8, scoped, tag = 'scoped memory for tpu_custom_call.1']
    #allocation7 [shape = 's32[2]{0}', space=sflag, size = 0x8, scoped, tag = 'scoped memory for tpu_custom_call.1']
    #allocation8 [shape = 'u8[589824]{0}', space=vmem, size = 0x90000, scoped, tag = 'input window, operand 5, single buffered']
    #allocation9 [shape = 's32[1]{0}', space=sflag, size = 0x4, scoped, tag = 'scoped memory for tpu_custom_call.1']
    #allocation10 [shape = 'u8[131072]{0}', space=vmem, size = 0x20000, scoped, tag = 'output window, operand 0']
    %12 = vsyncpa [#allocation6], 0
    %13 = vsyncpa [#allocation9], 0
    %14 = vsyncpa [#allocation7], 0
    %s15 = scalar_lea.sflag [#allocation7], 1
    %16 = vsyncpa %s15, 0
    loop: start=0, step=1, limit=6
    $region2: #{tpu_custom_call.1} parent=1 // loop_pre_header
      _
    $region3: #{tpu_custom_call.1} parent=1 // loop_header
      %s18 = sphi 0, %s22
      %p19 = scmp.ge.s32.totalorder %s18, 6
      %s25 = sphi 0, %s37
      %s26 = sphi 0, %s33
      %s27 = sphi 0, %s25
      %s28 = sphi 0, %s26
      %s29 = sphi 0, %s27
      %s30 = sphi 0, %s28
      %s38 = sphi 0, %s38
      %s40 = sphi 0, %s38
      %s41 = sphi 0, %s40
      %s55 = sphi 0, %s41
      %s59 = sphi 0, %s59
      %s61 = sphi 0, %s59
      %s62 = sphi 0, %s61
      %s76 = sphi 0, %s62
      %s80 = sphi 0, %s80
      %s82 = sphi 0, %s80
      %s83 = sphi 0, %s82
      %s97 = sphi 0, %s83
      %s101 = sphi 0, %s101
      %s103 = sphi 0, %s101
      %s104 = sphi 0, %s103
      %s118 = sphi 0, %s104
      %s122 = sphi 0, %s122
      %s124 = sphi 0, %s122
      %s125 = sphi 0, %s124
      %s139 = sphi 0, %s125
      %s143 = sphi 0, %s143
      %s145 = sphi 0, %s143
      %s146 = sphi 0, %s145
      %s160 = sphi 0, %s146
      %s168 = sphi 0, %s170
      %s171 = sphi 0, %s168
      %s172 = sphi 0, %s171
      %s188 = sphi 0, %s172
    $region4: #{tpu_custom_call.1} parent=1 // loop_header_branch
      %21 = sbr.rel (%p19) target = $region8
    $region5: #{tpu_custom_call.1} parent=1 // loop_body
      %s23 = ssub.s32 %s18, 1
      %s24 = ssub.s32 %s18, 2
      %s31 = sadd.s32 1, %s26
      %p32 = scmp.ge.s32.totalorder %s31, 2
      %s33 = scalar_select %p32, 0, %s31
      %s34 = sadd.s32 1, %s25
      %s35 = scalar_select %p32, %s34, %s25
      %p36 = scmp.ge.s32.totalorder %s35, 2
      %s37 = scalar_select %p36, 0, %s35
      %s39 = sadd.s32 %s38, 1
      %p42 = scmp.eq.s32.totalorder %s18, 3
      %p43 = scmp.ne.s32.totalorder %s38, %s40
      %p44 = scmp.eq.s32.totalorder %s18, 0
      %p45 = por %p43, %p44
      %p46 = scmp.ne.s32.totalorder %s38, %s40
      %p47 = scmp.eq.s32.totalorder %s23, 3
      %p48 = por %p46, %p47
      %p49 = scmp.ne.s32.totalorder %s40, %s41
      %p50 = scmp.eq.s32.totalorder %s23, 0
      %p51 = por %p49, %p50
      %p52 = scmp.ne.s32.totalorder %s40, %s41
      %p53 = scmp.eq.s32.totalorder %s24, 3
      %p54 = por %p52, %p53
      %p56 = scmp.ne.s32.totalorder %s41, %s55
      %p57 = scmp.eq.s32.totalorder %s24, 0
      %p58 = por %p56, %p57
      %s60 = sadd.s32 %s59, 1
      %p63 = scmp.eq.s32.totalorder %s18, 3
      %p64 = scmp.ne.s32.totalorder %s59, %s61
      %p65 = scmp.eq.s32.totalorder %s18, 0
      %p66 = por %p64, %p65
      %p67 = scmp.ne.s32.totalorder %s59, %s61
      %p68 = scmp.eq.s32.totalorder %s23, 3
      %p69 = por %p67, %p68
      %p70 = scmp.ne.s32.totalorder %s61, %s62
      %p71 = scmp.eq.s32.totalorder %s23, 0
      %p72 = por %p70, %p71
      %p73 = scmp.ne.s32.totalorder %s61, %s62
      %p74 = scmp.eq.s32.totalorder %s24, 3
      %p75 = por %p73, %p74
      %p77 = scmp.ne.s32.totalorder %s62, %s76
      %p78 = scmp.eq.s32.totalorder %s24, 0
      %p79 = por %p77, %p78
      %s81 = sadd.s32 %s80, 1
      %p84 = scmp.eq.s32.totalorder %s18, 3
      %p85 = scmp.ne.s32.totalorder %s80, %s82
      %p86 = scmp.eq.s32.totalorder %s18, 0
      %p87 = por %p85, %p86
      %p88 = scmp.ne.s32.totalorder %s80, %s82
      %p89 = scmp.eq.s32.totalorder %s23, 3
      %p90 = por %p88, %p89
      %p91 = scmp.ne.s32.totalorder %s82, %s83
      %p92 = scmp.eq.s32.totalorder %s23, 0
      %p93 = por %p91, %p92
      %p94 = scmp.ne.s32.totalorder %s82, %s83
      %p95 = scmp.eq.s32.totalorder %s24, 3
      %p96 = por %p94, %p95
      %p98 = scmp.ne.s32.totalorder %s83, %s97
      %p99 = scmp.eq.s32.totalorder %s24, 0
      %p100 = por %p98, %p99
      %s102 = sadd.s32 %s101, 1
      %p105 = scmp.eq.s32.totalorder %s18, 3
      %p106 = scmp.ne.s32.totalorder %s101, %s103
      %p107 = scmp.eq.s32.totalorder %s18, 0
      %p108 = por %p106, %p107
      %p109 = scmp.ne.s32.totalorder %s101, %s103
      %p110 = scmp.eq.s32.totalorder %s23, 3
      %p111 = por %p109, %p110
      %p112 = scmp.ne.s32.totalorder %s103, %s104
      %p113 = scmp.eq.s32.totalorder %s23, 0
      %p114 = por %p112, %p113
      %p115 = scmp.ne.s32.totalorder %s103, %s104
      %p116 = scmp.eq.s32.totalorder %s24, 3
      %p117 = por %p115, %p116
      %p119 = scmp.ne.s32.totalorder %s104, %s118
      %p120 = scmp.eq.s32.totalorder %s24, 0
      %p121 = por %p119, %p120
      %s123 = sadd.s32 %s122, 1
      %p126 = scmp.eq.s32.totalorder %s18, 3
      %p127 = scmp.ne.s32.totalorder %s122, %s124
      %p128 = scmp.eq.s32.totalorder %s18, 0
      %p129 = por %p127, %p128
      %p130 = scmp.ne.s32.totalorder %s122, %s124
      %p131 = scmp.eq.s32.totalorder %s23, 3
      %p132 = por %p130, %p131
      %p133 = scmp.ne.s32.totalorder %s124, %s125
      %p134 = scmp.eq.s32.totalorder %s23, 0
      %p135 = por %p133, %p134
      %p136 = scmp.ne.s32.totalorder %s124, %s125
      %p137 = scmp.eq.s32.totalorder %s24, 3
      %p138 = por %p136, %p137
      %p140 = scmp.ne.s32.totalorder %s125, %s139
      %p141 = scmp.eq.s32.totalorder %s24, 0
      %p142 = por %p140, %p141
      %s144 = sadd.s32 %s143, 1
      %p147 = scmp.eq.s32.totalorder %s18, 3
      %p148 = scmp.ne.s32.totalorder %s143, %s145
      %p149 = scmp.eq.s32.totalorder %s18, 0
      %p150 = por %p148, %p149
      %p151 = scmp.ne.s32.totalorder %s143, %s145
      %p152 = scmp.eq.s32.totalorder %s23, 3
      %p153 = por %p151, %p152
      %p154 = scmp.ne.s32.totalorder %s145, %s146
      %p155 = scmp.eq.s32.totalorder %s23, 0
      %p156 = por %p154, %p155
      %p157 = scmp.ne.s32.totalorder %s145, %s146
      %p158 = scmp.eq.s32.totalorder %s24, 3
      %p159 = por %p157, %p158
      %p161 = scmp.ne.s32.totalorder %s146, %s160
      %p162 = scmp.eq.s32.totalorder %s24, 0
      %p163 = por %p161, %p162
      %s164 = ssub.s32 %s25, %s37
      %s165 = ssub.s32 %s26, %s33
      %s166 = sor.u32 %s164, %s165
      %p167 = scmp.eq.s32.totalorder %s166, 0
      %s169 = sadd.s32 %s168, 1
      %s170 = scalar_select %p167, %s168, %s169
      %p173 = pneg %p167
      %p174 = scmp.eq.s32.totalorder %s18, 3
      %p175 = por %p173, %p174
      %p176 = scmp.ne.s32.totalorder %s168, %s171
      %p177 = scmp.eq.s32.totalorder %s18, 0
      %p178 = por %p176, %p177
      %p179 = scmp.ne.s32.totalorder %s168, %s171
      %p180 = scmp.eq.s32.totalorder %s23, 3
      %p181 = por %p179, %p180
      %p182 = scmp.ne.s32.totalorder %s171, %s172
      %p183 = scmp.eq.s32.totalorder %s23, 0
      %p184 = por %p182, %p183
      %p185 = scmp.ne.s32.totalorder %s171, %s172
      %p186 = scmp.eq.s32.totalorder %s24, 3
      %p187 = por %p185, %p186
      %p189 = scmp.ne.s32.totalorder %s172, %s188
      %p190 = scmp.eq.s32.totalorder %s24, 0
      %p191 = por %p189, %p190
      %p192 = scmp.le.s32.totalorder 1, %s18
      %p193 = scmp.lt.s32.totalorder %s18, 5
      %p194 = pnand %p192, %p193
      %p195 = pneg %p194
      // Predicated region
      $region9: #{tpu_custom_call.1} parent=5 // pred_check
        _
      $region10: #{tpu_custom_call.1} parent=5 // pred_check_branch
        %197 = sbr.rel (%p194) target = $region12
      $region11: #{tpu_custom_call.1} parent=5 // pred_region
        %s198 = ssub.s32 %s18, 1
        // Predicated region
        $region13: #{tpu_custom_call.1} parent=11 // pred_check
          %p199 = pneg %p51
        $region14: #{tpu_custom_call.1} parent=11 // pred_check_branch
          %201 = sbr.rel (%p199) target = $region16
        $region15: #{tpu_custom_call.1} parent=11 // pred_region
          _
        $region16: #{tpu_custom_call.1} parent=11 // pred_fallthru
          _
        // Predicated region
        $region17: #{tpu_custom_call.1} parent=11 // pred_check
          %p202 = pneg %p72
        $region18: #{tpu_custom_call.1} parent=11 // pred_check_branch
          %204 = sbr.rel (%p202) target = $region20
        $region19: #{tpu_custom_call.1} parent=11 // pred_region
          _
        $region20: #{tpu_custom_call.1} parent=11 // pred_fallthru
          _
        // Predicated region
        $region21: #{tpu_custom_call.1} parent=11 // pred_check
          %p205 = pneg %p93
        $region22: #{tpu_custom_call.1} parent=11 // pred_check_branch
          %207 = sbr.rel (%p205) target = $region24
        $region23: #{tpu_custom_call.1} parent=11 // pred_region
          %s209 = ssub.s32 18432, 18432
          %210 = vsyncadd [#allocation6], %s209
          %s211 = sshll.u32 [#allocation5], 4
          %s212 = int_to_ptr.vmem [resolvable:$true] %s211
          %217 = dma.hbm_to_vmem [thread:$0]  %s3, 18432, %s212, [#allocation6], 128, 128, 8
        $region24: #{tpu_custom_call.1} parent=11 // pred_fallthru
          _
        // Predicated region
        $region25: #{tpu_custom_call.1} parent=11 // pred_check
          %p218 = pneg %p114
        $region26: #{tpu_custom_call.1} parent=11 // pred_check_branch
          %220 = sbr.rel (%p218) target = $region28
        $region27: #{tpu_custom_call.1} parent=11 // pred_region
          _
        $region28: #{tpu_custom_call.1} parent=11 // pred_fallthru
          _
        // Predicated region
        $region29: #{tpu_custom_call.1} parent=11 // pred_check
          %p221 = pneg %p135
        $region30: #{tpu_custom_call.1} parent=11 // pred_check_branch
          %223 = sbr.rel (%p221) target = $region32
        $region31: #{tpu_custom_call.1} parent=11 // pred_region
          %s225 = ssub.s32 18432, 18432
          %226 = vsyncadd [#allocation9], %s225
          %s227 = sshll.u32 [#allocation8], 4
          %s228 = int_to_ptr.vmem [resolvable:$true] %s227
          %233 = dma.hbm_to_vmem [thread:$0]  %s5, 18432, %s228, [#allocation9], 128, 128, 8
        $region32: #{tpu_custom_call.1} parent=11 // pred_fallthru
          _
        // Predicated region
        $region33: #{tpu_custom_call.1} parent=11 // pred_check
          %p234 = pneg %p156
        $region34: #{tpu_custom_call.1} parent=11 // pred_check_branch
          %236 = sbr.rel (%p234) target = $region36
        $region35: #{tpu_custom_call.1} parent=11 // pred_region
          _
        $region36: #{tpu_custom_call.1} parent=11 // pred_fallthru
          _
      $region12: #{tpu_custom_call.1} parent=5 // pred_fallthru
        _
      %p237 = scmp.lt.s32.totalorder %s18, 4
      // Predicated region
      $region37: #{tpu_custom_call.1} parent=5 // pred_check
        %p238 = pneg %p237
      $region38: #{tpu_custom_call.1} parent=5 // pred_check_branch
        %240 = sbr.rel (%p238) target = $region40
      $region39: #{tpu_custom_call.1} parent=5 // pred_region
        _
      $region40: #{tpu_custom_call.1} parent=5 // pred_fallthru
        _
      %p241 = scmp.le.s32.totalorder 1, %s18
      %p242 = scmp.lt.s32.totalorder %s18, 5
      %p243 = pnand %p241, %p242
      %p244 = pneg %p243
      // Predicated region
      $region41: #{tpu_custom_call.1} parent=5 // pred_check
        _
      $region42: #{tpu_custom_call.1} parent=5 // pred_check_branch
        %246 = sbr.rel (%p243) target = $region44
      $region43: #{tpu_custom_call.1} parent=5 // pred_region
        %s247 = ssub.s32 %s18, 1
        // Predicated region
        $region45: #{tpu_custom_call.1} parent=43 // pred_check
          %p248 = pneg %p93
        $region46: #{tpu_custom_call.1} parent=43 // pred_check_branch
          %250 = sbr.rel (%p248) target = $region48
        $region47: #{tpu_custom_call.1} parent=43 // pred_region
          %251 = dma.done [#allocation6], 18432
        $region48: #{tpu_custom_call.1} parent=43 // pred_fallthru
          _
        // Predicated region
        $region49: #{tpu_custom_call.1} parent=43 // pred_check
          %p252 = pneg %p135
        $region50: #{tpu_custom_call.1} parent=43 // pred_check_branch
          %254 = sbr.rel (%p252) target = $region52
        $region51: #{tpu_custom_call.1} parent=43 // pred_region
          %255 = dma.done [#allocation9], 18432
        $region52: #{tpu_custom_call.1} parent=43 // pred_fallthru
          _
        %p256 = pneg %p51
        %p257 = pneg %p48
        %p258 = pneg %p72
        %p259 = pneg %p69
        %p260 = pneg %p93
        %p261 = pneg %p90
        %p262 = pneg %p114
        %p263 = pneg %p111
        %p264 = pneg %p135
        %p265 = pneg %p132
        %p266 = pneg %p156
        %p267 = pneg %p153
        %p268 = pneg %p184
        %p269 = pneg %p181
        %s270 = sand.u32 %s171, 1
        %s271 = scalar_lea.sflag [#allocation7], %s270
        %s272 = sand.u32 %s171, 1
        %s273 = smul.addr %s272, 128
        %s274 = scalar_lea.vmem [#allocation10], %s273
        %s275 = smul.u32 8, %s28
        %s276 = smul.u32 %s28, 8
        %s277 = smul.u32 %s276, 24
        %s278 = smul.u32 %s27, 384
        %s279 = sadd.s32 %s277, %s278
        %s280 = scalar_lea.vmem %s0, %s279
        %s281 = scalar_lea.vmem [#allocation2], 72
        %p283 = scmp.lt.u32.totalorder 18, 8
        %p284 = pneg %p283
        // Predicated region
        $region53: #{tpu_custom_call.1} parent=43 // pred_check
          _
        $region54: #{tpu_custom_call.1} parent=43 // pred_check_branch
          %286 = sbr.rel (%p283) target = $region56
        $region55: #{tpu_custom_call.1} parent=43 // pred_region
          %s315 = sand.u32 18, 7
          %p316 = scmp.eq.s32.totalorder %s315, 0
          %p317 = pneg %p316
          // Predicated region
          $region68: #{tpu_custom_call.1} parent=55 // pred_check
            _
          $region69: #{tpu_custom_call.1} parent=55 // pred_check_branch
            %319 = sbr.rel (%p316) target = $region71
          $region70: #{tpu_custom_call.1} parent=55 // pred_region
            %s320 = sand.u32 18, 7
            %s321 = ssub.s32 18, %s320
            %s322 = scalar_lea.vmem %s280, %s321
            %s323 = ssub.s32 18, %s320
            %s324 = scalar_lea.vmem %s281, %s323 [#allocation2]
            loop: start=0, step=1, limit=1
            $region72: #{tpu_custom_call.1} parent=70 // loop_pre_header
              _
            $region73: #{tpu_custom_call.1} parent=70 // loop_header
              %s326 = sphi 0, %s330
              %p327 = scmp.ge.s32.totalorder %s326, 1
              %s331 = sphi %s280, %s280
              %s332 = sphi %s281, %s281
            $region74: #{tpu_custom_call.1} parent=70 // loop_header_branch
              %329 = sbr.rel (%p327) target = $region78
            $region75: #{tpu_custom_call.1} parent=70 // loop_body
              %v333 = vld [vmem:[%s331] sm:$0xff]
              %334 = vst [vmem:[%s332] sm:$0xff] %v333
              %v335 = vld [vmem:[%s331 + $0x8] sm:$0xff]
              %336 = vst [vmem:[%s332 + $0x8] sm:$0xff] %v335
              %v337 = vld [vmem:[%s331 + $0x18] sm:$0xff]
              %338 = vst [vmem:[%s332 + $0x18] sm:$0xff] %v337
              %v339 = vld [vmem:[%s331 + $0x20] sm:$0xff]
              %340 = vst [vmem:[%s332 + $0x20] sm:$0xff] %v339
              %v341 = vld [vmem:[%s331 + $0x30] sm:$0xff]
              %342 = vst [vmem:[%s332 + $0x30] sm:$0xff] %v341
              %v343 = vld [vmem:[%s331 + $0x38] sm:$0xff]
              %344 = vst [vmem:[%s332 + $0x38] sm:$0xff] %v343
              %v345 = vld [vmem:[%s331 + $0x48] sm:$0xff]
              %346 = vst [vmem:[%s332 + $0x48] sm:$0xff] %v345
              %v347 = vld [vmem:[%s331 + $0x50] sm:$0xff]
              %348 = vst [vmem:[%s332 + $0x50] sm:$0xff] %v347
              %v349 = vld [vmem:[%s331 + $0x60] sm:$0xff]
              %350 = vst [vmem:[%s332 + $0x60] sm:$0xff] %v349
              %v351 = vld [vmem:[%s331 + $0x68] sm:$0xff]
              %352 = vst [vmem:[%s332 + $0x68] sm:$0xff] %v351
              %v353 = vld [vmem:[%s331 + $0x78] sm:$0xff]
              %354 = vst [vmem:[%s332 + $0x78] sm:$0xff] %v353
              %v355 = vld [vmem:[%s331 + $0x80] sm:$0xff]
              %356 = vst [vmem:[%s332 + $0x80] sm:$0xff] %v355
              %v357 = vld [vmem:[%s331 + $0x90] sm:$0xff]
              %358 = vst [vmem:[%s332 + $0x90] sm:$0xff] %v357
              %v359 = vld [vmem:[%s331 + $0x98] sm:$0xff]
              %360 = vst [vmem:[%s332 + $0x98] sm:$0xff] %v359
              %v361 = vld [vmem:[%s331 + $0xa8] sm:$0xff]
              %362 = vst [vmem:[%s332 + $0xa8] sm:$0xff] %v361
              %v363 = vld [vmem:[%s331 + $0xb0] sm:$0xff]
              %364 = vst [vmem:[%s332 + $0xb0] sm:$0xff] %v363
            $region76: #{tpu_custom_call.1} parent=70 // loop_footer
              %s330 = sadd.s32 1, %s326
            $region77: #{tpu_custom_call.1} parent=70 // loop_footer_branch
              %325 = sbr.rel target = $region73
            $region78: #{tpu_custom_call.1} parent=70 // loop_exit
              _
            %s365 = sshllo.u32 0, %s320
            loop: start=0, step=1, limit=1
            $region79: #{tpu_custom_call.1} parent=70 // loop_pre_header
              _
            $region80: #{tpu_custom_call.1} parent=70 // loop_header
              %s367 = sphi 0, %s371
              %p368 = scmp.ge.s32.totalorder %s367, 1
              %s372 = sphi %s322, %s322
              %s373 = sphi %s324, %s324
            $region81: #{tpu_custom_call.1} parent=70 // loop_header_branch
              %370 = sbr.rel (%p368) target = $region85
            $region82: #{tpu_custom_call.1} parent=70 // loop_body
              %v374 = vld [vmem:[%s372] sm:%s365]
              %375 = vst [vmem:[%s373] sm:%s365] %v374
              %v376 = vld [vmem:[%s372 + $0x18] sm:%s365]
              %377 = vst [vmem:[%s373 + $0x18] sm:%s365] %v376
              %v378 = vld [vmem:[%s372 + $0x30] sm:%s365]
              %379 = vst [vmem:[%s373 + $0x30] sm:%s365] %v378
              %v380 = vld [vmem:[%s372 + $0x48] sm:%s365]
              %381 = vst [vmem:[%s373 + $0x48] sm:%s365] %v380
              %v382 = vld [vmem:[%s372 + $0x60] sm:%s365]
              %383 = vst [vmem:[%s373 + $0x60] sm:%s365] %v382
              %v384 = vld [vmem:[%s372 + $0x78] sm:%s365]
              %385 = vst [vmem:[%s373 + $0x78] sm:%s365] %v384
              %v386 = vld [vmem:[%s372 + $0x90] sm:%s365]
              %387 = vst [vmem:[%s373 + $0x90] sm:%s365] %v386
              %v388 = vld [vmem:[%s372 + $0xa8] sm:%s365]
              %389 = vst [vmem:[%s373 + $0xa8] sm:%s365] %v388
            $region83: #{tpu_custom_call.1} parent=70 // loop_footer
              %s371 = sadd.s32 1, %s367
            $region84: #{tpu_custom_call.1} parent=70 // loop_footer_branch
              %366 = sbr.rel target = $region80
            $region85: #{tpu_custom_call.1} parent=70 // loop_exit
              _
          $region71: #{tpu_custom_call.1} parent=55 // pred_fallthru
            _
        $region56: #{tpu_custom_call.1} parent=43 // pred_fallthru
          _
        // Predicated region
        $region57: #{tpu_custom_call.1} parent=43 // pred_check
          %p287 = pneg %p283
        $region58: #{tpu_custom_call.1} parent=43 // pred_check_branch
          %289 = sbr.rel (%p287) target = $region60
        $region59: #{tpu_custom_call.1} parent=43 // pred_region
          %s290 = sshllo.u32 0, 18
          loop: start=0, step=1, limit=1
          $region61: #{tpu_custom_call.1} parent=59 // loop_pre_header
            _
          $region62: #{tpu_custom_call.1} parent=59 // loop_header
            %s292 = sphi 0, %s296
            %p293 = scmp.ge.s32.totalorder %s292, 1
            %s297 = sphi %s280, %s280
            %s298 = sphi %s281, %s281
          $region63: #{tpu_custom_call.1} parent=59 // loop_header_branch
            %295 = sbr.rel (%p293) target = $region67
          $region64: #{tpu_custom_call.1} parent=59 // loop_body
            %v299 = vld [vmem:[%s297] sm:%s290]
            %300 = vst [vmem:[%s298] sm:%s290] %v299
            %v301 = vld [vmem:[%s297 + $0x18] sm:%s290]
            %302 = vst [vmem:[%s298 + $0x18] sm:%s290] %v301
            %v303 = vld [vmem:[%s297 + $0x30] sm:%s290]
            %304 = vst [vmem:[%s298 + $0x30] sm:%s290] %v303
            %v305 = vld [vmem:[%s297 + $0x48] sm:%s290]
            %306 = vst [vmem:[%s298 + $0x48] sm:%s290] %v305
            %v307 = vld [vmem:[%s297 + $0x60] sm:%s290]
            %308 = vst [vmem:[%s298 + $0x60] sm:%s290] %v307
            %v309 = vld [vmem:[%s297 + $0x78] sm:%s290]
            %310 = vst [vmem:[%s298 + $0x78] sm:%s290] %v309
            %v311 = vld [vmem:[%s297 + $0x90] sm:%s290]
            %312 = vst [vmem:[%s298 + $0x90] sm:%s290] %v311
            %v313 = vld [vmem:[%s297 + $0xa8] sm:%s290]
            %314 = vst [vmem:[%s298 + $0xa8] sm:%s290] %v313
          $region65: #{tpu_custom_call.1} parent=59 // loop_footer
            %s296 = sadd.s32 1, %s292
          $region66: #{tpu_custom_call.1} parent=59 // loop_footer_branch
            %291 = sbr.rel target = $region62
          $region67: #{tpu_custom_call.1} parent=59 // loop_exit
            _
        $region60: #{tpu_custom_call.1} parent=43 // pred_fallthru
          _
        // Predicated region
        $region86: #{tpu_custom_call.1} parent=43 // pred_check
          _
        $region87: #{tpu_custom_call.1} parent=43 // pred_check_branch
          %392 = sbr.rel (0) target = $region89
        $region88: #{tpu_custom_call.1} parent=43 // pred_region
          %393 = vsyncadd [#allocation4], 2304
        $region89: #{tpu_custom_call.1} parent=43 // pred_fallthru
          _
        %p394 = scmp.gt.s32.totalorder %s28, 0
        // Predicated region
        $region90: #{tpu_custom_call.1} parent=43 // pred_check
          %p395 = pneg %p394
        $region91: #{tpu_custom_call.1} parent=43 // pred_check_branch
          %397 = sbr.rel (%p395) target = $region93
        $region92: #{tpu_custom_call.1} parent=43 // pred_region
          %s398 = ssub.s32 %s276, 3
          %s399 = smul.u32 %s398, 24
          %s400 = sadd.s32 %s399, %s278
          %s401 = scalar_lea.vmem %s0, %s400
          %s402 = scalar_lea.sflag [#allocation4], 1
          %p404 = scmp.lt.u32.totalorder 18, 8
          %p405 = pneg %p404
          // Predicated region
          $region94: #{tpu_custom_call.1} parent=92 // pred_check
            _
          $region95: #{tpu_custom_call.1} parent=92 // pred_check_branch
            %407 = sbr.rel (%p404) target = $region97
          $region96: #{tpu_custom_call.1} parent=92 // pred_region
            %s426 = sand.u32 18, 7
            %p427 = scmp.eq.s32.totalorder %s426, 0
            %p428 = pneg %p427
            // Predicated region
            $region109: #{tpu_custom_call.1} parent=96 // pred_check
              _
            $region110: #{tpu_custom_call.1} parent=96 // pred_check_branch
              %430 = sbr.rel (%p427) target = $region112
            $region111: #{tpu_custom_call.1} parent=96 // pred_region
              %s431 = sand.u32 18, 7
              %s432 = ssub.s32 18, %s431
              %s433 = scalar_lea.vmem %s401, %s432
              %s434 = ssub.s32 18, %s431
              %s435 = scalar_lea.vmem [#allocation2], %s434
              loop: start=0, step=1, limit=1
              $region113: #{tpu_custom_call.1} parent=111 // loop_pre_header
                _
              $region114: #{tpu_custom_call.1} parent=111 // loop_header
                %s437 = sphi 0, %s441
                %p438 = scmp.ge.s32.totalorder %s437, 1
                %s442 = sphi %s401, %s401
                %s443 = sphi [#allocation2], [#allocation2]
              $region115: #{tpu_custom_call.1} parent=111 // loop_header_branch
                %440 = sbr.rel (%p438) target = $region119
              $region116: #{tpu_custom_call.1} parent=111 // loop_body
                %v444 = vld [vmem:[%s442] sm:$0xff]
                %445 = vst [vmem:[%s443] sm:$0xff] %v444
                %v446 = vld [vmem:[%s442 + $0x8] sm:$0xff]
                %447 = vst [vmem:[%s443 + $0x8] sm:$0xff] %v446
                %v448 = vld [vmem:[%s442 + $0x18] sm:$0xff]
                %449 = vst [vmem:[%s443 + $0x18] sm:$0xff] %v448
                %v450 = vld [vmem:[%s442 + $0x20] sm:$0xff]
                %451 = vst [vmem:[%s443 + $0x20] sm:$0xff] %v450
                %v452 = vld [vmem:[%s442 + $0x30] sm:$0xff]
                %453 = vst [vmem:[%s443 + $0x30] sm:$0xff] %v452
                %v454 = vld [vmem:[%s442 + $0x38] sm:$0xff]
                %455 = vst [vmem:[%s443 + $0x38] sm:$0xff] %v454
              $region117: #{tpu_custom_call.1} parent=111 // loop_footer
                %s441 = sadd.s32 1, %s437
              $region118: #{tpu_custom_call.1} parent=111 // loop_footer_branch
                %436 = sbr.rel target = $region114
              $region119: #{tpu_custom_call.1} parent=111 // loop_exit
                _
              %s456 = sshllo.u32 0, %s431
              loop: start=0, step=1, limit=1
              $region120: #{tpu_custom_call.1} parent=111 // loop_pre_header
                _
              $region121: #{tpu_custom_call.1} parent=111 // loop_header
                %s458 = sphi 0, %s462
                %p459 = scmp.ge.s32.totalorder %s458, 1
                %s463 = sphi %s433, %s433
                %s464 = sphi %s435, %s435
              $region122: #{tpu_custom_call.1} parent=111 // loop_header_branch
                %461 = sbr.rel (%p459) target = $region126
              $region123: #{tpu_custom_call.1} parent=111 // loop_body
                %v465 = vld [vmem:[%s463] sm:%s456]
                %466 = vst [vmem:[%s464] sm:%s456] %v465
                %v467 = vld [vmem:[%s463 + $0x18] sm:%s456]
                %468 = vst [vmem:[%s464 + $0x18] sm:%s456] %v467
                %v469 = vld [vmem:[%s463 + $0x30] sm:%s456]
                %470 = vst [vmem:[%s464 + $0x30] sm:%s456] %v469
              $region124: #{tpu_custom_call.1} parent=111 // loop_footer
                %s462 = sadd.s32 1, %s458
              $region125: #{tpu_custom_call.1} parent=111 // loop_footer_branch
                %457 = sbr.rel target = $region121
              $region126: #{tpu_custom_call.1} parent=111 // loop_exit
                _
            $region112: #{tpu_custom_call.1} parent=96 // pred_fallthru
              _
          $region97: #{tpu_custom_call.1} parent=92 // pred_fallthru
            _
          // Predicated region
          $region98: #{tpu_custom_call.1} parent=92 // pred_check
            %p408 = pneg %p404
          $region99: #{tpu_custom_call.1} parent=92 // pred_check_branch
            %410 = sbr.rel (%p408) target = $region101
          $region100: #{tpu_custom_call.1} parent=92 // pred_region
            %s411 = sshllo.u32 0, 18
            loop: start=0, step=1, limit=1
            $region102: #{tpu_custom_call.1} parent=100 // loop_pre_header
              _
            $region103: #{tpu_custom_call.1} parent=100 // loop_header
              %s413 = sphi 0, %s417
              %p414 = scmp.ge.s32.totalorder %s413, 1
              %s418 = sphi %s401, %s401
              %s419 = sphi [#allocation2], [#allocation2]
            $region104: #{tpu_custom_call.1} parent=100 // loop_header_branch
              %416 = sbr.rel (%p414) target = $region108
            $region105: #{tpu_custom_call.1} parent=100 // loop_body
              %v420 = vld [vmem:[%s418] sm:%s411]
              %421 = vst [vmem:[%s419] sm:%s411] %v420
              %v422 = vld [vmem:[%s418 + $0x18] sm:%s411]
              %423 = vst [vmem:[%s419 + $0x18] sm:%s411] %v422
              %v424 = vld [vmem:[%s418 + $0x30] sm:%s411]
              %425 = vst [vmem:[%s419 + $0x30] sm:%s411] %v424
            $region106: #{tpu_custom_call.1} parent=100 // loop_footer
              %s417 = sadd.s32 1, %s413
            $region107: #{tpu_custom_call.1} parent=100 // loop_footer_branch
              %412 = sbr.rel target = $region103
            $region108: #{tpu_custom_call.1} parent=100 // loop_exit
              _
          $region101: #{tpu_custom_call.1} parent=92 // pred_fallthru
            _
          // Predicated region
          $region127: #{tpu_custom_call.1} parent=92 // pred_check
            _
          $region128: #{tpu_custom_call.1} parent=92 // pred_check_branch
            %473 = sbr.rel (0) target = $region130
          $region129: #{tpu_custom_call.1} parent=92 // pred_region
            %474 = vsyncadd %s402, 864
          $region130: #{tpu_custom_call.1} parent=92 // pred_fallthru
            _
          %s475 = smul.u32 3, 18
          %s476 = smul.u32 %s475, 1
          %s477 = sshll.u32 %s476, 4
          %478 = dma.done %s402, %s477
        $region93: #{tpu_custom_call.1} parent=43 // pred_fallthru
          _
        %p479 = scmp.eq.s32.totalorder %s28, 0
        // Predicated region
        $region131: #{tpu_custom_call.1} parent=43 // pred_check
          %p480 = pneg %p479
        $region132: #{tpu_custom_call.1} parent=43 // pred_check_branch
          %482 = sbr.rel (%p480) target = $region134
        $region133: #{tpu_custom_call.1} parent=43 // pred_region
          %483 = vst [vmem:[#allocation2] sm:$0xff] 0.0
          %484 = vst [vmem:[#allocation2 + $0x8] sm:$0xff] 0.0
          %485 = vst [vmem:[#allocation2 + $0x10] sm:$0x3] 0.0
          %486 = vst [vmem:[#allocation2 + $0x18] sm:$0xff] 0.0
          %487 = vst [vmem:[#allocation2 + $0x20] sm:$0xff] 0.0
          %488 = vst [vmem:[#allocation2 + $0x28] sm:$0x3] 0.0
          %489 = vst [vmem:[#allocation2 + $0x30] sm:$0xff] 0.0
          %490 = vst [vmem:[#allocation2 + $0x38] sm:$0xff] 0.0
          %491 = vst [vmem:[#allocation2 + $0x40] sm:$0x3] 0.0
        $region134: #{tpu_custom_call.1} parent=43 // pred_fallthru
          _
        %p492 = scmp.lt.s32.totalorder %s28, 1
        // Predicated region
        $region135: #{tpu_custom_call.1} parent=43 // pred_check
          %p493 = pneg %p492
        $region136: #{tpu_custom_call.1} parent=43 // pred_check_branch
          %495 = sbr.rel (%p493) target = $region138
        $region137: #{tpu_custom_call.1} parent=43 // pred_region
          %s496 = sadd.s32 %s276, 8
          %s497 = smul.u32 %s496, 24
          %s498 = sadd.s32 %s497, %s278
          %s499 = scalar_lea.vmem %s0, %s498
          %s500 = scalar_lea.vmem [#allocation2], 264
          %s501 = scalar_lea.sflag [#allocation4], 2
          %p503 = scmp.lt.u32.totalorder 18, 8
          %p504 = pneg %p503
          // Predicated region
          $region139: #{tpu_custom_call.1} parent=137 // pred_check
            _
          $region140: #{tpu_custom_call.1} parent=137 // pred_check_branch
            %506 = sbr.rel (%p503) target = $region142
          $region141: #{tpu_custom_call.1} parent=137 // pred_region
            %s525 = sand.u32 18, 7
            %p526 = scmp.eq.s32.totalorder %s525, 0
            %p527 = pneg %p526
            // Predicated region
            $region154: #{tpu_custom_call.1} parent=141 // pred_check
              _
            $region155: #{tpu_custom_call.1} parent=141 // pred_check_branch
              %529 = sbr.rel (%p526) target = $region157
            $region156: #{tpu_custom_call.1} parent=141 // pred_region
              %s530 = sand.u32 18, 7
              %s531 = ssub.s32 18, %s530
              %s532 = scalar_lea.vmem %s499, %s531
              %s533 = ssub.s32 18, %s530
              %s534 = scalar_lea.vmem %s500, %s533 [#allocation2]
              loop: start=0, step=1, limit=1
              $region158: #{tpu_custom_call.1} parent=156 // loop_pre_header
                _
              $region159: #{tpu_custom_call.1} parent=156 // loop_header
                %s536 = sphi 0, %s540
                %p537 = scmp.ge.s32.totalorder %s536, 1
                %s541 = sphi %s499, %s499
                %s542 = sphi %s500, %s500
              $region160: #{tpu_custom_call.1} parent=156 // loop_header_branch
                %539 = sbr.rel (%p537) target = $region164
              $region161: #{tpu_custom_call.1} parent=156 // loop_body
                %v543 = vld [vmem:[%s541] sm:$0xff]
                %544 = vst [vmem:[%s542] sm:$0xff] %v543
                %v545 = vld [vmem:[%s541 + $0x8] sm:$0xff]
                %546 = vst [vmem:[%s542 + $0x8] sm:$0xff] %v545
                %v547 = vld [vmem:[%s541 + $0x18] sm:$0xff]
                %548 = vst [vmem:[%s542 + $0x18] sm:$0xff] %v547
                %v549 = vld [vmem:[%s541 + $0x20] sm:$0xff]
                %550 = vst [vmem:[%s542 + $0x20] sm:$0xff] %v549
                %v551 = vld [vmem:[%s541 + $0x30] sm:$0xff]
                %552 = vst [vmem:[%s542 + $0x30] sm:$0xff] %v551
                %v553 = vld [vmem:[%s541 + $0x38] sm:$0xff]
                %554 = vst [vmem:[%s542 + $0x38] sm:$0xff] %v553
              $region162: #{tpu_custom_call.1} parent=156 // loop_footer
                %s540 = sadd.s32 1, %s536
              $region163: #{tpu_custom_call.1} parent=156 // loop_footer_branch
                %535 = sbr.rel target = $region159
              $region164: #{tpu_custom_call.1} parent=156 // loop_exit
                _
              %s555 = sshllo.u32 0, %s530
              loop: start=0, step=1, limit=1
              $region165: #{tpu_custom_call.1} parent=156 // loop_pre_header
                _
              $region166: #{tpu_custom_call.1} parent=156 // loop_header
                %s557 = sphi 0, %s561
                %p558 = scmp.ge.s32.totalorder %s557, 1
                %s562 = sphi %s532, %s532
                %s563 = sphi %s534, %s534
              $region167: #{tpu_custom_call.1} parent=156 // loop_header_branch
                %560 = sbr.rel (%p558) target = $region171
              $region168: #{tpu_custom_call.1} parent=156 // loop_body
                %v564 = vld [vmem:[%s562] sm:%s555]
                %565 = vst [vmem:[%s563] sm:%s555] %v564
                %v566 = vld [vmem:[%s562 + $0x18] sm:%s555]
                %567 = vst [vmem:[%s563 + $0x18] sm:%s555] %v566
                %v568 = vld [vmem:[%s562 + $0x30] sm:%s555]
                %569 = vst [vmem:[%s563 + $0x30] sm:%s555] %v568
              $region169: #{tpu_custom_call.1} parent=156 // loop_footer
                %s561 = sadd.s32 1, %s557
              $region170: #{tpu_custom_call.1} parent=156 // loop_footer_branch
                %556 = sbr.rel target = $region166
              $region171: #{tpu_custom_call.1} parent=156 // loop_exit
                _
            $region157: #{tpu_custom_call.1} parent=141 // pred_fallthru
              _
          $region142: #{tpu_custom_call.1} parent=137 // pred_fallthru
            _
          // Predicated region
          $region143: #{tpu_custom_call.1} parent=137 // pred_check
            %p507 = pneg %p503
          $region144: #{tpu_custom_call.1} parent=137 // pred_check_branch
            %509 = sbr.rel (%p507) target = $region146
          $region145: #{tpu_custom_call.1} parent=137 // pred_region
            %s510 = sshllo.u32 0, 18
            loop: start=0, step=1, limit=1
            $region147: #{tpu_custom_call.1} parent=145 // loop_pre_header
              _
            $region148: #{tpu_custom_call.1} parent=145 // loop_header
              %s512 = sphi 0, %s516
              %p513 = scmp.ge.s32.totalorder %s512, 1
              %s517 = sphi %s499, %s499
              %s518 = sphi %s500, %s500
            $region149: #{tpu_custom_call.1} parent=145 // loop_header_branch
              %515 = sbr.rel (%p513) target = $region153
            $region150: #{tpu_custom_call.1} parent=145 // loop_body
              %v519 = vld [vmem:[%s517] sm:%s510]
              %520 = vst [vmem:[%s518] sm:%s510] %v519
              %v521 = vld [vmem:[%s517 + $0x18] sm:%s510]
              %522 = vst [vmem:[%s518 + $0x18] sm:%s510] %v521
              %v523 = vld [vmem:[%s517 + $0x30] sm:%s510]
              %524 = vst [vmem:[%s518 + $0x30] sm:%s510] %v523
            $region151: #{tpu_custom_call.1} parent=145 // loop_footer
              %s516 = sadd.s32 1, %s512
            $region152: #{tpu_custom_call.1} parent=145 // loop_footer_branch
              %511 = sbr.rel target = $region148
            $region153: #{tpu_custom_call.1} parent=145 // loop_exit
              _
          $region146: #{tpu_custom_call.1} parent=137 // pred_fallthru
            _
          // Predicated region
          $region172: #{tpu_custom_call.1} parent=137 // pred_check
            _
          $region173: #{tpu_custom_call.1} parent=137 // pred_check_branch
            %572 = sbr.rel (0) target = $region175
          $region174: #{tpu_custom_call.1} parent=137 // pred_region
            %573 = vsyncadd %s501, 864
          $region175: #{tpu_custom_call.1} parent=137 // pred_fallthru
            _
          %s574 = smul.u32 3, 18
          %s575 = smul.u32 %s574, 1
          %s576 = sshll.u32 %s575, 4
          %577 = dma.done %s501, %s576
        $region138: #{tpu_custom_call.1} parent=43 // pred_fallthru
          _
        %p578 = scmp.eq.s32.totalorder %s28, 1
        // Predicated region
        $region176: #{tpu_custom_call.1} parent=43 // pred_check
          %p579 = pneg %p578
        $region177: #{tpu_custom_call.1} parent=43 // pred_check_branch
          %581 = sbr.rel (%p579) target = $region179
        $region178: #{tpu_custom_call.1} parent=43 // pred_region
          %s582 = scalar_lea.vmem [#allocation2], 264
          %583 = vst [vmem:[%s582] sm:$0xff] 0.0
          %584 = vst [vmem:[%s582 + $0x8] sm:$0xff] 0.0
          %585 = vst [vmem:[%s582 + $0x10] sm:$0x3] 0.0
          %586 = vst [vmem:[%s582 + $0x18] sm:$0xff] 0.0
          %587 = vst [vmem:[%s582 + $0x20] sm:$0xff] 0.0
          %588 = vst [vmem:[%s582 + $0x28] sm:$0x3] 0.0
          %589 = vst [vmem:[%s582 + $0x30] sm:$0xff] 0.0
          %590 = vst [vmem:[%s582 + $0x38] sm:$0xff] 0.0
          %591 = vst [vmem:[%s582 + $0x40] sm:$0x3] 0.0
        $region179: #{tpu_custom_call.1} parent=43 // pred_fallthru
          _
        %592 = vst [vmem:[#allocation3] sm:$0x1] 0.0
        %593 = vst [vmem:[#allocation3 + $0x18] sm:$0x1] 0.0
        %594 = vst [vmem:[#allocation3 + $0x30] sm:$0x1] 0.0
        %595 = vst [vmem:[#allocation3 + $0x48] sm:$0x1] 0.0
        %596 = vst [vmem:[#allocation3 + $0x60] sm:$0x1] 0.0
        %597 = vst [vmem:[#allocation3 + $0x78] sm:$0x1] 0.0
        %598 = vst [vmem:[#allocation3 + $0x90] sm:$0x1] 0.0
        %599 = vst [vmem:[#allocation3 + $0xa8] sm:$0x1] 0.0
        %600 = vst [vmem:[#allocation3 + $0xc0] sm:$0x1] 0.0
        %601 = vst [vmem:[#allocation3 + $0xd8] sm:$0x1] 0.0
        %602 = vst [vmem:[#allocation3 + $0xf0] sm:$0x1] 0.0
        %603 = vst [vmem:[#allocation3 + $0x108] sm:$0x1] 0.0
        %604 = vst [vmem:[#allocation3 + $0x120] sm:$0x1] 0.0
        %605 = vst [vmem:[#allocation3 + $0x138] sm:$0x1] 0.0
        %606 = vst [vmem:[#allocation3 + $0x11] sm:$0x1] 0.0
        %607 = vst [vmem:[#allocation3 + $0x29] sm:$0x1] 0.0
        %608 = vst [vmem:[#allocation3 + $0x41] sm:$0x1] 0.0
        %609 = vst [vmem:[#allocation3 + $0x59] sm:$0x1] 0.0
        %610 = vst [vmem:[#allocation3 + $0x71] sm:$0x1] 0.0
        %611 = vst [vmem:[#allocation3 + $0x89] sm:$0x1] 0.0
        %612 = vst [vmem:[#allocation3 + $0xa1] sm:$0x1] 0.0
        %613 = vst [vmem:[#allocation3 + $0xb9] sm:$0x1] 0.0
        %614 = vst [vmem:[#allocation3 + $0xd1] sm:$0x1] 0.0
        %615 = vst [vmem:[#allocation3 + $0xe9] sm:$0x1] 0.0
        %616 = vst [vmem:[#allocation3 + $0x101] sm:$0x1] 0.0
        %617 = vst [vmem:[#allocation3 + $0x119] sm:$0x1] 0.0
        %618 = vst [vmem:[#allocation3 + $0x131] sm:$0x1] 0.0
        %619 = vst [vmem:[#allocation3 + $0x149] sm:$0x1] 0.0
        %s620 = smul.u32 8, 18
        %s621 = smul.u32 %s620, 1
        %s622 = sshll.u32 %s621, 4
        %623 = dma.done [#allocation4], %s622
        %v624 = vld [vmem:[#allocation2] sm:$0xff]
        %v625 = vld [vmem:[#allocation2 + $0x8] sm:$0xff]
        %v626 = vld [vmem:[#allocation2 + $0x10] sm:$0x3]
        %v627 = vld [vmem:[#allocation2 + $0x18] sm:$0xff]
        %v628 = vld [vmem:[#allocation2 + $0x20] sm:$0xff]
        %v629 = vld [vmem:[#allocation2 + $0x28] sm:$0x3]
        %v630 = vld [vmem:[#allocation2 + $0x30] sm:$0xff]
        %v631 = vld [vmem:[#allocation2 + $0x38] sm:$0xff]
        %v632 = vld [vmem:[#allocation2 + $0x40] sm:$0x3]
        %v633 = vld [vmem:[#allocation2 + $0x48] sm:$0xff]
        %v634 = vld [vmem:[#allocation2 + $0x50] sm:$0xff]
        %v635 = vld [vmem:[#allocation2 + $0x58] sm:$0x3]
        %v636 = vld [vmem:[#allocation2 + $0x60] sm:$0xff]
        %v637 = vld [vmem:[#allocation2 + $0x68] sm:$0xff]
        %v638 = vld [vmem:[#allocation2 + $0x70] sm:$0x3]
        %v639 = vld [vmem:[#allocation2 + $0x78] sm:$0xff]
        %v640 = vld [vmem:[#allocation2 + $0x80] sm:$0xff]
        %v641 = vld [vmem:[#allocation2 + $0x88] sm:$0x3]
        %v642 = vld [vmem:[#allocation2 + $0x90] sm:$0xff]
        %v643 = vld [vmem:[#allocation2 + $0x98] sm:$0xff]
        %v644 = vld [vmem:[#allocation2 + $0xa0] sm:$0x3]
        %v645 = vld [vmem:[#allocation2 + $0xa8] sm:$0xff]
        %v646 = vld [vmem:[#allocation2 + $0xb0] sm:$0xff]
        %v647 = vld [vmem:[#allocation2 + $0xb8] sm:$0x3]
        %v648 = vld [vmem:[#allocation2 + $0xc0] sm:$0xff]
        %v649 = vld [vmem:[#allocation2 + $0xc8] sm:$0xff]
        %v650 = vld [vmem:[#allocation2 + $0xd0] sm:$0x3]
        %v651 = vld [vmem:[#allocation2 + $0xd8] sm:$0xff]
        %v652 = vld [vmem:[#allocation2 + $0xe0] sm:$0xff]
        %v653 = vld [vmem:[#allocation2 + $0xe8] sm:$0x3]
        %v654 = vld [vmem:[#allocation2 + $0xf0] sm:$0xff]
        %v655 = vld [vmem:[#allocation2 + $0xf8] sm:$0xff]
        %v656 = vld [vmem:[#allocation2 + $0x100] sm:$0x3]
        %v657 = vld [vmem:[#allocation2 + $0x108] sm:$0xff]
        %v658 = vld [vmem:[#allocation2 + $0x110] sm:$0xff]
        %v659 = vld [vmem:[#allocation2 + $0x118] sm:$0x3]
        %v660 = vld [vmem:[#allocation2 + $0x120] sm:$0xff]
        %v661 = vld [vmem:[#allocation2 + $0x128] sm:$0xff]
        %v662 = vld [vmem:[#allocation2 + $0x130] sm:$0x3]
        %v663 = vld [vmem:[#allocation2 + $0x138] sm:$0xff]
        %v664 = vld [vmem:[#allocation2 + $0x140] sm:$0xff]
        %v665 = vld [vmem:[#allocation2 + $0x148] sm:$0x3]
        %vm702 = vcmask 1046528
        %v703 = vrot.slane %v624, 1
        %v704 = vrot.slane %v625, 1
        %v705 = vsel %vm702, %v703, %v704
        %v706 = vrot.slane %v626, 1
        %v707 = vsel %vm702, %v704, %v706
        %v708 = vrot.slane %v627, 1
        %v709 = vrot.slane %v628, 1
        %v710 = vsel %vm702, %v708, %v709
        %v711 = vrot.slane %v629, 1
        %v712 = vsel %vm702, %v709, %v711
        %v713 = vrot.slane %v630, 1
        %v714 = vrot.slane %v631, 1
        %v715 = vsel %vm702, %v713, %v714
        %v716 = vrot.slane %v632, 1
        %v717 = vsel %vm702, %v714, %v716
        %v718 = vrot.slane %v633, 1
        %v719 = vrot.slane %v634, 1
        %v720 = vsel %vm702, %v718, %v719
        %v721 = vrot.slane %v635, 1
        %v722 = vsel %vm702, %v719, %v721
        %v723 = vrot.slane %v636, 1
        %v724 = vrot.slane %v637, 1
        %v725 = vsel %vm702, %v723, %v724
        %v726 = vrot.slane %v638, 1
        %v727 = vsel %vm702, %v724, %v726
        %v728 = vrot.slane %v639, 1
        %v729 = vrot.slane %v640, 1
        %v730 = vsel %vm702, %v728, %v729
        %v731 = vrot.slane %v641, 1
        %v732 = vsel %vm702, %v729, %v731
        %v733 = vrot.slane %v642, 1
        %v734 = vrot.slane %v643, 1
        %v735 = vsel %vm702, %v733, %v734
        %v736 = vrot.slane %v644, 1
        %v737 = vsel %vm702, %v734, %v736
        %v738 = vrot.slane %v645, 1
        %v739 = vrot.slane %v646, 1
        %v740 = vsel %vm702, %v738, %v739
        %v741 = vrot.slane %v647, 1
        %v742 = vsel %vm702, %v739, %v741
        %v743 = vrot.slane %v648, 1
        %v744 = vrot.slane %v649, 1
        %v745 = vsel %vm702, %v743, %v744
        %v746 = vrot.slane %v650, 1
        %v747 = vsel %vm702, %v744, %v746
        %v748 = vrot.slane %v651, 1
        %v749 = vrot.slane %v652, 1
        %v750 = vsel %vm702, %v748, %v749
        %v751 = vrot.slane %v653, 1
        %v752 = vsel %vm702, %v749, %v751
        %v753 = vrot.slane %v654, 1
        %v754 = vrot.slane %v655, 1
        %v755 = vsel %vm702, %v753, %v754
        %v756 = vrot.slane %v656, 1
        %v757 = vsel %vm702, %v754, %v756
        %v758 = vrot.slane %v657, 1
        %v759 = vrot.slane %v658, 1
        %v760 = vsel %vm702, %v758, %v759
        %v761 = vrot.slane %v659, 1
        %v762 = vsel %vm702, %v759, %v761
        %vm787 = vcmask 1045504
        %v788 = vrot.slane %v624, 2
        %v789 = vrot.slane %v625, 2
        %v790 = vsel %vm787, %v788, %v789
        %v791 = vrot.slane %v626, 2
        %v792 = vsel %vm787, %v789, %v791
        %v793 = vrot.slane %v627, 2
        %v794 = vrot.slane %v628, 2
        %v795 = vsel %vm787, %v793, %v794
        %v796 = vrot.slane %v629, 2
        %v797 = vsel %vm787, %v794, %v796
        %v798 = vrot.slane %v630, 2
        %v799 = vrot.slane %v631, 2
        %v800 = vsel %vm787, %v798, %v799
        %v801 = vrot.slane %v632, 2
        %v802 = vsel %vm787, %v799, %v801
        %v803 = vrot.slane %v633, 2
        %v804 = vrot.slane %v634, 2
        %v805 = vsel %vm787, %v803, %v804
        %v806 = vrot.slane %v635, 2
        %v807 = vsel %vm787, %v804, %v806
        %v808 = vrot.slane %v636, 2
        %v809 = vrot.slane %v637, 2
        %v810 = vsel %vm787, %v808, %v809
        %v811 = vrot.slane %v638, 2
        %v812 = vsel %vm787, %v809, %v811
        %v813 = vrot.slane %v639, 2
        %v814 = vrot.slane %v640, 2
        %v815 = vsel %vm787, %v813, %v814
        %v816 = vrot.slane %v641, 2
        %v817 = vsel %vm787, %v814, %v816
        %v818 = vrot.slane %v642, 2
        %v819 = vrot.slane %v643, 2
        %v820 = vsel %vm787, %v818, %v819
        %v821 = vrot.slane %v644, 2
        %v822 = vsel %vm787, %v819, %v821
        %v823 = vrot.slane %v645, 2
        %v824 = vrot.slane %v646, 2
        %v825 = vsel %vm787, %v823, %v824
        %v826 = vrot.slane %v647, 2
        %v827 = vsel %vm787, %v824, %v826
        %v828 = vrot.slane %v648, 2
        %v829 = vrot.slane %v649, 2
        %v830 = vsel %vm787, %v828, %v829
        %v831 = vrot.slane %v650, 2
        %v832 = vsel %vm787, %v829, %v831
        %v833 = vrot.slane %v651, 2
        %v834 = vrot.slane %v652, 2
        %v835 = vsel %vm787, %v833, %v834
        %v836 = vrot.slane %v653, 2
        %v837 = vsel %vm787, %v834, %v836
        %v838 = vrot.slane %v654, 2
        %v839 = vrot.slane %v655, 2
        %v840 = vsel %vm787, %v838, %v839
        %v841 = vrot.slane %v656, 2
        %v842 = vsel %vm787, %v839, %v841
        %v843 = vrot.slane %v657, 2
        %v844 = vrot.slane %v658, 2
        %v845 = vsel %vm787, %v843, %v844
        %v846 = vrot.slane %v659, 2
        %v847 = vsel %vm787, %v844, %v846
        %v875 = vrot.slane %v660, 1
        %v876 = vrot.slane %v661, 1
        %v877 = vsel %vm702, %v875, %v876
        %v878 = vrot.slane %v662, 1
        %v879 = vsel %vm702, %v876, %v878
        %v882 = vrot.slane %v660, 2
        %v883 = vrot.slane %v661, 2
        %v884 = vsel %vm787, %v882, %v883
        %v885 = vrot.slane %v662, 2
        %v886 = vsel %vm787, %v883, %v885
        %v892 = vrot.slane %v663, 1
        %v893 = vrot.slane %v664, 1
        %v894 = vsel %vm702, %v892, %v893
        %v895 = vrot.slane %v665, 1
        %v896 = vsel %vm702, %v893, %v895
        %v899 = vrot.slane %v663, 2
        %v900 = vrot.slane %v664, 2
        %v901 = vsel %vm787, %v899, %v900
        %v902 = vrot.slane %v665, 2
        %v903 = vsel %vm787, %v900, %v902
        %v906 = vld [vmem:[%s1] sm:$0xff]
        %v907 = vld [vmem:[%s1 + $0x8] sm:$0xff]
        %v908 = vld [vmem:[%s1 + $0x10] sm:$0xff]
        %v909 = vld [vmem:[%s1 + $0x18] sm:$0xff]
        %v910 = vld [vmem:[%s1 + $0x20] sm:$0xff]
        %v911 = vld [vmem:[%s1 + $0x28] sm:$0xff]
        %v912 = vld [vmem:[%s1 + $0x30] sm:$0xff]
        %v913 = vld [vmem:[%s1 + $0x38] sm:$0xff]
        %v914 = vld [vmem:[%s1 + $0x40] sm:$0xff]
        %v915 = vld [vmem:[%s1 + $0x48] sm:$0xff]
        %v916 = vld [vmem:[%s1 + $0x50] sm:$0xff]
        %v917 = vld [vmem:[%s1 + $0x58] sm:$0xff]
        %v918 = vld [vmem:[%s1 + $0x60] sm:$0xff]
        %v919 = vld [vmem:[%s1 + $0x68] sm:$0xff]
        %v920 = vld [vmem:[%s1 + $0x70] sm:$0xff]
        %v921 = vld [vmem:[%s1 + $0x78] sm:$0xff]
        %v922 = vld [vmem:[%s1 + $0x80] sm:$0xff]
        %v923 = vld [vmem:[%s1 + $0x88] sm:$0xff]
        %v924 = vld [vmem:[%s1 + $0x90] sm:$0xff]
        %v925 = vld [vmem:[%s1 + $0x98] sm:$0xff]
        %v926 = vld [vmem:[%s1 + $0xa0] sm:$0xff]
        %v927 = vld [vmem:[%s1 + $0xa8] sm:$0xff]
        %v928 = vld [vmem:[%s1 + $0xb0] sm:$0xff]
        %v929 = vld [vmem:[%s1 + $0xb8] sm:$0xff]
        %v930 = vld [vmem:[%s1 + $0xc0] sm:$0xff]
        %v931 = vld [vmem:[%s1 + $0xc8] sm:$0xff]
        %v932 = vld [vmem:[%s1 + $0xd0] sm:$0xff]
        %v933 = vld [vmem:[%s1 + $0xd8] sm:$0xff]
        %v934 = vld [vmem:[%s1 + $0xe0] sm:$0xff]
        %v935 = vld [vmem:[%s1 + $0xe8] sm:$0xff]
        %v936 = vld [vmem:[%s1 + $0xf0] sm:$0xff]
        %v937 = vld [vmem:[%s1 + $0xf8] sm:$0xff]
        %v938 = vld [vmem:[%s1 + $0x100] sm:$0xff]
        %v939 = vld [vmem:[%s1 + $0x108] sm:$0xff]
        %v940 = vld [vmem:[%s1 + $0x110] sm:$0xff]
        %v941 = vld [vmem:[%s1 + $0x118] sm:$0xff]
        %v942 = vld [vmem:[%s1 + $0x120] sm:$0xff]
        %v943 = vld [vmem:[%s1 + $0x128] sm:$0xff]
        %v944 = vld [vmem:[%s1 + $0x130] sm:$0xff]
        %v945 = vld [vmem:[%s1 + $0x138] sm:$0xff]
        %v946 = vld [vmem:[%s1 + $0x140] sm:$0xff]
        %v947 = vld [vmem:[%s1 + $0x148] sm:$0xff]
        %v948 = vld [vmem:[%s1 + $0x150] sm:$0xff]
        %v949 = vld [vmem:[%s1 + $0x158] sm:$0xff]
        %v950 = vld [vmem:[%s1 + $0x160] sm:$0xff]
        %v951 = vld [vmem:[%s1 + $0x168] sm:$0xff]
        %v952 = vld [vmem:[%s1 + $0x170] sm:$0xff]
        %v953 = vld [vmem:[%s1 + $0x178] sm:$0xff]
        %v954 = vld [vmem:[%s1 + $0x180] sm:$0xff]
        %v955 = vld [vmem:[%s1 + $0x188] sm:$0xff]
        %v956 = vld [vmem:[%s1 + $0x190] sm:$0xff]
        %v957 = vld [vmem:[%s1 + $0x198] sm:$0xff]
        %v958 = vld [vmem:[%s1 + $0x1a0] sm:$0xff]
        %v959 = vld [vmem:[%s1 + $0x1a8] sm:$0xff]
        %v960 = vld [vmem:[%s1 + $0x1b0] sm:$0xff]
        %v961 = vld [vmem:[%s1 + $0x1b8] sm:$0xff]
        %v962 = vld [vmem:[%s1 + $0x1c0] sm:$0xff]
        %v963 = vld [vmem:[%s1 + $0x1c8] sm:$0xff]
        %v964 = vld [vmem:[%s1 + $0x1d0] sm:$0xff]
        %v965 = vld [vmem:[%s1 + $0x1d8] sm:$0xff]
        %v966 = vld [vmem:[%s1 + $0x1e0] sm:$0xff]
        %v967 = vld [vmem:[%s1 + $0x1e8] sm:$0xff]
        %v968 = vld [vmem:[%s1 + $0x1f0] sm:$0xff]
        %v969 = vld [vmem:[%s1 + $0x1f8] sm:$0xff]
        %v970 = vld [vmem:[%s1 + $0x200] sm:$0xff]
        %v971 = vld [vmem:[%s1 + $0x208] sm:$0xff]
        %v972 = vld [vmem:[%s1 + $0x210] sm:$0xff]
        %v973 = vld [vmem:[%s1 + $0x218] sm:$0xff]
        %v974 = vld [vmem:[%s1 + $0x220] sm:$0xff]
        %v975 = vld [vmem:[%s1 + $0x228] sm:$0xff]
        %v976 = vld [vmem:[%s1 + $0x230] sm:$0xff]
        %v977 = vld [vmem:[%s1 + $0x238] sm:$0xff]
        %v978 = vld [vmem:[%s1 + $0x240] sm:$0xff]
        %v979 = vld [vmem:[%s1 + $0x248] sm:$0xff]
        %v980 = vld [vmem:[%s1 + $0x250] sm:$0xff]
        %v981 = vld [vmem:[%s1 + $0x258] sm:$0xff]
        %v982 = vld [vmem:[%s1 + $0x260] sm:$0xff]
        %v983 = vld [vmem:[%s1 + $0x268] sm:$0xff]
        %v984 = vld [vmem:[%s1 + $0x270] sm:$0xff]
        %v985 = vld [vmem:[%s1 + $0x278] sm:$0xff]
        %v986 = vld [vmem:[%s1 + $0x280] sm:$0xff]
        %v987 = vld [vmem:[%s1 + $0x288] sm:$0xff]
        %v988 = vld [vmem:[%s1 + $0x290] sm:$0xff]
        %v989 = vld [vmem:[%s1 + $0x298] sm:$0xff]
        %v990 = vld [vmem:[%s1 + $0x2a0] sm:$0xff]
        %v991 = vld [vmem:[%s1 + $0x2a8] sm:$0xff]
        %v992 = vld [vmem:[%s1 + $0x2b0] sm:$0xff]
        %v993 = vld [vmem:[%s1 + $0x2b8] sm:$0xff]
        %v994 = vld [vmem:[%s1 + $0x2c0] sm:$0xff]
        %v995 = vld [vmem:[%s1 + $0x2c8] sm:$0xff]
        %v996 = vld [vmem:[%s1 + $0x2d0] sm:$0xff]
        %v997 = vld [vmem:[%s1 + $0x2d8] sm:$0xff]
        %v998 = vld [vmem:[%s1 + $0x2e0] sm:$0xff]
        %v999 = vld [vmem:[%s1 + $0x2e8] sm:$0xff]
        %v1000 = vld [vmem:[%s1 + $0x2f0] sm:$0xff]
        %v1001 = vld [vmem:[%s1 + $0x2f8] sm:$0xff]
        %v1002 = vld [vmem:[%s1 + $0x300] sm:$0xff]
        %v1003 = vld [vmem:[%s1 + $0x308] sm:$0xff]
        %v1004 = vld [vmem:[%s1 + $0x310] sm:$0xff]
        %v1005 = vld [vmem:[%s1 + $0x318] sm:$0xff]
        %v1006 = vld [vmem:[%s1 + $0x320] sm:$0xff]
        %v1007 = vld [vmem:[%s1 + $0x328] sm:$0xff]
        %v1008 = vld [vmem:[%s1 + $0x330] sm:$0xff]
        %v1009 = vld [vmem:[%s1 + $0x338] sm:$0xff]
        %v1010 = vld [vmem:[%s1 + $0x340] sm:$0xff]
        %v1011 = vld [vmem:[%s1 + $0x348] sm:$0xff]
        %v1012 = vld [vmem:[%s1 + $0x350] sm:$0xff]
        %v1013 = vld [vmem:[%s1 + $0x358] sm:$0xff]
        %v1014 = vld [vmem:[%s1 + $0x360] sm:$0xff]
        %v1015 = vld [vmem:[%s1 + $0x368] sm:$0xff]
        %v1016 = vld [vmem:[%s1 + $0x370] sm:$0xff]
        %v1017 = vld [vmem:[%s1 + $0x378] sm:$0xff]
        %v1018 = vld [vmem:[%s1 + $0x380] sm:$0xff]
        %v1019 = vld [vmem:[%s1 + $0x388] sm:$0xff]
        %v1020 = vld [vmem:[%s1 + $0x390] sm:$0xff]
        %v1021 = vld [vmem:[%s1 + $0x398] sm:$0xff]
        %v1022 = vld [vmem:[%s1 + $0x3a0] sm:$0xff]
        %v1023 = vld [vmem:[%s1 + $0x3a8] sm:$0xff]
        %v1024 = vld [vmem:[%s1 + $0x3b0] sm:$0xff]
        %v1025 = vld [vmem:[%s1 + $0x3b8] sm:$0xff]
        %v1026 = vld [vmem:[%s1 + $0x3c0] sm:$0xff]
        %v1027 = vld [vmem:[%s1 + $0x3c8] sm:$0xff]
        %v1028 = vld [vmem:[%s1 + $0x3d0] sm:$0xff]
        %v1029 = vld [vmem:[%s1 + $0x3d8] sm:$0xff]
        %v1030 = vld [vmem:[%s1 + $0x3e0] sm:$0xff]
        %v1031 = vld [vmem:[%s1 + $0x3e8] sm:$0xff]
        %v1032 = vld [vmem:[%s1 + $0x3f0] sm:$0xff]
        %v1033 = vld [vmem:[%s1 + $0x3f8] sm:$0xff]
        %v1034 = vld [vmem:[%s1 + $0x400] sm:$0xff]
        %v1035 = vld [vmem:[%s1 + $0x408] sm:$0xff]
        %v1036 = vld [vmem:[%s1 + $0x410] sm:$0xff]
        %v1037 = vld [vmem:[%s1 + $0x418] sm:$0xff]
        %v1038 = vld [vmem:[%s1 + $0x420] sm:$0xff]
        %v1039 = vld [vmem:[%s1 + $0x428] sm:$0xff]
        %v1040 = vld [vmem:[%s1 + $0x430] sm:$0xff]
        %v1041 = vld [vmem:[%s1 + $0x438] sm:$0xff]
        %v1042 = vld [vmem:[%s1 + $0x440] sm:$0xff]
        %v1043 = vld [vmem:[%s1 + $0x448] sm:$0xff]
        %v1044 = vld [vmem:[%s1 + $0x450] sm:$0xff]
        %v1045 = vld [vmem:[%s1 + $0x458] sm:$0xff]
        %v1046 = vld [vmem:[%s1 + $0x460] sm:$0xff]
        %v1047 = vld [vmem:[%s1 + $0x468] sm:$0xff]
        %v1048 = vld [vmem:[%s1 + $0x470] sm:$0xff]
        %v1049 = vld [vmem:[%s1 + $0x478] sm:$0xff]
        %v1050 = vld [vmem:[%s2] sm:$0x1]
        %v1052 = vlaneseq
        %v1053 = vshrl.u32 %v1052, 7
        %v1054 = vsub.s32 0, %v1053
        %v1055 = vrot.slane %v1050, %v1054
        %1057 = vmatprep.subr.mxu0 0.0
        %1058 = vmatpush1.msra.mxu0 %v906
        %1059 = vmatprep.subr.mxu0 0.0
        %1060 = vmatpush1.msra.mxu0 %v907
        %1061 = vmatprep.subr.mxu0 0.0
        %1062 = vmatpush1.msra.mxu0 %v908
        %1063 = vmatprep.subr.mxu0 0.0
        %1064 = vmatpush1.msra.mxu0 %v909
        %1065 = vmatprep.subr.mxu0 0.0
        %1066 = vmatpush1.msra.mxu0 %v910
        %1067 = vmatprep.subr.mxu0 0.0
        %1068 = vmatpush1.msra.mxu0 %v911
        %1069 = vmatprep.subr.mxu0 0.0
        %1070 = vmatpush1.msra.mxu0 %v912
        %1071 = vmatprep.subr.mxu0 0.0
        %1072 = vmatpush1.msra.mxu0 %v913
        %1073 = vmatprep.subr.mxu0 0.0
        %1074 = vmatpush1.msra.mxu0 %v914
        %1075 = vmatprep.subr.mxu0 0.0
        %1076 = vmatpush1.msra.mxu0 %v915
        %1077 = vmatprep.subr.mxu0 0.0
        %1078 = vmatpush1.msra.mxu0 %v916
        %1079 = vmatprep.subr.mxu0 0.0
        %1080 = vmatpush1.msra.mxu0 %v917
        %1081 = vmatprep.subr.mxu0 0.0
        %1082 = vmatpush1.msra.mxu0 %v918
        %1083 = vmatprep.subr.mxu0 0.0
        %1084 = vmatpush1.msra.mxu0 %v919
        %1085 = vmatprep.subr.mxu0 0.0
        %1086 = vmatpush1.msra.mxu0 %v920
        %1087 = vmatprep.subr.mxu0 0.0
        %1088 = vmatpush1.msra.mxu0 %v921
        %1089 = vmatprep.subr.mxu0 0.0
        %1090 = vmatpush1.msra.mxu0 %v922
        %1091 = vmatprep.subr.mxu0 0.0
        %1092 = vmatpush1.msra.mxu0 %v923
        %1093 = vmatprep.subr.mxu0 0.0
        %1094 = vmatpush1.msra.mxu0 %v924
        %1095 = vmatprep.subr.mxu0 0.0
        %1096 = vmatpush1.msra.mxu0 %v925
        %1097 = vmatprep.subr.mxu0 0.0
        %1098 = vmatpush1.msra.mxu0 %v926
        %1099 = vmatprep.subr.mxu0 0.0
        %1100 = vmatpush1.msra.mxu0 %v927
        %1101 = vmatprep.subr.mxu0 0.0
        %1102 = vmatpush1.msra.mxu0 %v928
        %1103 = vmatprep.subr.mxu0 0.0
        %1104 = vmatpush1.msra.mxu0 %v929
        %1105 = vmatprep.subr.mxu0 0.0
        %1106 = vmatpush1.msra.mxu0 %v930
        %1107 = vmatprep.subr.mxu0 0.0
        %1108 = vmatpush1.msra.mxu0 %v931
        %1109 = vmatprep.subr.mxu0 0.0
        %1110 = vmatpush1.msra.mxu0 %v932
        %1111 = vmatprep.subr.mxu0 0.0
        %1112 = vmatpush1.msra.mxu0 %v933
        %1113 = vmatprep.subr.mxu0 0.0
        %1114 = vmatpush1.msra.mxu0 %v934
        %1115 = vmatprep.subr.mxu0 0.0
        %1116 = vmatpush1.msra.mxu0 %v935
        %1117 = vmatprep.subr.mxu0 0.0
        %1118 = vmatpush1.msra.mxu0 %v936
        %1119 = vmatprep.subr.mxu0 0.0
        %1120 = vmatpush1.msra.mxu0 %v937
        %1121 = vmatprep.mubr.f32.mxu0 %v705
        %1122 = vmatmul.mubr.f32.gmra.mrb[0].mxu0 %v624
        %v1123 = vpop.f32.mrb[0].mxu0
        %v1124 = vadd.f32 %v1055, %v1123
        %v1125 = vpop.f32.mrb[0].mxu0
        %1126 = vmatprep.mubr.f32.mxu0 %v707
        %1127 = vmatmul.mubr.f32.gmra.mrb[0].mxu0 %v625
        %v1128 = vpop.f32.mrb[0].mxu0
        %v1129 = vadd.f32 %v1055, %v1128
        %v1130 = vpop.f32.mrb[0].mxu0
        %1131 = vmatprep.mubr.f32.mxu0 %v710
        %1132 = vmatmul.mubr.f32.gmra.mrb[0].mxu0 %v627
        %v1133 = vpop.f32.mrb[0].mxu0
        %v1134 = vadd.f32 %v1055, %v1133
        %v1135 = vpop.f32.mrb[0].mxu0
        %1136 = vmatprep.mubr.f32.mxu0 %v712
        %1137 = vmatmul.mubr.f32.gmra.mrb[0].mxu0 %v628
        %v1138 = vpop.f32.mrb[0].mxu0
        %v1139 = vadd.f32 %v1055, %v1138
        %v1140 = vpop.f32.mrb[0].mxu0
        %1141 = vmatprep.mubr.f32.mxu0 %v715
        %1142 = vmatmul.mubr.f32.gmra.mrb[0].mxu0 %v630
        %v1143 = vpop.f32.mrb[0].mxu0
        %v1144 = vadd.f32 %v1055, %v1143
        %v1145 = vpop.f32.mrb[0].mxu0
        %1146 = vmatprep.mubr.f32.mxu0 %v717
        %1147 = vmatmul.mubr.f32.gmra.mrb[0].mxu0 %v631
        %v1148 = vpop.f32.mrb[0].mxu0
        %v1149 = vadd.f32 %v1055, %v1148
        %v1150 = vpop.f32.mrb[0].mxu0
        %1151 = vmatprep.mubr.f32.mxu0 %v720
        %1152 = vmatmul.mubr.f32.gmra.mrb[0].mxu0 %v633
        %v1153 = vpop.f32.mrb[0].mxu0
        %v1154 = vadd.f32 %v1055, %v1153
        %v1155 = vpop.f32.mrb[0].mxu0
        %1156 = vmatprep.mubr.f32.mxu0 %v722
        %1157 = vmatmul.mubr.f32.gmra.mrb[0].mxu0 %v634
        %v1158 = vpop.f32.mrb[0].mxu0
        %v1159 = vadd.f32 %v1055, %v1158
        %v1160 = vpop.f32.mrb[0].mxu0
        %1161 = vmatprep.mubr.f32.mxu0 %v725
        %1162 = vmatmul.mubr.f32.gmra.mrb[0].mxu0 %v636
        %v1163 = vpop.f32.mrb[0].mxu0
        %v1164 = vadd.f32 %v1055, %v1163
        %v1165 = vpop.f32.mrb[0].mxu0
        %1166 = vmatprep.mubr.f32.mxu0 %v727
        %1167 = vmatmul.mubr.f32.gmra.mrb[0].mxu0 %v637
        %v1168 = vpop.f32.mrb[0].mxu0
        %v1169 = vadd.f32 %v1055, %v1168
        %v1170 = vpop.f32.mrb[0].mxu0
        %1171 = vmatprep.mubr.f32.mxu0 %v730
        %1172 = vmatmul.mubr.f32.gmra.mrb[0].mxu0 %v639
        %v1173 = vpop.f32.mrb[0].mxu0
        %v1174 = vadd.f32 %v1055, %v1173
        %v1175 = vpop.f32.mrb[0].mxu0
        %1176 = vmatprep.mubr.f32.mxu0 %v732
        %1177 = vmatmul.mubr.f32.gmra.mrb[0].mxu0 %v640
        %v1178 = vpop.f32.mrb[0].mxu0
        %v1179 = vadd.f32 %v1055, %v1178
        %v1180 = vpop.f32.mrb[0].mxu0
        %1181 = vmatprep.mubr.f32.mxu0 %v735
        %1182 = vmatmul.mubr.f32.gmra.mrb[0].mxu0 %v642
        %v1183 = vpop.f32.mrb[0].mxu0
        %v1184 = vadd.f32 %v1055, %v1183
        %v1185 = vpop.f32.mrb[0].mxu0
        %1186 = vmatprep.mubr.f32.mxu0 %v737
        %1187 = vmatmul.mubr.f32.gmra.mrb[0].mxu0 %v643
        %v1188 = vpop.f32.mrb[0].mxu0
        %v1189 = vadd.f32 %v1055, %v1188
        %v1190 = vpop.f32.mrb[0].mxu0
        %1191 = vmatprep.mubr.f32.mxu0 %v740
        %1192 = vmatmul.mubr.f32.gmra.mrb[0].mxu0 %v645
        %v1193 = vpop.f32.mrb[0].mxu0
        %v1194 = vadd.f32 %v1055, %v1193
        %v1195 = vpop.f32.mrb[0].mxu0
        %1196 = vmatprep.mubr.f32.mxu0 %v742
        %1197 = vmatmul.mubr.f32.gmra.mrb[0].mxu0 %v646
        %v1198 = vpop.f32.mrb[0].mxu0
        %v1199 = vadd.f32 %v1055, %v1198
        %v1200 = vpop.f32.mrb[0].mxu0
        %1201 = vmatprep.mubr.f32.mxu0 %v745
        %1202 = vmatmul.mubr.f32.gmra.mrb[0].mxu0 %v648
        %v1203 = vpop.f32.mrb[0].mxu0
        %v1204 = vadd.f32 %v1055, %v1203
        %v1205 = vpop.f32.mrb[0].mxu0
        %1206 = vmatprep.mubr.f32.mxu0 %v747
        %1207 = vmatmul.mubr.f32.gmra.mrb[0].mxu0 %v649
        %v1208 = vpop.f32.mrb[0].mxu0
        %v1209 = vadd.f32 %v1055, %v1208
        %v1210 = vpop.f32.mrb[0].mxu0
        %1211 = vmatprep.mubr.f32.mxu0 %v750
        %1212 = vmatmul.mubr.f32.gmra.mrb[0].mxu0 %v651
        %v1213 = vpop.f32.mrb[0].mxu0
        %v1214 = vadd.f32 %v1055, %v1213
        %v1215 = vpop.f32.mrb[0].mxu0
        %1216 = vmatprep.mubr.f32.mxu0 %v752
        %1217 = vmatmul.mubr.f32.gmra.mrb[0].mxu0 %v652
        %v1218 = vpop.f32.mrb[0].mxu0
        %v1219 = vadd.f32 %v1055, %v1218
        %v1220 = vpop.f32.mrb[0].mxu0
        %1221 = vmatprep.mubr.f32.mxu0 %v755
        %1222 = vmatmul.mubr.f32.gmra.mrb[0].mxu0 %v654
        %v1223 = vpop.f32.mrb[0].mxu0
        %v1224 = vadd.f32 %v1055, %v1223
        %v1225 = vpop.f32.mrb[0].mxu0
        %1226 = vmatprep.mubr.f32.mxu0 %v757
        %1227 = vmatmul.mubr.f32.gmra.mrb[0].mxu0 %v655
        %v1228 = vpop.f32.mrb[0].mxu0
        %v1229 = vadd.f32 %v1055, %v1228
        %v1230 = vpop.f32.mrb[0].mxu0
        %1231 = vmatprep.mubr.f32.mxu0 %v760
        %1232 = vmatmul.mubr.f32.gmra.mrb[0].mxu0 %v657
        %v1233 = vpop.f32.mrb[0].mxu0
        %v1234 = vadd.f32 %v1055, %v1233
        %v1235 = vpop.f32.mrb[0].mxu0
        %1236 = vmatprep.mubr.f32.mxu0 %v762
        %1237 = vmatmul.mubr.f32.gmra.mrb[0].mxu0 %v658
        %v1238 = vpop.f32.mrb[0].mxu0
        %v1239 = vadd.f32 %v1055, %v1238
        %v1240 = vpop.f32.mrb[0].mxu0
        %1241 = vdwg.mxu0
        %1242 = vmatprep.subr.mxu0 0.0
        %1243 = vmatpush1.msra.mxu0 %v938
        %1244 = vmatprep.subr.mxu0 0.0
        %1245 = vmatpush1.msra.mxu0 %v939
        %1246 = vmatprep.subr.mxu0 0.0
        %1247 = vmatpush1.msra.mxu0 %v940
        %1248 = vmatprep.subr.mxu0 0.0
        %1249 = vmatpush1.msra.mxu0 %v941
        %1250 = vmatprep.subr.mxu0 0.0
        %1251 = vmatpush1.msra.mxu0 %v942
        %1252 = vmatprep.subr.mxu0 0.0
        %1253 = vmatpush1.msra.mxu0 %v943
        %1254 = vmatprep.subr.mxu0 0.0
        %1255 = vmatpush1.msra.mxu0 %v944
        %1256 = vmatprep.subr.mxu0 0.0
        %1257 = vmatpush1.msra.mxu0 %v945
        %1258 = vmatprep.subr.mxu0 0.0
        %1259 = vmatpush1.msra.mxu0 %v946
        %1260 = vmatprep.subr.mxu0 0.0
        %1261 = vmatpush1.msra.mxu0 %v947
        %1262 = vmatprep.subr.mxu0 0.0
        %1263 = vmatpush1.msra.mxu0 %v948
        %1264 = vmatprep.subr.mxu0 0.0
        %1265 = vmatpush1.msra.mxu0 %v949
        %1266 = vmatprep.subr.mxu0 0.0
        %1267 = vmatpush1.msra.mxu0 %v950
        %1268 = vmatprep.subr.mxu0 0.0
        %1269 = vmatpush1.msra.mxu0 %v951
        %1270 = vmatprep.subr.mxu0 0.0
        %1271 = vmatpush1.msra.mxu0 %v952
        %1272 = vmatprep.subr.mxu0 0.0
        %1273 = vmatpush1.msra.mxu0 %v953
        %1274 = vmatprep.subr.mxu0 0.0
        %1275 = vmatpush1.msra.mxu0 %v954
        %1276 = vmatprep.subr.mxu0 0.0
        %1277 = vmatpush1.msra.mxu0 %v955
        %1278 = vmatprep.subr.mxu0 0.0
        %1279 = vmatpush1.msra.mxu0 %v956
        %1280 = vmatprep.subr.mxu0 0.0
        %1281 = vmatpush1.msra.mxu0 %v957
        %1282 = vmatprep.subr.mxu0 0.0
        %1283 = vmatpush1.msra.mxu0 %v958
        %1284 = vmatprep.subr.mxu0 0.0
        %1285 = vmatpush1.msra.mxu0 %v959
        %1286 = vmatprep.subr.mxu0 0.0
        %1287 = vmatpush1.msra.mxu0 %v960
        %1288 = vmatprep.subr.mxu0 0.0
        %1289 = vmatpush1.msra.mxu0 %v961
        %1290 = vmatprep.subr.mxu0 0.0
        %1291 = vmatpush1.msra.mxu0 %v962
        %1292 = vmatprep.subr.mxu0 0.0
        %1293 = vmatpush1.msra.mxu0 %v963
        %1294 = vmatprep.subr.mxu0 0.0
        %1295 = vmatpush1.msra.mxu0 %v964
        %1296 = vmatprep.subr.mxu0 0.0
        %1297 = vmatpush1.msra.mxu0 %v965
        %1298 = vmatprep.subr.mxu0 0.0
        %1299 = vmatpush1.msra.mxu0 %v966
        %1300 = vmatprep.subr.mxu0 0.0
        %1301 = vmatpush1.msra.mxu0 %v967
        %1302 = vmatprep.subr.mxu0 0.0
        %1303 = vmatpush1.msra.mxu0 %v968
        %1304 = vmatprep.subr.mxu0 0.0
        %1305 = vmatpush1.msra.mxu0 %v969
        %1306 = vmatprep.mubr.f32.mxu0 %v627
        %1307 = vmatmul.mubr.f32.gmra.mrb[0].mxu0 %v790
        %v1308 = vpop.f32.mrb[0].mxu0
        %v1309 = vadd.f32 %v1124, %v1308
        %v1310 = vpop.f32.mrb[0].mxu0
        %1311 = vmatprep.mubr.f32.mxu0 %v628
        %1312 = vmatmul.mubr.f32.gmra.mrb[0].mxu0 %v792
        %v1313 = vpop.f32.mrb[0].mxu0
        %v1314 = vadd.f32 %v1129, %v1313
        %v1315 = vpop.f32.mrb[0].mxu0
        %1316 = vmatprep.mubr.f32.mxu0 %v630
        %1317 = vmatmul.mubr.f32.gmra.mrb[0].mxu0 %v795
        %v1318 = vpop.f32.mrb[0].mxu0
        %v1319 = vadd.f32 %v1134, %v1318
        %v1320 = vpop.f32.mrb[0].mxu0
        %1321 = vmatprep.mubr.f32.mxu0 %v631
        %1322 = vmatmul.mubr.f32.gmra.mrb[0].mxu0 %v797
        %v1323 = vpop.f32.mrb[0].mxu0
        %v1324 = vadd.f32 %v1139, %v1323
        %v1325 = vpop.f32.mrb[0].mxu0
        %1326 = vmatprep.mubr.f32.mxu0 %v633
        %1327 = vmatmul.mubr.f32.gmra.mrb[0].mxu0 %v800
        %v1328 = vpop.f32.mrb[0].mxu0
        %v1329 = vadd.f32 %v1144, %v1328
        %v1330 = vpop.f32.mrb[0].mxu0
        %1331 = vmatprep.mubr.f32.mxu0 %v634
        %1332 = vmatmul.mubr.f32.gmra.mrb[0].mxu0 %v802
        %v1333 = vpop.f32.mrb[0].mxu0
        %v1334 = vadd.f32 %v1149, %v1333
        %v1335 = vpop.f32.mrb[0].mxu0
        %1336 = vmatprep.mubr.f32.mxu0 %v636
        %1337 = vmatmul.mubr.f32.gmra.mrb[0].mxu0 %v805
        %v1338 = vpop.f32.mrb[0].mxu0
        %v1339 = vadd.f32 %v1154, %v1338
        %v1340 = vpop.f32.mrb[0].mxu0
        %1341 = vmatprep.mubr.f32.mxu0 %v637
        %1342 = vmatmul.mubr.f32.gmra.mrb[0].mxu0 %v807
        %v1343 = vpop.f32.mrb[0].mxu0
        %v1344 = vadd.f32 %v1159, %v1343
        %v1345 = vpop.f32.mrb[0].mxu0
        %1346 = vmatprep.mubr.f32.mxu0 %v639
        %1347 = vmatmul.mubr.f32.gmra.mrb[0].mxu0 %v810
        %v1348 = vpop.f32.mrb[0].mxu0
        %v1349 = vadd.f32 %v1164, %v1348
        %v1350 = vpop.f32.mrb[0].mxu0
        %1351 = vmatprep.mubr.f32.mxu0 %v640
        %1352 = vmatmul.mubr.f32.gmra.mrb[0].mxu0 %v812
        %v1353 = vpop.f32.mrb[0].mxu0
        %v1354 = vadd.f32 %v1169, %v1353
        %v1355 = vpop.f32.mrb[0].mxu0
        %1356 = vmatprep.mubr.f32.mxu0 %v642
        %1357 = vmatmul.mubr.f32.gmra.mrb[0].mxu0 %v815
        %v1358 = vpop.f32.mrb[0].mxu0
        %v1359 = vadd.f32 %v1174, %v1358
        %v1360 = vpop.f32.mrb[0].mxu0
        %1361 = vmatprep.mubr.f32.mxu0 %v643
        %1362 = vmatmul.mubr.f32.gmra.mrb[0].mxu0 %v817
        %v1363 = vpop.f32.mrb[0].mxu0
        %v1364 = vadd.f32 %v1179, %v1363
        %v1365 = vpop.f32.mrb[0].mxu0
        %1366 = vmatprep.mubr.f32.mxu0 %v645
        %1367 = vmatmul.mubr.f32.gmra.mrb[0].mxu0 %v820
        %v1368 = vpop.f32.mrb[0].mxu0
        %v1369 = vadd.f32 %v1184, %v1368
        %v1370 = vpop.f32.mrb[0].mxu0
        %1371 = vmatprep.mubr.f32.mxu0 %v646
        %1372 = vmatmul.mubr.f32.gmra.mrb[0].mxu0 %v822
        %v1373 = vpop.f32.mrb[0].mxu0
        %v1374 = vadd.f32 %v1189, %v1373
        %v1375 = vpop.f32.mrb[0].mxu0
        %1376 = vmatprep.mubr.f32.mxu0 %v648
        %1377 = vmatmul.mubr.f32.gmra.mrb[0].mxu0 %v825
        %v1378 = vpop.f32.mrb[0].mxu0
        %v1379 = vadd.f32 %v1194, %v1378
        %v1380 = vpop.f32.mrb[0].mxu0
        %1381 = vmatprep.mubr.f32.mxu0 %v649
        %1382 = vmatmul.mubr.f32.gmra.mrb[0].mxu0 %v827
        %v1383 = vpop.f32.mrb[0].mxu0
        %v1384 = vadd.f32 %v1199, %v1383
        %v1385 = vpop.f32.mrb[0].mxu0
        %1386 = vmatprep.mubr.f32.mxu0 %v651
        %1387 = vmatmul.mubr.f32.gmra.mrb[0].mxu0 %v830
        %v1388 = vpop.f32.mrb[0].mxu0
        %v1389 = vadd.f32 %v1204, %v1388
        %v1390 = vpop.f32.mrb[0].mxu0
        %1391 = vmatprep.mubr.f32.mxu0 %v652
        %1392 = vmatmul.mubr.f32.gmra.mrb[0].mxu0 %v832
        %v1393 = vpop.f32.mrb[0].mxu0
        %v1394 = vadd.f32 %v1209, %v1393
        %v1395 = vpop.f32.mrb[0].mxu0
        %1396 = vmatprep.mubr.f32.mxu0 %v654
        %1397 = vmatmul.mubr.f32.gmra.mrb[0].mxu0 %v835
        %v1398 = vpop.f32.mrb[0].mxu0
        %v1399 = vadd.f32 %v1214, %v1398
        %v1400 = vpop.f32.mrb[0].mxu0
        %1401 = vmatprep.mubr.f32.mxu0 %v655
        %1402 = vmatmul.mubr.f32.gmra.mrb[0].mxu0 %v837
        %v1403 = vpop.f32.mrb[0].mxu0
        %v1404 = vadd.f32 %v1219, %v1403
        %v1405 = vpop.f32.mrb[0].mxu0
        %1406 = vmatprep.mubr.f32.mxu0 %v657
        %1407 = vmatmul.mubr.f32.gmra.mrb[0].mxu0 %v840
        %v1408 = vpop.f32.mrb[0].mxu0
        %v1409 = vadd.f32 %v1224, %v1408
        %v1410 = vpop.f32.mrb[0].mxu0
        %1411 = vmatprep.mubr.f32.mxu0 %v658
        %1412 = vmatmul.mubr.f32.gmra.mrb[0].mxu0 %v842
        %v1413 = vpop.f32.mrb[0].mxu0
        %v1414 = vadd.f32 %v1229, %v1413
        %v1415 = vpop.f32.mrb[0].mxu0
        %1416 = vmatprep.mubr.f32.mxu0 %v660
        %1417 = vmatmul.mubr.f32.gmra.mrb[0].mxu0 %v845
        %v1418 = vpop.f32.mrb[0].mxu0
        %v1419 = vadd.f32 %v1234, %v1418
        %v1420 = vpop.f32.mrb[0].mxu0
        %1421 = vmatprep.mubr.f32.mxu0 %v661
        %1422 = vmatmul.mubr.f32.gmra.mrb[0].mxu0 %v847
        %v1423 = vpop.f32.mrb[0].mxu0
        %v1424 = vadd.f32 %v1239, %v1423
        %v1425 = vpop.f32.mrb[0].mxu0
        %1426 = vdwg.mxu0
        %1427 = vmatprep.subr.mxu0 0.0
        %1428 = vmatpush1.msra.mxu0 %v970
        %1429 = vmatprep.subr.mxu0 0.0
        %1430 = vmatpush1.msra.mxu0 %v971
        %1431 = vmatprep.subr.mxu0 0.0
        %1432 = vmatpush1.msra.mxu0 %v972
        %1433 = vmatprep.subr.mxu0 0.0
        %1434 = vmatpush1.msra.mxu0 %v973
        %1435 = vmatprep.subr.mxu0 0.0
        %1436 = vmatpush1.msra.mxu0 %v974
        %1437 = vmatprep.subr.mxu0 0.0
        %1438 = vmatpush1.msra.mxu0 %v975
        %1439 = vmatprep.subr.mxu0 0.0
        %1440 = vmatpush1.msra.mxu0 %v976
        %1441 = vmatprep.subr.mxu0 0.0
        %1442 = vmatpush1.msra.mxu0 %v977
        %1443 = vmatprep.subr.mxu0 0.0
        %1444 = vmatpush1.msra.mxu0 %v978
        %1445 = vmatprep.subr.mxu0 0.0
        %1446 = vmatpush1.msra.mxu0 %v979
        %1447 = vmatprep.subr.mxu0 0.0
        %1448 = vmatpush1.msra.mxu0 %v980
        %1449 = vmatprep.subr.mxu0 0.0
        %1450 = vmatpush1.msra.mxu0 %v981
        %1451 = vmatprep.subr.mxu0 0.0
        %1452 = vmatpush1.msra.mxu0 %v982
        %1453 = vmatprep.subr.mxu0 0.0
        %1454 = vmatpush1.msra.mxu0 %v983
        %1455 = vmatprep.subr.mxu0 0.0
        %1456 = vmatpush1.msra.mxu0 %v984
        %1457 = vmatprep.subr.mxu0 0.0
        %1458 = vmatpush1.msra.mxu0 %v985
        %1459 = vmatprep.subr.mxu0 0.0
        %1460 = vmatpush1.msra.mxu0 %v986
        %1461 = vmatprep.subr.mxu0 0.0
        %1462 = vmatpush1.msra.mxu0 %v987
        %1463 = vmatprep.subr.mxu0 0.0
        %1464 = vmatpush1.msra.mxu0 %v988
        %1465 = vmatprep.subr.mxu0 0.0
        %1466 = vmatpush1.msra.mxu0 %v989
        %1467 = vmatprep.subr.mxu0 0.0
        %1468 = vmatpush1.msra.mxu0 %v990
        %1469 = vmatprep.subr.mxu0 0.0
        %1470 = vmatpush1.msra.mxu0 %v991
        %1471 = vmatprep.subr.mxu0 0.0
        %1472 = vmatpush1.msra.mxu0 %v992
        %1473 = vmatprep.subr.mxu0 0.0
        %1474 = vmatpush1.msra.mxu0 %v993
        %1475 = vmatprep.subr.mxu0 0.0
        %1476 = vmatpush1.msra.mxu0 %v994
        %1477 = vmatprep.subr.mxu0 0.0
        %1478 = vmatpush1.msra.mxu0 %v995
        %1479 = vmatprep.subr.mxu0 0.0
        %1480 = vmatpush1.msra.mxu0 %v996
        %1481 = vmatprep.subr.mxu0 0.0
        %1482 = vmatpush1.msra.mxu0 %v997
        %1483 = vmatprep.subr.mxu0 0.0
        %1484 = vmatpush1.msra.mxu0 %v998
        %1485 = vmatprep.subr.mxu0 0.0
        %1486 = vmatpush1.msra.mxu0 %v999
        %1487 = vmatprep.subr.mxu0 0.0
        %1488 = vmatpush1.msra.mxu0 %v1000
        %1489 = vmatprep.subr.mxu0 0.0
        %1490 = vmatpush1.msra.mxu0 %v1001
        %1491 = vmatprep.mubr.f32.mxu0 %v795
        %1492 = vmatmul.mubr.f32.gmra.mrb[0].mxu0 %v710
        %v1493 = vpop.f32.mrb[0].mxu0
        %v1494 = vadd.f32 %v1309, %v1493
        %v1495 = vpop.f32.mrb[0].mxu0
        %1496 = vmatprep.mubr.f32.mxu0 %v797
        %1497 = vmatmul.mubr.f32.gmra.mrb[0].mxu0 %v712
        %v1498 = vpop.f32.mrb[0].mxu0
        %v1499 = vadd.f32 %v1314, %v1498
        %v1500 = vpop.f32.mrb[0].mxu0
        %1501 = vmatprep.mubr.f32.mxu0 %v800
        %1502 = vmatmul.mubr.f32.gmra.mrb[0].mxu0 %v715
        %v1503 = vpop.f32.mrb[0].mxu0
        %v1504 = vadd.f32 %v1319, %v1503
        %v1505 = vpop.f32.mrb[0].mxu0
        %1506 = vmatprep.mubr.f32.mxu0 %v802
        %1507 = vmatmul.mubr.f32.gmra.mrb[0].mxu0 %v717
        %v1508 = vpop.f32.mrb[0].mxu0
        %v1509 = vadd.f32 %v1324, %v1508
        %v1510 = vpop.f32.mrb[0].mxu0
        %1511 = vmatprep.mubr.f32.mxu0 %v805
        %1512 = vmatmul.mubr.f32.gmra.mrb[0].mxu0 %v720
        %v1513 = vpop.f32.mrb[0].mxu0
        %v1514 = vadd.f32 %v1329, %v1513
        %v1515 = vpop.f32.mrb[0].mxu0
        %1516 = vmatprep.mubr.f32.mxu0 %v807
        %1517 = vmatmul.mubr.f32.gmra.mrb[0].mxu0 %v722
        %v1518 = vpop.f32.mrb[0].mxu0
        %v1519 = vadd.f32 %v1334, %v1518
        %v1520 = vpop.f32.mrb[0].mxu0
        %1521 = vmatprep.mubr.f32.mxu0 %v810
        %1522 = vmatmul.mubr.f32.gmra.mrb[0].mxu0 %v725
        %v1523 = vpop.f32.mrb[0].mxu0
        %v1524 = vadd.f32 %v1339, %v1523
        %v1525 = vpop.f32.mrb[0].mxu0
        %1526 = vmatprep.mubr.f32.mxu0 %v812
        %1527 = vmatmul.mubr.f32.gmra.mrb[0].mxu0 %v727
        %v1528 = vpop.f32.mrb[0].mxu0
        %v1529 = vadd.f32 %v1344, %v1528
        %v1530 = vpop.f32.mrb[0].mxu0
        %1531 = vmatprep.mubr.f32.mxu0 %v815
        %1532 = vmatmul.mubr.f32.gmra.mrb[0].mxu0 %v730
        %v1533 = vpop.f32.mrb[0].mxu0
        %v1534 = vadd.f32 %v1349, %v1533
        %v1535 = vpop.f32.mrb[0].mxu0
        %1536 = vmatprep.mubr.f32.mxu0 %v817
        %1537 = vmatmul.mubr.f32.gmra.mrb[0].mxu0 %v732
        %v1538 = vpop.f32.mrb[0].mxu0
        %v1539 = vadd.f32 %v1354, %v1538
        %v1540 = vpop.f32.mrb[0].mxu0
        %1541 = vmatprep.mubr.f32.mxu0 %v820
        %1542 = vmatmul.mubr.f32.gmra.mrb[0].mxu0 %v735
        %v1543 = vpop.f32.mrb[0].mxu0
        %v1544 = vadd.f32 %v1359, %v1543
        %v1545 = vpop.f32.mrb[0].mxu0
        %1546 = vmatprep.mubr.f32.mxu0 %v822
        %1547 = vmatmul.mubr.f32.gmra.mrb[0].mxu0 %v737
        %v1548 = vpop.f32.mrb[0].mxu0
        %v1549 = vadd.f32 %v1364, %v1548
        %v1550 = vpop.f32.mrb[0].mxu0
        %1551 = vmatprep.mubr.f32.mxu0 %v825
        %1552 = vmatmul.mubr.f32.gmra.mrb[0].mxu0 %v740
        %v1553 = vpop.f32.mrb[0].mxu0
        %v1554 = vadd.f32 %v1369, %v1553
        %v1555 = vpop.f32.mrb[0].mxu0
        %1556 = vmatprep.mubr.f32.mxu0 %v827
        %1557 = vmatmul.mubr.f32.gmra.mrb[0].mxu0 %v742
        %v1558 = vpop.f32.mrb[0].mxu0
        %v1559 = vadd.f32 %v1374, %v1558
        %v1560 = vpop.f32.mrb[0].mxu0
        %1561 = vmatprep.mubr.f32.mxu0 %v830
        %1562 = vmatmul.mubr.f32.gmra.mrb[0].mxu0 %v745
        %v1563 = vpop.f32.mrb[0].mxu0
        %v1564 = vadd.f32 %v1379, %v1563
        %v1565 = vpop.f32.mrb[0].mxu0
        %1566 = vmatprep.mubr.f32.mxu0 %v832
        %1567 = vmatmul.mubr.f32.gmra.mrb[0].mxu0 %v747
        %v1568 = vpop.f32.mrb[0].mxu0
        %v1569 = vadd.f32 %v1384, %v1568
        %v1570 = vpop.f32.mrb[0].mxu0
        %1571 = vmatprep.mubr.f32.mxu0 %v835
        %1572 = vmatmul.mubr.f32.gmra.mrb[0].mxu0 %v750
        %v1573 = vpop.f32.mrb[0].mxu0
        %v1574 = vadd.f32 %v1389, %v1573
        %v1575 = vpop.f32.mrb[0].mxu0
        %1576 = vmatprep.mubr.f32.mxu0 %v837
        %1577 = vmatmul.mubr.f32.gmra.mrb[0].mxu0 %v752
        %v1578 = vpop.f32.mrb[0].mxu0
        %v1579 = vadd.f32 %v1394, %v1578
        %v1580 = vpop.f32.mrb[0].mxu0
        %1581 = vmatprep.mubr.f32.mxu0 %v840
        %1582 = vmatmul.mubr.f32.gmra.mrb[0].mxu0 %v755
        %v1583 = vpop.f32.mrb[0].mxu0
        %v1584 = vadd.f32 %v1399, %v1583
        %v1585 = vpop.f32.mrb[0].mxu0
        %1586 = vmatprep.mubr.f32.mxu0 %v842
        %1587 = vmatmul.mubr.f32.gmra.mrb[0].mxu0 %v757
        %v1588 = vpop.f32.mrb[0].mxu0
        %v1589 = vadd.f32 %v1404, %v1588
        %v1590 = vpop.f32.mrb[0].mxu0
        %1591 = vmatprep.mubr.f32.mxu0 %v845
        %1592 = vmatmul.mubr.f32.gmra.mrb[0].mxu0 %v760
        %v1593 = vpop.f32.mrb[0].mxu0
        %v1594 = vadd.f32 %v1409, %v1593
        %v1595 = vpop.f32.mrb[0].mxu0
        %1596 = vmatprep.mubr.f32.mxu0 %v847
        %1597 = vmatmul.mubr.f32.gmra.mrb[0].mxu0 %v762
        %v1598 = vpop.f32.mrb[0].mxu0
        %v1599 = vadd.f32 %v1414, %v1598
        %v1600 = vpop.f32.mrb[0].mxu0
        %1601 = vmatprep.mubr.f32.mxu0 %v884
        %1602 = vmatmul.mubr.f32.gmra.mrb[0].mxu0 %v877
        %v1603 = vpop.f32.mrb[0].mxu0
        %v1604 = vadd.f32 %v1419, %v1603
        %v1605 = vpop.f32.mrb[0].mxu0
        %1606 = vmatprep.mubr.f32.mxu0 %v886
        %1607 = vmatmul.mubr.f32.gmra.mrb[0].mxu0 %v879
        %v1608 = vpop.f32.mrb[0].mxu0
        %v1609 = vadd.f32 %v1424, %v1608
        %v1610 = vpop.f32.mrb[0].mxu0
        %1611 = vdwg.mxu0
        %1612 = vmatprep.subr.mxu0 0.0
        %1613 = vmatpush1.msra.mxu0 %v1002
        %1614 = vmatprep.subr.mxu0 0.0
        %1615 = vmatpush1.msra.mxu0 %v1003
        %1616 = vmatprep.subr.mxu0 0.0
        %1617 = vmatpush1.msra.mxu0 %v1004
        %1618 = vmatprep.subr.mxu0 0.0
        %1619 = vmatpush1.msra.mxu0 %v1005
        %1620 = vmatprep.subr.mxu0 0.0
        %1621 = vmatpush1.msra.mxu0 %v1006
        %1622 = vmatprep.subr.mxu0 0.0
        %1623 = vmatpush1.msra.mxu0 %v1007
        %1624 = vmatprep.subr.mxu0 0.0
        %1625 = vmatpush1.msra.mxu0 %v1008
        %1626 = vmatprep.subr.mxu0 0.0
        %1627 = vmatpush1.msra.mxu0 %v1009
        %1628 = vmatprep.subr.mxu0 0.0
        %1629 = vmatpush1.msra.mxu0 %v1010
        %1630 = vmatprep.subr.mxu0 0.0
        %1631 = vmatpush1.msra.mxu0 %v1011
        %1632 = vmatprep.subr.mxu0 0.0
        %1633 = vmatpush1.msra.mxu0 %v1012
        %1634 = vmatprep.subr.mxu0 0.0
        %1635 = vmatpush1.msra.mxu0 %v1013
        %1636 = vmatprep.subr.mxu0 0.0
        %1637 = vmatpush1.msra.mxu0 %v1014
        %1638 = vmatprep.subr.mxu0 0.0
        %1639 = vmatpush1.msra.mxu0 %v1015
        %1640 = vmatprep.subr.mxu0 0.0
        %1641 = vmatpush1.msra.mxu0 %v1016
        %1642 = vmatprep.subr.mxu0 0.0
        %1643 = vmatpush1.msra.mxu0 %v1017
        %1644 = vmatprep.subr.mxu0 0.0
        %1645 = vmatpush1.msra.mxu0 %v1018
        %1646 = vmatprep.subr.mxu0 0.0
        %1647 = vmatpush1.msra.mxu0 %v1019
        %1648 = vmatprep.subr.mxu0 0.0
        %1649 = vmatpush1.msra.mxu0 %v1020
        %1650 = vmatprep.subr.mxu0 0.0
        %1651 = vmatpush1.msra.mxu0 %v1021
        %1652 = vmatprep.subr.mxu0 0.0
        %1653 = vmatpush1.msra.mxu0 %v1022
        %1654 = vmatprep.subr.mxu0 0.0
        %1655 = vmatpush1.msra.mxu0 %v1023
        %1656 = vmatprep.subr.mxu0 0.0
        %1657 = vmatpush1.msra.mxu0 %v1024
        %1658 = vmatprep.subr.mxu0 0.0
        %1659 = vmatpush1.msra.mxu0 %v1025
        %1660 = vmatprep.subr.mxu0 0.0
        %1661 = vmatpush1.msra.mxu0 %v1026
        %1662 = vmatprep.subr.mxu0 0.0
        %1663 = vmatpush1.msra.mxu0 %v1027
        %1664 = vmatprep.subr.mxu0 0.0
        %1665 = vmatpush1.msra.mxu0 %v1028
        %1666 = vmatprep.subr.mxu0 0.0
        %1667 = vmatpush1.msra.mxu0 %v1029
        %1668 = vmatprep.subr.mxu0 0.0
        %1669 = vmatpush1.msra.mxu0 %v1030
        %1670 = vmatprep.subr.mxu0 0.0
        %1671 = vmatpush1.msra.mxu0 %v1031
        %1672 = vmatprep.subr.mxu0 0.0
        %1673 = vmatpush1.msra.mxu0 %v1032
        %1674 = vmatprep.subr.mxu0 0.0
        %1675 = vmatpush1.msra.mxu0 %v1033
        %1676 = vmatprep.mubr.f32.mxu0 %v715
        %1677 = vmatmul.mubr.f32.gmra.mrb[0].mxu0 %v630
        %v1678 = vpop.f32.mrb[0].mxu0
        %v1679 = vadd.f32 %v1494, %v1678
        %v1680 = vpop.f32.mrb[0].mxu0
        %1681 = vmatprep.mubr.f32.mxu0 %v717
        %1682 = vmatmul.mubr.f32.gmra.mrb[0].mxu0 %v631
        %v1683 = vpop.f32.mrb[0].mxu0
        %v1684 = vadd.f32 %v1499, %v1683
        %v1685 = vpop.f32.mrb[0].mxu0
        %1686 = vmatprep.mubr.f32.mxu0 %v720
        %1687 = vmatmul.mubr.f32.gmra.mrb[0].mxu0 %v633
        %v1688 = vpop.f32.mrb[0].mxu0
        %v1689 = vadd.f32 %v1504, %v1688
        %v1690 = vpop.f32.mrb[0].mxu0
        %1691 = vmatprep.mubr.f32.mxu0 %v722
        %1692 = vmatmul.mubr.f32.gmra.mrb[0].mxu0 %v634
        %v1693 = vpop.f32.mrb[0].mxu0
        %v1694 = vadd.f32 %v1509, %v1693
        %v1695 = vpop.f32.mrb[0].mxu0
        %1696 = vmatprep.mubr.f32.mxu0 %v725
        %1697 = vmatmul.mubr.f32.gmra.mrb[0].mxu0 %v636
        %v1698 = vpop.f32.mrb[0].mxu0
        %v1699 = vadd.f32 %v1514, %v1698
        %v1700 = vpop.f32.mrb[0].mxu0
        %1701 = vmatprep.mubr.f32.mxu0 %v727
        %1702 = vmatmul.mubr.f32.gmra.mrb[0].mxu0 %v637
        %v1703 = vpop.f32.mrb[0].mxu0
        %v1704 = vadd.f32 %v1519, %v1703
        %v1705 = vpop.f32.mrb[0].mxu0
        %1706 = vmatprep.mubr.f32.mxu0 %v730
        %1707 = vmatmul.mubr.f32.gmra.mrb[0].mxu0 %v639
        %v1708 = vpop.f32.mrb[0].mxu0
        %v1709 = vadd.f32 %v1524, %v1708
        %v1710 = vpop.f32.mrb[0].mxu0
        %1711 = vmatprep.mubr.f32.mxu0 %v732
        %1712 = vmatmul.mubr.f32.gmra.mrb[0].mxu0 %v640
        %v1713 = vpop.f32.mrb[0].mxu0
        %v1714 = vadd.f32 %v1529, %v1713
        %v1715 = vpop.f32.mrb[0].mxu0
        %1716 = vmatprep.mubr.f32.mxu0 %v735
        %1717 = vmatmul.mubr.f32.gmra.mrb[0].mxu0 %v642
        %v1718 = vpop.f32.mrb[0].mxu0
        %v1719 = vadd.f32 %v1534, %v1718
        %v1720 = vpop.f32.mrb[0].mxu0
        %1721 = vmatprep.mubr.f32.mxu0 %v737
        %1722 = vmatmul.mubr.f32.gmra.mrb[0].mxu0 %v643
        %v1723 = vpop.f32.mrb[0].mxu0
        %v1724 = vadd.f32 %v1539, %v1723
        %v1725 = vpop.f32.mrb[0].mxu0
        %1726 = vmatprep.mubr.f32.mxu0 %v740
        %1727 = vmatmul.mubr.f32.gmra.mrb[0].mxu0 %v645
        %v1728 = vpop.f32.mrb[0].mxu0
        %v1729 = vadd.f32 %v1544, %v1728
        %v1730 = vpop.f32.mrb[0].mxu0
        %1731 = vmatprep.mubr.f32.mxu0 %v742
        %1732 = vmatmul.mubr.f32.gmra.mrb[0].mxu0 %v646
        %v1733 = vpop.f32.mrb[0].mxu0
        %v1734 = vadd.f32 %v1549, %v1733
        %v1735 = vpop.f32.mrb[0].mxu0
        %1736 = vmatprep.mubr.f32.mxu0 %v745
        %1737 = vmatmul.mubr.f32.gmra.mrb[0].mxu0 %v648
        %v1738 = vpop.f32.mrb[0].mxu0
        %v1739 = vadd.f32 %v1554, %v1738
        %v1740 = vpop.f32.mrb[0].mxu0
        %1741 = vmatprep.mubr.f32.mxu0 %v747
        %1742 = vmatmul.mubr.f32.gmra.mrb[0].mxu0 %v649
        %v1743 = vpop.f32.mrb[0].mxu0
        %v1744 = vadd.f32 %v1559, %v1743
        %v1745 = vpop.f32.mrb[0].mxu0
        %1746 = vmatprep.mubr.f32.mxu0 %v750
        %1747 = vmatmul.mubr.f32.gmra.mrb[0].mxu0 %v651
        %v1748 = vpop.f32.mrb[0].mxu0
        %v1749 = vadd.f32 %v1564, %v1748
        %v1750 = vpop.f32.mrb[0].mxu0
        %1751 = vmatprep.mubr.f32.mxu0 %v752
        %1752 = vmatmul.mubr.f32.gmra.mrb[0].mxu0 %v652
        %v1753 = vpop.f32.mrb[0].mxu0
        %v1754 = vadd.f32 %v1569, %v1753
        %v1755 = vpop.f32.mrb[0].mxu0
        %1756 = vmatprep.mubr.f32.mxu0 %v755
        %1757 = vmatmul.mubr.f32.gmra.mrb[0].mxu0 %v654
        %v1758 = vpop.f32.mrb[0].mxu0
        %v1759 = vadd.f32 %v1574, %v1758
        %v1760 = vpop.f32.mrb[0].mxu0
        %1761 = vmatprep.mubr.f32.mxu0 %v757
        %1762 = vmatmul.mubr.f32.gmra.mrb[0].mxu0 %v655
        %v1763 = vpop.f32.mrb[0].mxu0
        %v1764 = vadd.f32 %v1579, %v1763
        %v1765 = vpop.f32.mrb[0].mxu0
        %1766 = vmatprep.mubr.f32.mxu0 %v760
        %1767 = vmatmul.mubr.f32.gmra.mrb[0].mxu0 %v657
        %v1768 = vpop.f32.mrb[0].mxu0
        %v1769 = vadd.f32 %v1584, %v1768
        %v1770 = vpop.f32.mrb[0].mxu0
        %1771 = vmatprep.mubr.f32.mxu0 %v762
        %1772 = vmatmul.mubr.f32.gmra.mrb[0].mxu0 %v658
        %v1773 = vpop.f32.mrb[0].mxu0
        %v1774 = vadd.f32 %v1589, %v1773
        %v1775 = vpop.f32.mrb[0].mxu0
        %1776 = vmatprep.mubr.f32.mxu0 %v877
        %1777 = vmatmul.mubr.f32.gmra.mrb[0].mxu0 %v660
        %v1778 = vpop.f32.mrb[0].mxu0
        %v1779 = vadd.f32 %v1594, %v1778
        %v1780 = vpop.f32.mrb[0].mxu0
        %1781 = vmatprep.mubr.f32.mxu0 %v879
        %1782 = vmatmul.mubr.f32.gmra.mrb[0].mxu0 %v661
        %v1783 = vpop.f32.mrb[0].mxu0
        %v1784 = vadd.f32 %v1599, %v1783
        %v1785 = vpop.f32.mrb[0].mxu0
        %1786 = vmatprep.mubr.f32.mxu0 %v894
        %1787 = vmatmul.mubr.f32.gmra.mrb[0].mxu0 %v663
        %v1788 = vpop.f32.mrb[0].mxu0
        %v1789 = vadd.f32 %v1604, %v1788
        %v1790 = vpop.f32.mrb[0].mxu0
        %1791 = vmatprep.mubr.f32.mxu0 %v896
        %1792 = vmatmul.mubr.f32.gmra.mrb[0].mxu0 %v664
        %v1793 = vpop.f32.mrb[0].mxu0
        %v1794 = vadd.f32 %v1609, %v1793
        %v1795 = vpop.f32.mrb[0].mxu0
        %1796 = vdwg.mxu0
        %1797 = vmatprep.subr.mxu0 0.0
        %1798 = vmatpush1.msra.mxu0 %v1034
        %1799 = vmatprep.subr.mxu0 0.0
        %1800 = vmatpush1.msra.mxu0 %v1035
        %1801 = vmatprep.subr.mxu0 0.0
        %1802 = vmatpush1.msra.mxu0 %v1036
        %1803 = vmatprep.subr.mxu0 0.0
        %1804 = vmatpush1.msra.mxu0 %v1037
        %1805 = vmatprep.subr.mxu0 0.0
        %1806 = vmatpush1.msra.mxu0 %v1038
        %1807 = vmatprep.subr.mxu0 0.0
        %1808 = vmatpush1.msra.mxu0 %v1039
        %1809 = vmatprep.subr.mxu0 0.0
        %1810 = vmatpush1.msra.mxu0 %v1040
        %1811 = vmatprep.subr.mxu0 0.0
        %1812 = vmatpush1.msra.mxu0 %v1041
        %1813 = vmatprep.subr.mxu0 0.0
        %1814 = vmatpush1.msra.mxu0 %v1042
        %1815 = vmatprep.subr.mxu0 0.0
        %1816 = vmatpush1.msra.mxu0 %v1043
        %1817 = vmatprep.subr.mxu0 0.0
        %1818 = vmatpush1.msra.mxu0 %v1044
        %1819 = vmatprep.subr.mxu0 0.0
        %1820 = vmatpush1.msra.mxu0 %v1045
        %1821 = vmatprep.subr.mxu0 0.0
        %1822 = vmatpush1.msra.mxu0 %v1046
        %1823 = vmatprep.subr.mxu0 0.0
        %1824 = vmatpush1.msra.mxu0 %v1047
        %1825 = vmatprep.subr.mxu0 0.0
        %1826 = vmatpush1.msra.mxu0 %v1048
        %1827 = vmatprep.subr.mxu0 0.0
        %1828 = vmatpush1.msra.mxu0 %v1049
        %1829 = vmatprep.subr.mxu0 0.0
        %1830 = vmatpush1.msra.mxu0 0.0
        %1831 = vmatprep.subr.mxu0 0.0
        %1832 = vmatpush1.msra.mxu0 0.0
        %1833 = vmatprep.subr.mxu0 0.0
        %1834 = vmatpush1.msra.mxu0 0.0
        %1835 = vmatprep.subr.mxu0 0.0
        %1836 = vmatpush1.msra.mxu0 0.0
        %1837 = vmatprep.subr.mxu0 0.0
        %1838 = vmatpush1.msra.mxu0 0.0
        %1839 = vmatprep.subr.mxu0 0.0
        %1840 = vmatpush1.msra.mxu0 0.0
        %1841 = vmatprep.subr.mxu0 0.0
        %1842 = vmatpush1.msra.mxu0 0.0
        %1843 = vmatprep.subr.mxu0 0.0
        %1844 = vmatpush1.msra.mxu0 0.0
        %1845 = vmatprep.subr.mxu0 0.0
        %1846 = vmatpush1.msra.mxu0 0.0
        %1847 = vmatprep.subr.mxu0 0.0
        %1848 = vmatpush1.msra.mxu0 0.0
        %1849 = vmatprep.subr.mxu0 0.0
        %1850 = vmatpush1.msra.mxu0 0.0
        %1851 = vmatprep.subr.mxu0 0.0
        %1852 = vmatpush1.msra.mxu0 0.0
        %1853 = vmatprep.subr.mxu0 0.0
        %1854 = vmatpush1.msra.mxu0 0.0
        %1855 = vmatprep.subr.mxu0 0.0
        %1856 = vmatpush1.msra.mxu0 0.0
        %1857 = vmatprep.subr.mxu0 0.0
        %1858 = vmatpush1.msra.mxu0 0.0
        %1859 = vmatprep.subr.mxu0 0.0
        %1860 = vmatpush1.msra.mxu0 0.0
        %1861 = vmatprep.mubr.f32.mxu0 0.0
        %1862 = vmatmul.mubr.f32.gmra.mrb[0].mxu0 %v800
        %v1863 = vpop.f32.mrb[0].mxu0
        %v1864 = vadd.f32 %v1679, %v1863
        %v1865 = vpop.f32.mrb[0].mxu0
        %1866 = vmatprep.mubr.f32.mxu0 0.0
        %1867 = vmatmul.mubr.f32.gmra.mrb[0].mxu0 %v802
        %v1868 = vpop.f32.mrb[0].mxu0
        %v1869 = vadd.f32 %v1684, %v1868
        %v1870 = vpop.f32.mrb[0].mxu0
        %1871 = vmatprep.mubr.f32.mxu0 0.0
        %1872 = vmatmul.mubr.f32.gmra.mrb[0].mxu0 %v805
        %v1873 = vpop.f32.mrb[0].mxu0
        %v1874 = vadd.f32 %v1689, %v1873
        %v1875 = vpop.f32.mrb[0].mxu0
        %1876 = vmatprep.mubr.f32.mxu0 0.0
        %1877 = vmatmul.mubr.f32.gmra.mrb[0].mxu0 %v807
        %v1878 = vpop.f32.mrb[0].mxu0
        %v1879 = vadd.f32 %v1694, %v1878
        %v1880 = vpop.f32.mrb[0].mxu0
        %1881 = vmatprep.mubr.f32.mxu0 0.0
        %1882 = vmatmul.mubr.f32.gmra.mrb[0].mxu0 %v810
        %v1883 = vpop.f32.mrb[0].mxu0
        %v1884 = vadd.f32 %v1699, %v1883
        %v1885 = vpop.f32.mrb[0].mxu0
        %1886 = vmatprep.mubr.f32.mxu0 0.0
        %1887 = vmatmul.mubr.f32.gmra.mrb[0].mxu0 %v812
        %v1888 = vpop.f32.mrb[0].mxu0
        %v1889 = vadd.f32 %v1704, %v1888
        %v1890 = vpop.f32.mrb[0].mxu0
        %1891 = vmatprep.mubr.f32.mxu0 0.0
        %1892 = vmatmul.mubr.f32.gmra.mrb[0].mxu0 %v815
        %v1893 = vpop.f32.mrb[0].mxu0
        %v1894 = vadd.f32 %v1709, %v1893
        %v1895 = vpop.f32.mrb[0].mxu0
        %1896 = vmatprep.mubr.f32.mxu0 0.0
        %1897 = vmatmul.mubr.f32.gmra.mrb[0].mxu0 %v817
        %v1898 = vpop.f32.mrb[0].mxu0
        %v1899 = vadd.f32 %v1714, %v1898
        %v1900 = vpop.f32.mrb[0].mxu0
        %1901 = vmatprep.mubr.f32.mxu0 0.0
        %1902 = vmatmul.mubr.f32.gmra.mrb[0].mxu0 %v820
        %v1903 = vpop.f32.mrb[0].mxu0
        %v1904 = vadd.f32 %v1719, %v1903
        %v1905 = vpop.f32.mrb[0].mxu0
        %1906 = vmatprep.mubr.f32.mxu0 0.0
        %1907 = vmatmul.mubr.f32.gmra.mrb[0].mxu0 %v822
        %v1908 = vpop.f32.mrb[0].mxu0
        %v1909 = vadd.f32 %v1724, %v1908
        %v1910 = vpop.f32.mrb[0].mxu0
        %1911 = vmatprep.mubr.f32.mxu0 0.0
        %1912 = vmatmul.mubr.f32.gmra.mrb[0].mxu0 %v825
        %v1913 = vpop.f32.mrb[0].mxu0
        %v1914 = vadd.f32 %v1729, %v1913
        %v1915 = vpop.f32.mrb[0].mxu0
        %1916 = vmatprep.mubr.f32.mxu0 0.0
        %1917 = vmatmul.mubr.f32.gmra.mrb[0].mxu0 %v827
        %v1918 = vpop.f32.mrb[0].mxu0
        %v1919 = vadd.f32 %v1734, %v1918
        %v1920 = vpop.f32.mrb[0].mxu0
        %1921 = vmatprep.mubr.f32.mxu0 0.0
        %1922 = vmatmul.mubr.f32.gmra.mrb[0].mxu0 %v830
        %v1923 = vpop.f32.mrb[0].mxu0
        %v1924 = vadd.f32 %v1739, %v1923
        %v1925 = vpop.f32.mrb[0].mxu0
        %1926 = vmatprep.mubr.f32.mxu0 0.0
        %1927 = vmatmul.mubr.f32.gmra.mrb[0].mxu0 %v832
        %v1928 = vpop.f32.mrb[0].mxu0
        %v1929 = vadd.f32 %v1744, %v1928
        %v1930 = vpop.f32.mrb[0].mxu0
        %1931 = vmatprep.mubr.f32.mxu0 0.0
        %1932 = vmatmul.mubr.f32.gmra.mrb[0].mxu0 %v835
        %v1933 = vpop.f32.mrb[0].mxu0
        %v1934 = vadd.f32 %v1749, %v1933
        %v1935 = vpop.f32.mrb[0].mxu0
        %1936 = vmatprep.mubr.f32.mxu0 0.0
        %1937 = vmatmul.mubr.f32.gmra.mrb[0].mxu0 %v837
        %v1938 = vpop.f32.mrb[0].mxu0
        %v1939 = vadd.f32 %v1754, %v1938
        %v1940 = vpop.f32.mrb[0].mxu0
        %1941 = vmatprep.mubr.f32.mxu0 0.0
        %1942 = vmatmul.mubr.f32.gmra.mrb[0].mxu0 %v840
        %v1943 = vpop.f32.mrb[0].mxu0
        %v1944 = vadd.f32 %v1759, %v1943
        %v1945 = vpop.f32.mrb[0].mxu0
        %1946 = vmatprep.mubr.f32.mxu0 0.0
        %1947 = vmatmul.mubr.f32.gmra.mrb[0].mxu0 %v842
        %v1948 = vpop.f32.mrb[0].mxu0
        %v1949 = vadd.f32 %v1764, %v1948
        %v1950 = vpop.f32.mrb[0].mxu0
        %1951 = vmatprep.mubr.f32.mxu0 0.0
        %1952 = vmatmul.mubr.f32.gmra.mrb[0].mxu0 %v845
        %v1953 = vpop.f32.mrb[0].mxu0
        %v1954 = vadd.f32 %v1769, %v1953
        %v1955 = vpop.f32.mrb[0].mxu0
        %1956 = vmatprep.mubr.f32.mxu0 0.0
        %1957 = vmatmul.mubr.f32.gmra.mrb[0].mxu0 %v847
        %v1958 = vpop.f32.mrb[0].mxu0
        %v1959 = vadd.f32 %v1774, %v1958
        %v1960 = vpop.f32.mrb[0].mxu0
        %1961 = vmatprep.mubr.f32.mxu0 0.0
        %1962 = vmatmul.mubr.f32.gmra.mrb[0].mxu0 %v884
        %v1963 = vpop.f32.mrb[0].mxu0
        %v1964 = vadd.f32 %v1779, %v1963
        %v1965 = vpop.f32.mrb[0].mxu0
        %1966 = vmatprep.mubr.f32.mxu0 0.0
        %1967 = vmatmul.mubr.f32.gmra.mrb[0].mxu0 %v886
        %v1968 = vpop.f32.mrb[0].mxu0
        %v1969 = vadd.f32 %v1784, %v1968
        %v1970 = vpop.f32.mrb[0].mxu0
        %1971 = vmatprep.mubr.f32.mxu0 0.0
        %1972 = vmatmul.mubr.f32.gmra.mrb[0].mxu0 %v901
        %v1973 = vpop.f32.mrb[0].mxu0
        %v1974 = vadd.f32 %v1789, %v1973
        %v1975 = vpop.f32.mrb[0].mxu0
        %1976 = vmatprep.mubr.f32.mxu0 0.0
        %1977 = vmatmul.mubr.f32.gmra.mrb[0].mxu0 %v903
        %v1978 = vpop.f32.mrb[0].mxu0
        %v1979 = vadd.f32 %v1794, %v1978
        %v1980 = vpop.f32.mrb[0].mxu0
        %1981 = vdwg.mxu0
        %v1982 = vmax.f32 %v1864, 0.0
        %v1983 = vmax.f32 %v1869, 0.0
        %v1984 = vmax.f32 %v1874, 0.0
        %v1985 = vmax.f32 %v1879, 0.0
        %v1986 = vmax.f32 %v1884, 0.0
        %v1987 = vmax.f32 %v1889, 0.0
        %v1988 = vmax.f32 %v1894, 0.0
        %v1989 = vmax.f32 %v1899, 0.0
        %v1990 = vmax.f32 %v1904, 0.0
        %v1991 = vmax.f32 %v1909, 0.0
        %v1992 = vmax.f32 %v1914, 0.0
        %v1993 = vmax.f32 %v1919, 0.0
        %v1994 = vmax.f32 %v1924, 0.0
        %v1995 = vmax.f32 %v1929, 0.0
        %v1996 = vmax.f32 %v1934, 0.0
        %v1997 = vmax.f32 %v1939, 0.0
        %v1998 = vmax.f32 %v1944, 0.0
        %v1999 = vmax.f32 %v1949, 0.0
        %v2000 = vmax.f32 %v1954, 0.0
        %v2001 = vmax.f32 %v1959, 0.0
        %v2002 = vmax.f32 %v1964, 0.0
        %v2003 = vmax.f32 %v1969, 0.0
        %v2004 = vmax.f32 %v1974, 0.0
        %v2005 = vmax.f32 %v1979, 0.0
        %2006 = vst [vmem:[#allocation3 + $0x1] sm:$0xff] %v1982
        %2007 = vst [vmem:[#allocation3 + $0x9] sm:$0xff] %v1983
        %2008 = vst [vmem:[#allocation3 + $0x19] sm:$0xff] %v1984
        %2009 = vst [vmem:[#allocation3 + $0x21] sm:$0xff] %v1985
        %2010 = vst [vmem:[#allocation3 + $0x31] sm:$0xff] %v1986
        %2011 = vst [vmem:[#allocation3 + $0x39] sm:$0xff] %v1987
        %2012 = vst [vmem:[#allocation3 + $0x49] sm:$0xff] %v1988
        %2013 = vst [vmem:[#allocation3 + $0x51] sm:$0xff] %v1989
        %2014 = vst [vmem:[#allocation3 + $0x61] sm:$0xff] %v1990
        %2015 = vst [vmem:[#allocation3 + $0x69] sm:$0xff] %v1991
        %2016 = vst [vmem:[#allocation3 + $0x79] sm:$0xff] %v1992
        %2017 = vst [vmem:[#allocation3 + $0x81] sm:$0xff] %v1993
        %2018 = vst [vmem:[#allocation3 + $0x91] sm:$0xff] %v1994
        %2019 = vst [vmem:[#allocation3 + $0x99] sm:$0xff] %v1995
        %2020 = vst [vmem:[#allocation3 + $0xa9] sm:$0xff] %v1996
        %2021 = vst [vmem:[#allocation3 + $0xb1] sm:$0xff] %v1997
        %2022 = vst [vmem:[#allocation3 + $0xc1] sm:$0xff] %v1998
        %2023 = vst [vmem:[#allocation3 + $0xc9] sm:$0xff] %v1999
        %2024 = vst [vmem:[#allocation3 + $0xd9] sm:$0xff] %v2000
        %2025 = vst [vmem:[#allocation3 + $0xe1] sm:$0xff] %v2001
        %2026 = vst [vmem:[#allocation3 + $0xf1] sm:$0xff] %v2002
        %2027 = vst [vmem:[#allocation3 + $0xf9] sm:$0xff] %v2003
        %2028 = vst [vmem:[#allocation3 + $0x109] sm:$0xff] %v2004
        %2029 = vst [vmem:[#allocation3 + $0x111] sm:$0xff] %v2005
        // Predicated region
        $region180: #{tpu_custom_call.1} parent=43 // pred_check
          %p2030 = pneg %p479
        $region181: #{tpu_custom_call.1} parent=43 // pred_check_branch
          %2032 = sbr.rel (%p2030) target = $region183
        $region182: #{tpu_custom_call.1} parent=43 // pred_region
          %2033 = vst [vmem:[#allocation3] sm:$0xff] 0.0
          %2034 = vst [vmem:[#allocation3 + $0x8] sm:$0xff] 0.0
          %2035 = vst [vmem:[#allocation3 + $0x10] sm:$0x3] 0.0
          %2036 = vst [vmem:[#allocation3 + $0x18] sm:$0xff] 0.0
          %2037 = vst [vmem:[#allocation3 + $0x20] sm:$0xff] 0.0
          %2038 = vst [vmem:[#allocation3 + $0x28] sm:$0x3] 0.0
        $region183: #{tpu_custom_call.1} parent=43 // pred_fallthru
          _
        // Predicated region
        $region184: #{tpu_custom_call.1} parent=43 // pred_check
          %p2039 = pneg %p578
        $region185: #{tpu_custom_call.1} parent=43 // pred_check_branch
          %2041 = sbr.rel (%p2039) target = $region187
        $region186: #{tpu_custom_call.1} parent=43 // pred_region
          %s2042 = scalar_lea.vmem [#allocation3], 240
          %2043 = vst [vmem:[%s2042] sm:$0xff] 0.0
          %2044 = vst [vmem:[%s2042 + $0x8] sm:$0xff] 0.0
          %2045 = vst [vmem:[%s2042 + $0x10] sm:$0x3] 0.0
          %2046 = vst [vmem:[%s2042 + $0x18] sm:$0xff] 0.0
          %2047 = vst [vmem:[%s2042 + $0x20] sm:$0xff] 0.0
          %2048 = vst [vmem:[%s2042 + $0x28] sm:$0x3] 0.0
        $region187: #{tpu_custom_call.1} parent=43 // pred_fallthru
          _
        %v2049 = vld [vmem:[#allocation3] sm:$0xff]
        %v2050 = vld [vmem:[#allocation3 + $0x8] sm:$0xff]
        %v2051 = vld [vmem:[#allocation3 + $0x10] sm:$0x3]
        %v2052 = vld [vmem:[#allocation3 + $0x18] sm:$0xff]
        %v2053 = vld [vmem:[#allocation3 + $0x20] sm:$0xff]
        %v2054 = vld [vmem:[#allocation3 + $0x28] sm:$0x3]
        %v2055 = vld [vmem:[#allocation3 + $0x30] sm:$0xff]
        %v2056 = vld [vmem:[#allocation3 + $0x38] sm:$0xff]
        %v2057 = vld [vmem:[#allocation3 + $0x40] sm:$0x3]
        %v2058 = vld [vmem:[#allocation3 + $0x48] sm:$0xff]
        %v2059 = vld [vmem:[#allocation3 + $0x50] sm:$0xff]
        %v2060 = vld [vmem:[#allocation3 + $0x58] sm:$0x3]
        %v2061 = vld [vmem:[#allocation3 + $0x60] sm:$0xff]
        %v2062 = vld [vmem:[#allocation3 + $0x68] sm:$0xff]
        %v2063 = vld [vmem:[#allocation3 + $0x70] sm:$0x3]
        %v2064 = vld [vmem:[#allocation3 + $0x78] sm:$0xff]
        %v2065 = vld [vmem:[#allocation3 + $0x80] sm:$0xff]
        %v2066 = vld [vmem:[#allocation3 + $0x88] sm:$0x3]
        %v2067 = vld [vmem:[#allocation3 + $0x90] sm:$0xff]
        %v2068 = vld [vmem:[#allocation3 + $0x98] sm:$0xff]
        %v2069 = vld [vmem:[#allocation3 + $0xa0] sm:$0x3]
        %v2070 = vld [vmem:[#allocation3 + $0xa8] sm:$0xff]
        %v2071 = vld [vmem:[#allocation3 + $0xb0] sm:$0xff]
        %v2072 = vld [vmem:[#allocation3 + $0xb8] sm:$0x3]
        %v2073 = vld [vmem:[#allocation3 + $0xc0] sm:$0xff]
        %v2074 = vld [vmem:[#allocation3 + $0xc8] sm:$0xff]
        %v2075 = vld [vmem:[#allocation3 + $0xd0] sm:$0x3]
        %v2076 = vld [vmem:[#allocation3 + $0xd8] sm:$0xff]
        %v2077 = vld [vmem:[#allocation3 + $0xe0] sm:$0xff]
        %v2078 = vld [vmem:[#allocation3 + $0xe8] sm:$0x3]
        %v2079 = vld [vmem:[#allocation3 + $0xf0] sm:$0xff]
        %v2080 = vld [vmem:[#allocation3 + $0xf8] sm:$0xff]
        %v2081 = vld [vmem:[#allocation3 + $0x100] sm:$0x3]
        %v2082 = vld [vmem:[#allocation3 + $0x108] sm:$0xff]
        %v2083 = vld [vmem:[#allocation3 + $0x110] sm:$0xff]
        %v2084 = vld [vmem:[#allocation3 + $0x118] sm:$0x3]
        %v2115 = vrot.slane %v2049, 1
        %v2116 = vrot.slane %v2050, 1
        %v2117 = vsel %vm702, %v2115, %v2116
        %v2118 = vrot.slane %v2051, 1
        %v2119 = vsel %vm702, %v2116, %v2118
        %v2120 = vrot.slane %v2052, 1
        %v2121 = vrot.slane %v2053, 1
        %v2122 = vsel %vm702, %v2120, %v2121
        %v2123 = vrot.slane %v2054, 1
        %v2124 = vsel %vm702, %v2121, %v2123
        %v2125 = vrot.slane %v2055, 1
        %v2126 = vrot.slane %v2056, 1
        %v2127 = vsel %vm702, %v2125, %v2126
        %v2128 = vrot.slane %v2057, 1
        %v2129 = vsel %vm702, %v2126, %v2128
        %v2130 = vrot.slane %v2058, 1
        %v2131 = vrot.slane %v2059, 1
        %v2132 = vsel %vm702, %v2130, %v2131
        %v2133 = vrot.slane %v2060, 1
        %v2134 = vsel %vm702, %v2131, %v2133
        %v2135 = vrot.slane %v2061, 1
        %v2136 = vrot.slane %v2062, 1
        %v2137 = vsel %vm702, %v2135, %v2136
        %v2138 = vrot.slane %v2063, 1
        %v2139 = vsel %vm702, %v2136, %v2138
        %v2140 = vrot.slane %v2064, 1
        %v2141 = vrot.slane %v2065, 1
        %v2142 = vsel %vm702, %v2140, %v2141
        %v2143 = vrot.slane %v2066, 1
        %v2144 = vsel %vm702, %v2141, %v2143
        %v2145 = vrot.slane %v2067, 1
        %v2146 = vrot.slane %v2068, 1
        %v2147 = vsel %vm702, %v2145, %v2146
        %v2148 = vrot.slane %v2069, 1
        %v2149 = vsel %vm702, %v2146, %v2148
        %v2150 = vrot.slane %v2070, 1
        %v2151 = vrot.slane %v2071, 1
        %v2152 = vsel %vm702, %v2150, %v2151
        %v2153 = vrot.slane %v2072, 1
        %v2154 = vsel %vm702, %v2151, %v2153
        %v2155 = vrot.slane %v2073, 1
        %v2156 = vrot.slane %v2074, 1
        %v2157 = vsel %vm702, %v2155, %v2156
        %v2158 = vrot.slane %v2075, 1
        %v2159 = vsel %vm702, %v2156, %v2158
        %v2160 = vrot.slane %v2076, 1
        %v2161 = vrot.slane %v2077, 1
        %v2162 = vsel %vm702, %v2160, %v2161
        %v2163 = vrot.slane %v2078, 1
        %v2164 = vsel %vm702, %v2161, %v2163
        %v2185 = vrot.slane %v2049, 2
        %v2186 = vrot.slane %v2050, 2
        %v2187 = vsel %vm787, %v2185, %v2186
        %v2188 = vrot.slane %v2051, 2
        %v2189 = vsel %vm787, %v2186, %v2188
        %v2190 = vrot.slane %v2052, 2
        %v2191 = vrot.slane %v2053, 2
        %v2192 = vsel %vm787, %v2190, %v2191
        %v2193 = vrot.slane %v2054, 2
        %v2194 = vsel %vm787, %v2191, %v2193
        %v2195 = vrot.slane %v2055, 2
        %v2196 = vrot.slane %v2056, 2
        %v2197 = vsel %vm787, %v2195, %v2196
        %v2198 = vrot.slane %v2057, 2
        %v2199 = vsel %vm787, %v2196, %v2198
        %v2200 = vrot.slane %v2058, 2
        %v2201 = vrot.slane %v2059, 2
        %v2202 = vsel %vm787, %v2200, %v2201
        %v2203 = vrot.slane %v2060, 2
        %v2204 = vsel %vm787, %v2201, %v2203
        %v2205 = vrot.slane %v2061, 2
        %v2206 = vrot.slane %v2062, 2
        %v2207 = vsel %vm787, %v2205, %v2206
        %v2208 = vrot.slane %v2063, 2
        %v2209 = vsel %vm787, %v2206, %v2208
        %v2210 = vrot.slane %v2064, 2
        %v2211 = vrot.slane %v2065, 2
        %v2212 = vsel %vm787, %v2210, %v2211
        %v2213 = vrot.slane %v2066, 2
        %v2214 = vsel %vm787, %v2211, %v2213
        %v2215 = vrot.slane %v2067, 2
        %v2216 = vrot.slane %v2068, 2
        %v2217 = vsel %vm787, %v2215, %v2216
        %v2218 = vrot.slane %v2069, 2
        %v2219 = vsel %vm787, %v2216, %v2218
        %v2220 = vrot.slane %v2070, 2
        %v2221 = vrot.slane %v2071, 2
        %v2222 = vsel %vm787, %v2220, %v2221
        %v2223 = vrot.slane %v2072, 2
        %v2224 = vsel %vm787, %v2221, %v2223
        %v2225 = vrot.slane %v2073, 2
        %v2226 = vrot.slane %v2074, 2
        %v2227 = vsel %vm787, %v2225, %v2226
        %v2228 = vrot.slane %v2075, 2
        %v2229 = vsel %vm787, %v2226, %v2228
        %v2230 = vrot.slane %v2076, 2
        %v2231 = vrot.slane %v2077, 2
        %v2232 = vsel %vm787, %v2230, %v2231
        %v2233 = vrot.slane %v2078, 2
        %v2234 = vsel %vm787, %v2231, %v2233
        %v2258 = vrot.slane %v2079, 1
        %v2259 = vrot.slane %v2080, 1
        %v2260 = vsel %vm702, %v2258, %v2259
        %v2261 = vrot.slane %v2081, 1
        %v2262 = vsel %vm702, %v2259, %v2261
        %v2265 = vrot.slane %v2079, 2
        %v2266 = vrot.slane %v2080, 2
        %v2267 = vsel %vm787, %v2265, %v2266
        %v2268 = vrot.slane %v2081, 2
        %v2269 = vsel %vm787, %v2266, %v2268
        %v2275 = vrot.slane %v2082, 1
        %v2276 = vrot.slane %v2083, 1
        %v2277 = vsel %vm702, %v2275, %v2276
        %v2278 = vrot.slane %v2084, 1
        %v2279 = vsel %vm702, %v2276, %v2278
        %v2282 = vrot.slane %v2082, 2
        %v2283 = vrot.slane %v2083, 2
        %v2284 = vsel %vm787, %v2282, %v2283
        %v2285 = vrot.slane %v2084, 2
        %v2286 = vsel %vm787, %v2283, %v2285
        %v2289 = vld [vmem:[#allocation5] sm:$0xff]
        %v2290 = vld [vmem:[#allocation5 + $0x8] sm:$0xff]
        %v2291 = vld [vmem:[#allocation5 + $0x10] sm:$0xff]
        %v2292 = vld [vmem:[#allocation5 + $0x18] sm:$0xff]
        %v2293 = vld [vmem:[#allocation5 + $0x20] sm:$0xff]
        %v2294 = vld [vmem:[#allocation5 + $0x28] sm:$0xff]
        %v2295 = vld [vmem:[#allocation5 + $0x30] sm:$0xff]
        %v2296 = vld [vmem:[#allocation5 + $0x38] sm:$0xff]
        %v2297 = vld [vmem:[#allocation5 + $0x40] sm:$0xff]
        %v2298 = vld [vmem:[#allocation5 + $0x48] sm:$0xff]
        %v2299 = vld [vmem:[#allocation5 + $0x50] sm:$0xff]
        %v2300 = vld [vmem:[#allocation5 + $0x58] sm:$0xff]
        %v2301 = vld [vmem:[#allocation5 + $0x60] sm:$0xff]
        %v2302 = vld [vmem:[#allocation5 + $0x68] sm:$0xff]
        %v2303 = vld [vmem:[#allocation5 + $0x70] sm:$0xff]
        %v2304 = vld [vmem:[#allocation5 + $0x78] sm:$0xff]
        %v2305 = vld [vmem:[#allocation5 + $0x80] sm:$0xff]
        %v2306 = vld [vmem:[#allocation5 + $0x88] sm:$0xff]
        %v2307 = vld [vmem:[#allocation5 + $0x90] sm:$0xff]
        %v2308 = vld [vmem:[#allocation5 + $0x98] sm:$0xff]
        %v2309 = vld [vmem:[#allocation5 + $0xa0] sm:$0xff]
        %v2310 = vld [vmem:[#allocation5 + $0xa8] sm:$0xff]
        %v2311 = vld [vmem:[#allocation5 + $0xb0] sm:$0xff]
        %v2312 = vld [vmem:[#allocation5 + $0xb8] sm:$0xff]
        %v2313 = vld [vmem:[#allocation5 + $0xc0] sm:$0xff]
        %v2314 = vld [vmem:[#allocation5 + $0xc8] sm:$0xff]
        %v2315 = vld [vmem:[#allocation5 + $0xd0] sm:$0xff]
        %v2316 = vld [vmem:[#allocation5 + $0xd8] sm:$0xff]
        %v2317 = vld [vmem:[#allocation5 + $0xe0] sm:$0xff]
        %v2318 = vld [vmem:[#allocation5 + $0xe8] sm:$0xff]
        %v2319 = vld [vmem:[#allocation5 + $0xf0] sm:$0xff]
        %v2320 = vld [vmem:[#allocation5 + $0xf8] sm:$0xff]
        %v2321 = vld [vmem:[#allocation5 + $0x100] sm:$0xff]
        %v2322 = vld [vmem:[#allocation5 + $0x108] sm:$0xff]
        %v2323 = vld [vmem:[#allocation5 + $0x110] sm:$0xff]
        %v2324 = vld [vmem:[#allocation5 + $0x118] sm:$0xff]
        %v2325 = vld [vmem:[#allocation5 + $0x120] sm:$0xff]
        %v2326 = vld [vmem:[#allocation5 + $0x128] sm:$0xff]
        %v2327 = vld [vmem:[#allocation5 + $0x130] sm:$0xff]
        %v2328 = vld [vmem:[#allocation5 + $0x138] sm:$0xff]
        %v2329 = vld [vmem:[#allocation5 + $0x140] sm:$0xff]
        %v2330 = vld [vmem:[#allocation5 + $0x148] sm:$0xff]
        %v2331 = vld [vmem:[#allocation5 + $0x150] sm:$0xff]
        %v2332 = vld [vmem:[#allocation5 + $0x158] sm:$0xff]
        %v2333 = vld [vmem:[#allocation5 + $0x160] sm:$0xff]
        %v2334 = vld [vmem:[#allocation5 + $0x168] sm:$0xff]
        %v2335 = vld [vmem:[#allocation5 + $0x170] sm:$0xff]
        %v2336 = vld [vmem:[#allocation5 + $0x178] sm:$0xff]
        %v2337 = vld [vmem:[#allocation5 + $0x180] sm:$0xff]
        %v2338 = vld [vmem:[#allocation5 + $0x188] sm:$0xff]
        %v2339 = vld [vmem:[#allocation5 + $0x190] sm:$0xff]
        %v2340 = vld [vmem:[#allocation5 + $0x198] sm:$0xff]
        %v2341 = vld [vmem:[#allocation5 + $0x1a0] sm:$0xff]
        %v2342 = vld [vmem:[#allocation5 + $0x1a8] sm:$0xff]
        %v2343 = vld [vmem:[#allocation5 + $0x1b0] sm:$0xff]
        %v2344 = vld [vmem:[#allocation5 + $0x1b8] sm:$0xff]
        %v2345 = vld [vmem:[#allocation5 + $0x1c0] sm:$0xff]
        %v2346 = vld [vmem:[#allocation5 + $0x1c8] sm:$0xff]
        %v2347 = vld [vmem:[#allocation5 + $0x1d0] sm:$0xff]
        %v2348 = vld [vmem:[#allocation5 + $0x1d8] sm:$0xff]
        %v2349 = vld [vmem:[#allocation5 + $0x1e0] sm:$0xff]
        %v2350 = vld [vmem:[#allocation5 + $0x1e8] sm:$0xff]
        %v2351 = vld [vmem:[#allocation5 + $0x1f0] sm:$0xff]
        %v2352 = vld [vmem:[#allocation5 + $0x1f8] sm:$0xff]
        %v2353 = vld [vmem:[#allocation5 + $0x200] sm:$0xff]
        %v2354 = vld [vmem:[#allocation5 + $0x208] sm:$0xff]
        %v2355 = vld [vmem:[#allocation5 + $0x210] sm:$0xff]
        %v2356 = vld [vmem:[#allocation5 + $0x218] sm:$0xff]
        %v2357 = vld [vmem:[#allocation5 + $0x220] sm:$0xff]
        %v2358 = vld [vmem:[#allocation5 + $0x228] sm:$0xff]
        %v2359 = vld [vmem:[#allocation5 + $0x230] sm:$0xff]
        %v2360 = vld [vmem:[#allocation5 + $0x238] sm:$0xff]
        %v2361 = vld [vmem:[#allocation5 + $0x240] sm:$0xff]
        %v2362 = vld [vmem:[#allocation5 + $0x248] sm:$0xff]
        %v2363 = vld [vmem:[#allocation5 + $0x250] sm:$0xff]
        %v2364 = vld [vmem:[#allocation5 + $0x258] sm:$0xff]
        %v2365 = vld [vmem:[#allocation5 + $0x260] sm:$0xff]
        %v2366 = vld [vmem:[#allocation5 + $0x268] sm:$0xff]
        %v2367 = vld [vmem:[#allocation5 + $0x270] sm:$0xff]
        %v2368 = vld [vmem:[#allocation5 + $0x278] sm:$0xff]
        %v2369 = vld [vmem:[#allocation5 + $0x280] sm:$0xff]
        %v2370 = vld [vmem:[#allocation5 + $0x288] sm:$0xff]
        %v2371 = vld [vmem:[#allocation5 + $0x290] sm:$0xff]
        %v2372 = vld [vmem:[#allocation5 + $0x298] sm:$0xff]
        %v2373 = vld [vmem:[#allocation5 + $0x2a0] sm:$0xff]
        %v2374 = vld [vmem:[#allocation5 + $0x2a8] sm:$0xff]
        %v2375 = vld [vmem:[#allocation5 + $0x2b0] sm:$0xff]
        %v2376 = vld [vmem:[#allocation5 + $0x2b8] sm:$0xff]
        %v2377 = vld [vmem:[#allocation5 + $0x2c0] sm:$0xff]
        %v2378 = vld [vmem:[#allocation5 + $0x2c8] sm:$0xff]
        %v2379 = vld [vmem:[#allocation5 + $0x2d0] sm:$0xff]
        %v2380 = vld [vmem:[#allocation5 + $0x2d8] sm:$0xff]
        %v2381 = vld [vmem:[#allocation5 + $0x2e0] sm:$0xff]
        %v2382 = vld [vmem:[#allocation5 + $0x2e8] sm:$0xff]
        %v2383 = vld [vmem:[#allocation5 + $0x2f0] sm:$0xff]
        %v2384 = vld [vmem:[#allocation5 + $0x2f8] sm:$0xff]
        %v2385 = vld [vmem:[#allocation5 + $0x300] sm:$0xff]
        %v2386 = vld [vmem:[#allocation5 + $0x308] sm:$0xff]
        %v2387 = vld [vmem:[#allocation5 + $0x310] sm:$0xff]
        %v2388 = vld [vmem:[#allocation5 + $0x318] sm:$0xff]
        %v2389 = vld [vmem:[#allocation5 + $0x320] sm:$0xff]
        %v2390 = vld [vmem:[#allocation5 + $0x328] sm:$0xff]
        %v2391 = vld [vmem:[#allocation5 + $0x330] sm:$0xff]
        %v2392 = vld [vmem:[#allocation5 + $0x338] sm:$0xff]
        %v2393 = vld [vmem:[#allocation5 + $0x340] sm:$0xff]
        %v2394 = vld [vmem:[#allocation5 + $0x348] sm:$0xff]
        %v2395 = vld [vmem:[#allocation5 + $0x350] sm:$0xff]
        %v2396 = vld [vmem:[#allocation5 + $0x358] sm:$0xff]
        %v2397 = vld [vmem:[#allocation5 + $0x360] sm:$0xff]
        %v2398 = vld [vmem:[#allocation5 + $0x368] sm:$0xff]
        %v2399 = vld [vmem:[#allocation5 + $0x370] sm:$0xff]
        %v2400 = vld [vmem:[#allocation5 + $0x378] sm:$0xff]
        %v2401 = vld [vmem:[#allocation5 + $0x380] sm:$0xff]
        %v2402 = vld [vmem:[#allocation5 + $0x388] sm:$0xff]
        %v2403 = vld [vmem:[#allocation5 + $0x390] sm:$0xff]
        %v2404 = vld [vmem:[#allocation5 + $0x398] sm:$0xff]
        %v2405 = vld [vmem:[#allocation5 + $0x3a0] sm:$0xff]
        %v2406 = vld [vmem:[#allocation5 + $0x3a8] sm:$0xff]
        %v2407 = vld [vmem:[#allocation5 + $0x3b0] sm:$0xff]
        %v2408 = vld [vmem:[#allocation5 + $0x3b8] sm:$0xff]
        %v2409 = vld [vmem:[#allocation5 + $0x3c0] sm:$0xff]
        %v2410 = vld [vmem:[#allocation5 + $0x3c8] sm:$0xff]
        %v2411 = vld [vmem:[#allocation5 + $0x3d0] sm:$0xff]
        %v2412 = vld [vmem:[#allocation5 + $0x3d8] sm:$0xff]
        %v2413 = vld [vmem:[#allocation5 + $0x3e0] sm:$0xff]
        %v2414 = vld [vmem:[#allocation5 + $0x3e8] sm:$0xff]
        %v2415 = vld [vmem:[#allocation5 + $0x3f0] sm:$0xff]
        %v2416 = vld [vmem:[#allocation5 + $0x3f8] sm:$0xff]
        %v2417 = vld [vmem:[#allocation5 + $0x400] sm:$0xff]
        %v2418 = vld [vmem:[#allocation5 + $0x408] sm:$0xff]
        %v2419 = vld [vmem:[#allocation5 + $0x410] sm:$0xff]
        %v2420 = vld [vmem:[#allocation5 + $0x418] sm:$0xff]
        %v2421 = vld [vmem:[#allocation5 + $0x420] sm:$0xff]
        %v2422 = vld [vmem:[#allocation5 + $0x428] sm:$0xff]
        %v2423 = vld [vmem:[#allocation5 + $0x430] sm:$0xff]
        %v2424 = vld [vmem:[#allocation5 + $0x438] sm:$0xff]
        %v2425 = vld [vmem:[#allocation5 + $0x440] sm:$0xff]
        %v2426 = vld [vmem:[#allocation5 + $0x448] sm:$0xff]
        %v2427 = vld [vmem:[#allocation5 + $0x450] sm:$0xff]
        %v2428 = vld [vmem:[#allocation5 + $0x458] sm:$0xff]
        %v2429 = vld [vmem:[#allocation5 + $0x460] sm:$0xff]
        %v2430 = vld [vmem:[#allocation5 + $0x468] sm:$0xff]
        %v2431 = vld [vmem:[#allocation5 + $0x470] sm:$0xff]
        %v2432 = vld [vmem:[#allocation5 + $0x478] sm:$0xff]
        %v2433 = vld [vmem:[%s4] sm:$0x1]
        %v2435 = vlaneseq
        %v2436 = vshrl.u32 %v2435, 7
        %v2437 = vsub.s32 0, %v2436
        %v2438 = vrot.slane %v2433, %v2437
        %2440 = vmatprep.subr.mxu0 0.0
        %2441 = vmatpush1.msra.mxu0 %v2289
        %2442 = vmatprep.subr.mxu0 0.0
        %2443 = vmatpush1.msra.mxu0 %v2290
        %2444 = vmatprep.subr.mxu0 0.0
        %2445 = vmatpush1.msra.mxu0 %v2291
        %2446 = vmatprep.subr.mxu0 0.0
        %2447 = vmatpush1.msra.mxu0 %v2292
        %2448 = vmatprep.subr.mxu0 0.0
        %2449 = vmatpush1.msra.mxu0 %v2293
        %2450 = vmatprep.subr.mxu0 0.0
        %2451 = vmatpush1.msra.mxu0 %v2294
        %2452 = vmatprep.subr.mxu0 0.0
        %2453 = vmatpush1.msra.mxu0 %v2295
        %2454 = vmatprep.subr.mxu0 0.0
        %2455 = vmatpush1.msra.mxu0 %v2296
        %2456 = vmatprep.subr.mxu0 0.0
        %2457 = vmatpush1.msra.mxu0 %v2297
        %2458 = vmatprep.subr.mxu0 0.0
        %2459 = vmatpush1.msra.mxu0 %v2298
        %2460 = vmatprep.subr.mxu0 0.0
        %2461 = vmatpush1.msra.mxu0 %v2299
        %2462 = vmatprep.subr.mxu0 0.0
        %2463 = vmatpush1.msra.mxu0 %v2300
        %2464 = vmatprep.subr.mxu0 0.0
        %2465 = vmatpush1.msra.mxu0 %v2301
        %2466 = vmatprep.subr.mxu0 0.0
        %2467 = vmatpush1.msra.mxu0 %v2302
        %2468 = vmatprep.subr.mxu0 0.0
        %2469 = vmatpush1.msra.mxu0 %v2303
        %2470 = vmatprep.subr.mxu0 0.0
        %2471 = vmatpush1.msra.mxu0 %v2304
        %2472 = vmatprep.subr.mxu0 0.0
        %2473 = vmatpush1.msra.mxu0 %v2305
        %2474 = vmatprep.subr.mxu0 0.0
        %2475 = vmatpush1.msra.mxu0 %v2306
        %2476 = vmatprep.subr.mxu0 0.0
        %2477 = vmatpush1.msra.mxu0 %v2307
        %2478 = vmatprep.subr.mxu0 0.0
        %2479 = vmatpush1.msra.mxu0 %v2308
        %2480 = vmatprep.subr.mxu0 0.0
        %2481 = vmatpush1.msra.mxu0 %v2309
        %2482 = vmatprep.subr.mxu0 0.0
        %2483 = vmatpush1.msra.mxu0 %v2310
        %2484 = vmatprep.subr.mxu0 0.0
        %2485 = vmatpush1.msra.mxu0 %v2311
        %2486 = vmatprep.subr.mxu0 0.0
        %2487 = vmatpush1.msra.mxu0 %v2312
        %2488 = vmatprep.subr.mxu0 0.0
        %2489 = vmatpush1.msra.mxu0 %v2313
        %2490 = vmatprep.subr.mxu0 0.0
        %2491 = vmatpush1.msra.mxu0 %v2314
        %2492 = vmatprep.subr.mxu0 0.0
        %2493 = vmatpush1.msra.mxu0 %v2315
        %2494 = vmatprep.subr.mxu0 0.0
        %2495 = vmatpush1.msra.mxu0 %v2316
        %2496 = vmatprep.subr.mxu0 0.0
        %2497 = vmatpush1.msra.mxu0 %v2317
        %2498 = vmatprep.subr.mxu0 0.0
        %2499 = vmatpush1.msra.mxu0 %v2318
        %2500 = vmatprep.subr.mxu0 0.0
        %2501 = vmatpush1.msra.mxu0 %v2319
        %2502 = vmatprep.subr.mxu0 0.0
        %2503 = vmatpush1.msra.mxu0 %v2320
        %2504 = vmatprep.mubr.f32.mxu0 %v2117
        %2505 = vmatmul.mubr.f32.gmra.mrb[0].mxu0 %v2049
        %v2506 = vpop.f32.mrb[0].mxu0
        %v2507 = vadd.f32 %v2438, %v2506
        %v2508 = vpop.f32.mrb[0].mxu0
        %2509 = vmatprep.mubr.f32.mxu0 %v2119
        %2510 = vmatmul.mubr.f32.gmra.mrb[0].mxu0 %v2050
        %v2511 = vpop.f32.mrb[0].mxu0
        %v2512 = vadd.f32 %v2438, %v2511
        %v2513 = vpop.f32.mrb[0].mxu0
        %2514 = vmatprep.mubr.f32.mxu0 %v2122
        %2515 = vmatmul.mubr.f32.gmra.mrb[0].mxu0 %v2052
        %v2516 = vpop.f32.mrb[0].mxu0
        %v2517 = vadd.f32 %v2438, %v2516
        %v2518 = vpop.f32.mrb[0].mxu0
        %2519 = vmatprep.mubr.f32.mxu0 %v2124
        %2520 = vmatmul.mubr.f32.gmra.mrb[0].mxu0 %v2053
        %v2521 = vpop.f32.mrb[0].mxu0
        %v2522 = vadd.f32 %v2438, %v2521
        %v2523 = vpop.f32.mrb[0].mxu0
        %2524 = vmatprep.mubr.f32.mxu0 %v2127
        %2525 = vmatmul.mubr.f32.gmra.mrb[0].mxu0 %v2055
        %v2526 = vpop.f32.mrb[0].mxu0
        %v2527 = vadd.f32 %v2438, %v2526
        %v2528 = vpop.f32.mrb[0].mxu0
        %2529 = vmatprep.mubr.f32.mxu0 %v2129
        %2530 = vmatmul.mubr.f32.gmra.mrb[0].mxu0 %v2056
        %v2531 = vpop.f32.mrb[0].mxu0
        %v2532 = vadd.f32 %v2438, %v2531
        %v2533 = vpop.f32.mrb[0].mxu0
        %2534 = vmatprep.mubr.f32.mxu0 %v2132
        %2535 = vmatmul.mubr.f32.gmra.mrb[0].mxu0 %v2058
        %v2536 = vpop.f32.mrb[0].mxu0
        %v2537 = vadd.f32 %v2438, %v2536
        %v2538 = vpop.f32.mrb[0].mxu0
        %2539 = vmatprep.mubr.f32.mxu0 %v2134
        %2540 = vmatmul.mubr.f32.gmra.mrb[0].mxu0 %v2059
        %v2541 = vpop.f32.mrb[0].mxu0
        %v2542 = vadd.f32 %v2438, %v2541
        %v2543 = vpop.f32.mrb[0].mxu0
        %2544 = vmatprep.mubr.f32.mxu0 %v2137
        %2545 = vmatmul.mubr.f32.gmra.mrb[0].mxu0 %v2061
        %v2546 = vpop.f32.mrb[0].mxu0
        %v2547 = vadd.f32 %v2438, %v2546
        %v2548 = vpop.f32.mrb[0].mxu0
        %2549 = vmatprep.mubr.f32.mxu0 %v2139
        %2550 = vmatmul.mubr.f32.gmra.mrb[0].mxu0 %v2062
        %v2551 = vpop.f32.mrb[0].mxu0
        %v2552 = vadd.f32 %v2438, %v2551
        %v2553 = vpop.f32.mrb[0].mxu0
        %2554 = vmatprep.mubr.f32.mxu0 %v2142
        %2555 = vmatmul.mubr.f32.gmra.mrb[0].mxu0 %v2064
        %v2556 = vpop.f32.mrb[0].mxu0
        %v2557 = vadd.f32 %v2438, %v2556
        %v2558 = vpop.f32.mrb[0].mxu0
        %2559 = vmatprep.mubr.f32.mxu0 %v2144
        %2560 = vmatmul.mubr.f32.gmra.mrb[0].mxu0 %v2065
        %v2561 = vpop.f32.mrb[0].mxu0
        %v2562 = vadd.f32 %v2438, %v2561
        %v2563 = vpop.f32.mrb[0].mxu0
        %2564 = vmatprep.mubr.f32.mxu0 %v2147
        %2565 = vmatmul.mubr.f32.gmra.mrb[0].mxu0 %v2067
        %v2566 = vpop.f32.mrb[0].mxu0
        %v2567 = vadd.f32 %v2438, %v2566
        %v2568 = vpop.f32.mrb[0].mxu0
        %2569 = vmatprep.mubr.f32.mxu0 %v2149
        %2570 = vmatmul.mubr.f32.gmra.mrb[0].mxu0 %v2068
        %v2571 = vpop.f32.mrb[0].mxu0
        %v2572 = vadd.f32 %v2438, %v2571
        %v2573 = vpop.f32.mrb[0].mxu0
        %2574 = vmatprep.mubr.f32.mxu0 %v2152
        %2575 = vmatmul.mubr.f32.gmra.mrb[0].mxu0 %v2070
        %v2576 = vpop.f32.mrb[0].mxu0
        %v2577 = vadd.f32 %v2438, %v2576
        %v2578 = vpop.f32.mrb[0].mxu0
        %2579 = vmatprep.mubr.f32.mxu0 %v2154
        %2580 = vmatmul.mubr.f32.gmra.mrb[0].mxu0 %v2071
        %v2581 = vpop.f32.mrb[0].mxu0
        %v2582 = vadd.f32 %v2438, %v2581
        %v2583 = vpop.f32.mrb[0].mxu0
        %2584 = vmatprep.mubr.f32.mxu0 %v2157
        %2585 = vmatmul.mubr.f32.gmra.mrb[0].mxu0 %v2073
        %v2586 = vpop.f32.mrb[0].mxu0
        %v2587 = vadd.f32 %v2438, %v2586
        %v2588 = vpop.f32.mrb[0].mxu0
        %2589 = vmatprep.mubr.f32.mxu0 %v2159
        %2590 = vmatmul.mubr.f32.gmra.mrb[0].mxu0 %v2074
        %v2591 = vpop.f32.mrb[0].mxu0
        %v2592 = vadd.f32 %v2438, %v2591
        %v2593 = vpop.f32.mrb[0].mxu0
        %2594 = vmatprep.mubr.f32.mxu0 %v2162
        %2595 = vmatmul.mubr.f32.gmra.mrb[0].mxu0 %v2076
        %v2596 = vpop.f32.mrb[0].mxu0
        %v2597 = vadd.f32 %v2438, %v2596
        %v2598 = vpop.f32.mrb[0].mxu0
        %2599 = vmatprep.mubr.f32.mxu0 %v2164
        %2600 = vmatmul.mubr.f32.gmra.mrb[0].mxu0 %v2077
        %v2601 = vpop.f32.mrb[0].mxu0
        %v2602 = vadd.f32 %v2438, %v2601
        %v2603 = vpop.f32.mrb[0].mxu0
        %2604 = vdwg.mxu0
        %2605 = vmatprep.subr.mxu0 0.0
        %2606 = vmatpush1.msra.mxu0 %v2321
        %2607 = vmatprep.subr.mxu0 0.0
        %2608 = vmatpush1.msra.mxu0 %v2322
        %2609 = vmatprep.subr.mxu0 0.0
        %2610 = vmatpush1.msra.mxu0 %v2323
        %2611 = vmatprep.subr.mxu0 0.0
        %2612 = vmatpush1.msra.mxu0 %v2324
        %2613 = vmatprep.subr.mxu0 0.0
        %2614 = vmatpush1.msra.mxu0 %v2325
        %2615 = vmatprep.subr.mxu0 0.0
        %2616 = vmatpush1.msra.mxu0 %v2326
        %2617 = vmatprep.subr.mxu0 0.0
        %2618 = vmatpush1.msra.mxu0 %v2327
        %2619 = vmatprep.subr.mxu0 0.0
        %2620 = vmatpush1.msra.mxu0 %v2328
        %2621 = vmatprep.subr.mxu0 0.0
        %2622 = vmatpush1.msra.mxu0 %v2329
        %2623 = vmatprep.subr.mxu0 0.0
        %2624 = vmatpush1.msra.mxu0 %v2330
        %2625 = vmatprep.subr.mxu0 0.0
        %2626 = vmatpush1.msra.mxu0 %v2331
        %2627 = vmatprep.subr.mxu0 0.0
        %2628 = vmatpush1.msra.mxu0 %v2332
        %2629 = vmatprep.subr.mxu0 0.0
        %2630 = vmatpush1.msra.mxu0 %v2333
        %2631 = vmatprep.subr.mxu0 0.0
        %2632 = vmatpush1.msra.mxu0 %v2334
        %2633 = vmatprep.subr.mxu0 0.0
        %2634 = vmatpush1.msra.mxu0 %v2335
        %2635 = vmatprep.subr.mxu0 0.0
        %2636 = vmatpush1.msra.mxu0 %v2336
        %2637 = vmatprep.subr.mxu0 0.0
        %2638 = vmatpush1.msra.mxu0 %v2337
        %2639 = vmatprep.subr.mxu0 0.0
        %2640 = vmatpush1.msra.mxu0 %v2338
        %2641 = vmatprep.subr.mxu0 0.0
        %2642 = vmatpush1.msra.mxu0 %v2339
        %2643 = vmatprep.subr.mxu0 0.0
        %2644 = vmatpush1.msra.mxu0 %v2340
        %2645 = vmatprep.subr.mxu0 0.0
        %2646 = vmatpush1.msra.mxu0 %v2341
        %2647 = vmatprep.subr.mxu0 0.0
        %2648 = vmatpush1.msra.mxu0 %v2342
        %2649 = vmatprep.subr.mxu0 0.0
        %2650 = vmatpush1.msra.mxu0 %v2343
        %2651 = vmatprep.subr.mxu0 0.0
        %2652 = vmatpush1.msra.mxu0 %v2344
        %2653 = vmatprep.subr.mxu0 0.0
        %2654 = vmatpush1.msra.mxu0 %v2345
        %2655 = vmatprep.subr.mxu0 0.0
        %2656 = vmatpush1.msra.mxu0 %v2346
        %2657 = vmatprep.subr.mxu0 0.0
        %2658 = vmatpush1.msra.mxu0 %v2347
        %2659 = vmatprep.subr.mxu0 0.0
        %2660 = vmatpush1.msra.mxu0 %v2348
        %2661 = vmatprep.subr.mxu0 0.0
        %2662 = vmatpush1.msra.mxu0 %v2349
        %2663 = vmatprep.subr.mxu0 0.0
        %2664 = vmatpush1.msra.mxu0 %v2350
        %2665 = vmatprep.subr.mxu0 0.0
        %2666 = vmatpush1.msra.mxu0 %v2351
        %2667 = vmatprep.subr.mxu0 0.0
        %2668 = vmatpush1.msra.mxu0 %v2352
        %2669 = vmatprep.mubr.f32.mxu0 %v2052
        %2670 = vmatmul.mubr.f32.gmra.mrb[0].mxu0 %v2187
        %v2671 = vpop.f32.mrb[0].mxu0
        %v2672 = vadd.f32 %v2507, %v2671
        %v2673 = vpop.f32.mrb[0].mxu0
        %2674 = vmatprep.mubr.f32.mxu0 %v2053
        %2675 = vmatmul.mubr.f32.gmra.mrb[0].mxu0 %v2189
        %v2676 = vpop.f32.mrb[0].mxu0
        %v2677 = vadd.f32 %v2512, %v2676
        %v2678 = vpop.f32.mrb[0].mxu0
        %2679 = vmatprep.mubr.f32.mxu0 %v2055
        %2680 = vmatmul.mubr.f32.gmra.mrb[0].mxu0 %v2192
        %v2681 = vpop.f32.mrb[0].mxu0
        %v2682 = vadd.f32 %v2517, %v2681
        %v2683 = vpop.f32.mrb[0].mxu0
        %2684 = vmatprep.mubr.f32.mxu0 %v2056
        %2685 = vmatmul.mubr.f32.gmra.mrb[0].mxu0 %v2194
        %v2686 = vpop.f32.mrb[0].mxu0
        %v2687 = vadd.f32 %v2522, %v2686
        %v2688 = vpop.f32.mrb[0].mxu0
        %2689 = vmatprep.mubr.f32.mxu0 %v2058
        %2690 = vmatmul.mubr.f32.gmra.mrb[0].mxu0 %v2197
        %v2691 = vpop.f32.mrb[0].mxu0
        %v2692 = vadd.f32 %v2527, %v2691
        %v2693 = vpop.f32.mrb[0].mxu0
        %2694 = vmatprep.mubr.f32.mxu0 %v2059
        %2695 = vmatmul.mubr.f32.gmra.mrb[0].mxu0 %v2199
        %v2696 = vpop.f32.mrb[0].mxu0
        %v2697 = vadd.f32 %v2532, %v2696
        %v2698 = vpop.f32.mrb[0].mxu0
        %2699 = vmatprep.mubr.f32.mxu0 %v2061
        %2700 = vmatmul.mubr.f32.gmra.mrb[0].mxu0 %v2202
        %v2701 = vpop.f32.mrb[0].mxu0
        %v2702 = vadd.f32 %v2537, %v2701
        %v2703 = vpop.f32.mrb[0].mxu0
        %2704 = vmatprep.mubr.f32.mxu0 %v2062
        %2705 = vmatmul.mubr.f32.gmra.mrb[0].mxu0 %v2204
        %v2706 = vpop.f32.mrb[0].mxu0
        %v2707 = vadd.f32 %v2542, %v2706
        %v2708 = vpop.f32.mrb[0].mxu0
        %2709 = vmatprep.mubr.f32.mxu0 %v2064
        %2710 = vmatmul.mubr.f32.gmra.mrb[0].mxu0 %v2207
        %v2711 = vpop.f32.mrb[0].mxu0
        %v2712 = vadd.f32 %v2547, %v2711
        %v2713 = vpop.f32.mrb[0].mxu0
        %2714 = vmatprep.mubr.f32.mxu0 %v2065
        %2715 = vmatmul.mubr.f32.gmra.mrb[0].mxu0 %v2209
        %v2716 = vpop.f32.mrb[0].mxu0
        %v2717 = vadd.f32 %v2552, %v2716
        %v2718 = vpop.f32.mrb[0].mxu0
        %2719 = vmatprep.mubr.f32.mxu0 %v2067
        %2720 = vmatmul.mubr.f32.gmra.mrb[0].mxu0 %v2212
        %v2721 = vpop.f32.mrb[0].mxu0
        %v2722 = vadd.f32 %v2557, %v2721
        %v2723 = vpop.f32.mrb[0].mxu0
        %2724 = vmatprep.mubr.f32.mxu0 %v2068
        %2725 = vmatmul.mubr.f32.gmra.mrb[0].mxu0 %v2214
        %v2726 = vpop.f32.mrb[0].mxu0
        %v2727 = vadd.f32 %v2562, %v2726
        %v2728 = vpop.f32.mrb[0].mxu0
        %2729 = vmatprep.mubr.f32.mxu0 %v2070
        %2730 = vmatmul.mubr.f32.gmra.mrb[0].mxu0 %v2217
        %v2731 = vpop.f32.mrb[0].mxu0
        %v2732 = vadd.f32 %v2567, %v2731
        %v2733 = vpop.f32.mrb[0].mxu0
        %2734 = vmatprep.mubr.f32.mxu0 %v2071
        %2735 = vmatmul.mubr.f32.gmra.mrb[0].mxu0 %v2219
        %v2736 = vpop.f32.mrb[0].mxu0
        %v2737 = vadd.f32 %v2572, %v2736
        %v2738 = vpop.f32.mrb[0].mxu0
        %2739 = vmatprep.mubr.f32.mxu0 %v2073
        %2740 = vmatmul.mubr.f32.gmra.mrb[0].mxu0 %v2222
        %v2741 = vpop.f32.mrb[0].mxu0
        %v2742 = vadd.f32 %v2577, %v2741
        %v2743 = vpop.f32.mrb[0].mxu0
        %2744 = vmatprep.mubr.f32.mxu0 %v2074
        %2745 = vmatmul.mubr.f32.gmra.mrb[0].mxu0 %v2224
        %v2746 = vpop.f32.mrb[0].mxu0
        %v2747 = vadd.f32 %v2582, %v2746
        %v2748 = vpop.f32.mrb[0].mxu0
        %2749 = vmatprep.mubr.f32.mxu0 %v2076
        %2750 = vmatmul.mubr.f32.gmra.mrb[0].mxu0 %v2227
        %v2751 = vpop.f32.mrb[0].mxu0
        %v2752 = vadd.f32 %v2587, %v2751
        %v2753 = vpop.f32.mrb[0].mxu0
        %2754 = vmatprep.mubr.f32.mxu0 %v2077
        %2755 = vmatmul.mubr.f32.gmra.mrb[0].mxu0 %v2229
        %v2756 = vpop.f32.mrb[0].mxu0
        %v2757 = vadd.f32 %v2592, %v2756
        %v2758 = vpop.f32.mrb[0].mxu0
        %2759 = vmatprep.mubr.f32.mxu0 %v2079
        %2760 = vmatmul.mubr.f32.gmra.mrb[0].mxu0 %v2232
        %v2761 = vpop.f32.mrb[0].mxu0
        %v2762 = vadd.f32 %v2597, %v2761
        %v2763 = vpop.f32.mrb[0].mxu0
        %2764 = vmatprep.mubr.f32.mxu0 %v2080
        %2765 = vmatmul.mubr.f32.gmra.mrb[0].mxu0 %v2234
        %v2766 = vpop.f32.mrb[0].mxu0
        %v2767 = vadd.f32 %v2602, %v2766
        %v2768 = vpop.f32.mrb[0].mxu0
        %2769 = vdwg.mxu0
        %2770 = vmatprep.subr.mxu0 0.0
        %2771 = vmatpush1.msra.mxu0 %v2353
        %2772 = vmatprep.subr.mxu0 0.0
        %2773 = vmatpush1.msra.mxu0 %v2354
        %2774 = vmatprep.subr.mxu0 0.0
        %2775 = vmatpush1.msra.mxu0 %v2355
        %2776 = vmatprep.subr.mxu0 0.0
        %2777 = vmatpush1.msra.mxu0 %v2356
        %2778 = vmatprep.subr.mxu0 0.0
        %2779 = vmatpush1.msra.mxu0 %v2357
        %2780 = vmatprep.subr.mxu0 0.0
        %2781 = vmatpush1.msra.mxu0 %v2358
        %2782 = vmatprep.subr.mxu0 0.0
        %2783 = vmatpush1.msra.mxu0 %v2359
        %2784 = vmatprep.subr.mxu0 0.0
        %2785 = vmatpush1.msra.mxu0 %v2360
        %2786 = vmatprep.subr.mxu0 0.0
        %2787 = vmatpush1.msra.mxu0 %v2361
        %2788 = vmatprep.subr.mxu0 0.0
        %2789 = vmatpush1.msra.mxu0 %v2362
        %2790 = vmatprep.subr.mxu0 0.0
        %2791 = vmatpush1.msra.mxu0 %v2363
        %2792 = vmatprep.subr.mxu0 0.0
        %2793 = vmatpush1.msra.mxu0 %v2364
        %2794 = vmatprep.subr.mxu0 0.0
        %2795 = vmatpush1.msra.mxu0 %v2365
        %2796 = vmatprep.subr.mxu0 0.0
        %2797 = vmatpush1.msra.mxu0 %v2366
        %2798 = vmatprep.subr.mxu0 0.0
        %2799 = vmatpush1.msra.mxu0 %v2367
        %2800 = vmatprep.subr.mxu0 0.0
        %2801 = vmatpush1.msra.mxu0 %v2368
        %2802 = vmatprep.subr.mxu0 0.0
        %2803 = vmatpush1.msra.mxu0 %v2369
        %2804 = vmatprep.subr.mxu0 0.0
        %2805 = vmatpush1.msra.mxu0 %v2370
        %2806 = vmatprep.subr.mxu0 0.0
        %2807 = vmatpush1.msra.mxu0 %v2371
        %2808 = vmatprep.subr.mxu0 0.0
        %2809 = vmatpush1.msra.mxu0 %v2372
        %2810 = vmatprep.subr.mxu0 0.0
        %2811 = vmatpush1.msra.mxu0 %v2373
        %2812 = vmatprep.subr.mxu0 0.0
        %2813 = vmatpush1.msra.mxu0 %v2374
        %2814 = vmatprep.subr.mxu0 0.0
        %2815 = vmatpush1.msra.mxu0 %v2375
        %2816 = vmatprep.subr.mxu0 0.0
        %2817 = vmatpush1.msra.mxu0 %v2376
        %2818 = vmatprep.subr.mxu0 0.0
        %2819 = vmatpush1.msra.mxu0 %v2377
        %2820 = vmatprep.subr.mxu0 0.0
        %2821 = vmatpush1.msra.mxu0 %v2378
        %2822 = vmatprep.subr.mxu0 0.0
        %2823 = vmatpush1.msra.mxu0 %v2379
        %2824 = vmatprep.subr.mxu0 0.0
        %2825 = vmatpush1.msra.mxu0 %v2380
        %2826 = vmatprep.subr.mxu0 0.0
        %2827 = vmatpush1.msra.mxu0 %v2381
        %2828 = vmatprep.subr.mxu0 0.0
        %2829 = vmatpush1.msra.mxu0 %v2382
        %2830 = vmatprep.subr.mxu0 0.0
        %2831 = vmatpush1.msra.mxu0 %v2383
        %2832 = vmatprep.subr.mxu0 0.0
        %2833 = vmatpush1.msra.mxu0 %v2384
        %2834 = vmatprep.mubr.f32.mxu0 %v2192
        %2835 = vmatmul.mubr.f32.gmra.mrb[0].mxu0 %v2122
        %v2836 = vpop.f32.mrb[0].mxu0
        %v2837 = vadd.f32 %v2672, %v2836
        %v2838 = vpop.f32.mrb[0].mxu0
        %2839 = vmatprep.mubr.f32.mxu0 %v2194
        %2840 = vmatmul.mubr.f32.gmra.mrb[0].mxu0 %v2124
        %v2841 = vpop.f32.mrb[0].mxu0
        %v2842 = vadd.f32 %v2677, %v2841
        %v2843 = vpop.f32.mrb[0].mxu0
        %2844 = vmatprep.mubr.f32.mxu0 %v2197
        %2845 = vmatmul.mubr.f32.gmra.mrb[0].mxu0 %v2127
        %v2846 = vpop.f32.mrb[0].mxu0
        %v2847 = vadd.f32 %v2682, %v2846
        %v2848 = vpop.f32.mrb[0].mxu0
        %2849 = vmatprep.mubr.f32.mxu0 %v2199
        %2850 = vmatmul.mubr.f32.gmra.mrb[0].mxu0 %v2129
        %v2851 = vpop.f32.mrb[0].mxu0
        %v2852 = vadd.f32 %v2687, %v2851
        %v2853 = vpop.f32.mrb[0].mxu0
        %2854 = vmatprep.mubr.f32.mxu0 %v2202
        %2855 = vmatmul.mubr.f32.gmra.mrb[0].mxu0 %v2132
        %v2856 = vpop.f32.mrb[0].mxu0
        %v2857 = vadd.f32 %v2692, %v2856
        %v2858 = vpop.f32.mrb[0].mxu0
        %2859 = vmatprep.mubr.f32.mxu0 %v2204
        %2860 = vmatmul.mubr.f32.gmra.mrb[0].mxu0 %v2134
        %v2861 = vpop.f32.mrb[0].mxu0
        %v2862 = vadd.f32 %v2697, %v2861
        %v2863 = vpop.f32.mrb[0].mxu0
        %2864 = vmatprep.mubr.f32.mxu0 %v2207
        %2865 = vmatmul.mubr.f32.gmra.mrb[0].mxu0 %v2137
        %v2866 = vpop.f32.mrb[0].mxu0
        %v2867 = vadd.f32 %v2702, %v2866
        %v2868 = vpop.f32.mrb[0].mxu0
        %2869 = vmatprep.mubr.f32.mxu0 %v2209
        %2870 = vmatmul.mubr.f32.gmra.mrb[0].mxu0 %v2139
        %v2871 = vpop.f32.mrb[0].mxu0
        %v2872 = vadd.f32 %v2707, %v2871
        %v2873 = vpop.f32.mrb[0].mxu0
        %2874 = vmatprep.mubr.f32.mxu0 %v2212
        %2875 = vmatmul.mubr.f32.gmra.mrb[0].mxu0 %v2142
        %v2876 = vpop.f32.mrb[0].mxu0
        %v2877 = vadd.f32 %v2712, %v2876
        %v2878 = vpop.f32.mrb[0].mxu0
        %2879 = vmatprep.mubr.f32.mxu0 %v2214
        %2880 = vmatmul.mubr.f32.gmra.mrb[0].mxu0 %v2144
        %v2881 = vpop.f32.mrb[0].mxu0
        %v2882 = vadd.f32 %v2717, %v2881
        %v2883 = vpop.f32.mrb[0].mxu0
        %2884 = vmatprep.mubr.f32.mxu0 %v2217
        %2885 = vmatmul.mubr.f32.gmra.mrb[0].mxu0 %v2147
        %v2886 = vpop.f32.mrb[0].mxu0
        %v2887 = vadd.f32 %v2722, %v2886
        %v2888 = vpop.f32.mrb[0].mxu0
        %2889 = vmatprep.mubr.f32.mxu0 %v2219
        %2890 = vmatmul.mubr.f32.gmra.mrb[0].mxu0 %v2149
        %v2891 = vpop.f32.mrb[0].mxu0
        %v2892 = vadd.f32 %v2727, %v2891
        %v2893 = vpop.f32.mrb[0].mxu0
        %2894 = vmatprep.mubr.f32.mxu0 %v2222
        %2895 = vmatmul.mubr.f32.gmra.mrb[0].mxu0 %v2152
        %v2896 = vpop.f32.mrb[0].mxu0
        %v2897 = vadd.f32 %v2732, %v2896
        %v2898 = vpop.f32.mrb[0].mxu0
        %2899 = vmatprep.mubr.f32.mxu0 %v2224
        %2900 = vmatmul.mubr.f32.gmra.mrb[0].mxu0 %v2154
        %v2901 = vpop.f32.mrb[0].mxu0
        %v2902 = vadd.f32 %v2737, %v2901
        %v2903 = vpop.f32.mrb[0].mxu0
        %2904 = vmatprep.mubr.f32.mxu0 %v2227
        %2905 = vmatmul.mubr.f32.gmra.mrb[0].mxu0 %v2157
        %v2906 = vpop.f32.mrb[0].mxu0
        %v2907 = vadd.f32 %v2742, %v2906
        %v2908 = vpop.f32.mrb[0].mxu0
        %2909 = vmatprep.mubr.f32.mxu0 %v2229
        %2910 = vmatmul.mubr.f32.gmra.mrb[0].mxu0 %v2159
        %v2911 = vpop.f32.mrb[0].mxu0
        %v2912 = vadd.f32 %v2747, %v2911
        %v2913 = vpop.f32.mrb[0].mxu0
        %2914 = vmatprep.mubr.f32.mxu0 %v2232
        %2915 = vmatmul.mubr.f32.gmra.mrb[0].mxu0 %v2162
        %v2916 = vpop.f32.mrb[0].mxu0
        %v2917 = vadd.f32 %v2752, %v2916
        %v2918 = vpop.f32.mrb[0].mxu0
        %2919 = vmatprep.mubr.f32.mxu0 %v2234
        %2920 = vmatmul.mubr.f32.gmra.mrb[0].mxu0 %v2164
        %v2921 = vpop.f32.mrb[0].mxu0
        %v2922 = vadd.f32 %v2757, %v2921
        %v2923 = vpop.f32.mrb[0].mxu0
        %2924 = vmatprep.mubr.f32.mxu0 %v2267
        %2925 = vmatmul.mubr.f32.gmra.mrb[0].mxu0 %v2260
        %v2926 = vpop.f32.mrb[0].mxu0
        %v2927 = vadd.f32 %v2762, %v2926
        %v2928 = vpop.f32.mrb[0].mxu0
        %2929 = vmatprep.mubr.f32.mxu0 %v2269
        %2930 = vmatmul.mubr.f32.gmra.mrb[0].mxu0 %v2262
        %v2931 = vpop.f32.mrb[0].mxu0
        %v2932 = vadd.f32 %v2767, %v2931
        %v2933 = vpop.f32.mrb[0].mxu0
        %2934 = vdwg.mxu0
        %2935 = vmatprep.subr.mxu0 0.0
        %2936 = vmatpush1.msra.mxu0 %v2385
        %2937 = vmatprep.subr.mxu0 0.0
        %2938 = vmatpush1.msra.mxu0 %v2386
        %2939 = vmatprep.subr.mxu0 0.0
        %2940 = vmatpush1.msra.mxu0 %v2387
        %2941 = vmatprep.subr.mxu0 0.0
        %2942 = vmatpush1.msra.mxu0 %v2388
        %2943 = vmatprep.subr.mxu0 0.0
        %2944 = vmatpush1.msra.mxu0 %v2389
        %2945 = vmatprep.subr.mxu0 0.0
        %2946 = vmatpush1.msra.mxu0 %v2390
        %2947 = vmatprep.subr.mxu0 0.0
        %2948 = vmatpush1.msra.mxu0 %v2391
        %2949 = vmatprep.subr.mxu0 0.0
        %2950 = vmatpush1.msra.mxu0 %v2392
        %2951 = vmatprep.subr.mxu0 0.0
        %2952 = vmatpush1.msra.mxu0 %v2393
        %2953 = vmatprep.subr.mxu0 0.0
        %2954 = vmatpush1.msra.mxu0 %v2394
        %2955 = vmatprep.subr.mxu0 0.0
        %2956 = vmatpush1.msra.mxu0 %v2395
        %2957 = vmatprep.subr.mxu0 0.0
        %2958 = vmatpush1.msra.mxu0 %v2396
        %2959 = vmatprep.subr.mxu0 0.0
        %2960 = vmatpush1.msra.mxu0 %v2397
        %2961 = vmatprep.subr.mxu0 0.0
        %2962 = vmatpush1.msra.mxu0 %v2398
        %2963 = vmatprep.subr.mxu0 0.0
        %2964 = vmatpush1.msra.mxu0 %v2399
        %2965 = vmatprep.subr.mxu0 0.0
        %2966 = vmatpush1.msra.mxu0 %v2400
        %2967 = vmatprep.subr.mxu0 0.0
        %2968 = vmatpush1.msra.mxu0 %v2401
        %2969 = vmatprep.subr.mxu0 0.0
        %2970 = vmatpush1.msra.mxu0 %v2402
        %2971 = vmatprep.subr.mxu0 0.0
        %2972 = vmatpush1.msra.mxu0 %v2403
        %2973 = vmatprep.subr.mxu0 0.0
        %2974 = vmatpush1.msra.mxu0 %v2404
        %2975 = vmatprep.subr.mxu0 0.0
        %2976 = vmatpush1.msra.mxu0 %v2405
        %2977 = vmatprep.subr.mxu0 0.0
        %2978 = vmatpush1.msra.mxu0 %v2406
        %2979 = vmatprep.subr.mxu0 0.0
        %2980 = vmatpush1.msra.mxu0 %v2407
        %2981 = vmatprep.subr.mxu0 0.0
        %2982 = vmatpush1.msra.mxu0 %v2408
        %2983 = vmatprep.subr.mxu0 0.0
        %2984 = vmatpush1.msra.mxu0 %v2409
        %2985 = vmatprep.subr.mxu0 0.0
        %2986 = vmatpush1.msra.mxu0 %v2410
        %2987 = vmatprep.subr.mxu0 0.0
        %2988 = vmatpush1.msra.mxu0 %v2411
        %2989 = vmatprep.subr.mxu0 0.0
        %2990 = vmatpush1.msra.mxu0 %v2412
        %2991 = vmatprep.subr.mxu0 0.0
        %2992 = vmatpush1.msra.mxu0 %v2413
        %2993 = vmatprep.subr.mxu0 0.0
        %2994 = vmatpush1.msra.mxu0 %v2414
        %2995 = vmatprep.subr.mxu0 0.0
        %2996 = vmatpush1.msra.mxu0 %v2415
        %2997 = vmatprep.subr.mxu0 0.0
        %2998 = vmatpush1.msra.mxu0 %v2416
        %2999 = vmatprep.mubr.f32.mxu0 %v2127
        %3000 = vmatmul.mubr.f32.gmra.mrb[0].mxu0 %v2055
        %v3001 = vpop.f32.mrb[0].mxu0
        %v3002 = vadd.f32 %v2837, %v3001
        %v3003 = vpop.f32.mrb[0].mxu0
        %3004 = vmatprep.mubr.f32.mxu0 %v2129
        %3005 = vmatmul.mubr.f32.gmra.mrb[0].mxu0 %v2056
        %v3006 = vpop.f32.mrb[0].mxu0
        %v3007 = vadd.f32 %v2842, %v3006
        %v3008 = vpop.f32.mrb[0].mxu0
        %3009 = vmatprep.mubr.f32.mxu0 %v2132
        %3010 = vmatmul.mubr.f32.gmra.mrb[0].mxu0 %v2058
        %v3011 = vpop.f32.mrb[0].mxu0
        %v3012 = vadd.f32 %v2847, %v3011
        %v3013 = vpop.f32.mrb[0].mxu0
        %3014 = vmatprep.mubr.f32.mxu0 %v2134
        %3015 = vmatmul.mubr.f32.gmra.mrb[0].mxu0 %v2059
        %v3016 = vpop.f32.mrb[0].mxu0
        %v3017 = vadd.f32 %v2852, %v3016
        %v3018 = vpop.f32.mrb[0].mxu0
        %3019 = vmatprep.mubr.f32.mxu0 %v2137
        %3020 = vmatmul.mubr.f32.gmra.mrb[0].mxu0 %v2061
        %v3021 = vpop.f32.mrb[0].mxu0
        %v3022 = vadd.f32 %v2857, %v3021
        %v3023 = vpop.f32.mrb[0].mxu0
        %3024 = vmatprep.mubr.f32.mxu0 %v2139
        %3025 = vmatmul.mubr.f32.gmra.mrb[0].mxu0 %v2062
        %v3026 = vpop.f32.mrb[0].mxu0
        %v3027 = vadd.f32 %v2862, %v3026
        %v3028 = vpop.f32.mrb[0].mxu0
        %3029 = vmatprep.mubr.f32.mxu0 %v2142
        %3030 = vmatmul.mubr.f32.gmra.mrb[0].mxu0 %v2064
        %v3031 = vpop.f32.mrb[0].mxu0
        %v3032 = vadd.f32 %v2867, %v3031
        %v3033 = vpop.f32.mrb[0].mxu0
        %3034 = vmatprep.mubr.f32.mxu0 %v2144
        %3035 = vmatmul.mubr.f32.gmra.mrb[0].mxu0 %v2065
        %v3036 = vpop.f32.mrb[0].mxu0
        %v3037 = vadd.f32 %v2872, %v3036
        %v3038 = vpop.f32.mrb[0].mxu0
        %3039 = vmatprep.mubr.f32.mxu0 %v2147
        %3040 = vmatmul.mubr.f32.gmra.mrb[0].mxu0 %v2067
        %v3041 = vpop.f32.mrb[0].mxu0
        %v3042 = vadd.f32 %v2877, %v3041
        %v3043 = vpop.f32.mrb[0].mxu0
        %3044 = vmatprep.mubr.f32.mxu0 %v2149
        %3045 = vmatmul.mubr.f32.gmra.mrb[0].mxu0 %v2068
        %v3046 = vpop.f32.mrb[0].mxu0
        %v3047 = vadd.f32 %v2882, %v3046
        %v3048 = vpop.f32.mrb[0].mxu0
        %3049 = vmatprep.mubr.f32.mxu0 %v2152
        %3050 = vmatmul.mubr.f32.gmra.mrb[0].mxu0 %v2070
        %v3051 = vpop.f32.mrb[0].mxu0
        %v3052 = vadd.f32 %v2887, %v3051
        %v3053 = vpop.f32.mrb[0].mxu0
        %3054 = vmatprep.mubr.f32.mxu0 %v2154
        %3055 = vmatmul.mubr.f32.gmra.mrb[0].mxu0 %v2071
        %v3056 = vpop.f32.mrb[0].mxu0
        %v3057 = vadd.f32 %v2892, %v3056
        %v3058 = vpop.f32.mrb[0].mxu0
        %3059 = vmatprep.mubr.f32.mxu0 %v2157
        %3060 = vmatmul.mubr.f32.gmra.mrb[0].mxu0 %v2073
        %v3061 = vpop.f32.mrb[0].mxu0
        %v3062 = vadd.f32 %v2897, %v3061
        %v3063 = vpop.f32.mrb[0].mxu0
        %3064 = vmatprep.mubr.f32.mxu0 %v2159
        %3065 = vmatmul.mubr.f32.gmra.mrb[0].mxu0 %v2074
        %v3066 = vpop.f32.mrb[0].mxu0
        %v3067 = vadd.f32 %v2902, %v3066
        %v3068 = vpop.f32.mrb[0].mxu0
        %3069 = vmatprep.mubr.f32.mxu0 %v2162
        %3070 = vmatmul.mubr.f32.gmra.mrb[0].mxu0 %v2076
        %v3071 = vpop.f32.mrb[0].mxu0
        %v3072 = vadd.f32 %v2907, %v3071
        %v3073 = vpop.f32.mrb[0].mxu0
        %3074 = vmatprep.mubr.f32.mxu0 %v2164
        %3075 = vmatmul.mubr.f32.gmra.mrb[0].mxu0 %v2077
        %v3076 = vpop.f32.mrb[0].mxu0
        %v3077 = vadd.f32 %v2912, %v3076
        %v3078 = vpop.f32.mrb[0].mxu0
        %3079 = vmatprep.mubr.f32.mxu0 %v2260
        %3080 = vmatmul.mubr.f32.gmra.mrb[0].mxu0 %v2079
        %v3081 = vpop.f32.mrb[0].mxu0
        %v3082 = vadd.f32 %v2917, %v3081
        %v3083 = vpop.f32.mrb[0].mxu0
        %3084 = vmatprep.mubr.f32.mxu0 %v2262
        %3085 = vmatmul.mubr.f32.gmra.mrb[0].mxu0 %v2080
        %v3086 = vpop.f32.mrb[0].mxu0
        %v3087 = vadd.f32 %v2922, %v3086
        %v3088 = vpop.f32.mrb[0].mxu0
        %3089 = vmatprep.mubr.f32.mxu0 %v2277
        %3090 = vmatmul.mubr.f32.gmra.mrb[0].mxu0 %v2082
        %v3091 = vpop.f32.mrb[0].mxu0
        %v3092 = vadd.f32 %v2927, %v3091
        %v3093 = vpop.f32.mrb[0].mxu0
        %3094 = vmatprep.mubr.f32.mxu0 %v2279
        %3095 = vmatmul.mubr.f32.gmra.mrb[0].mxu0 %v2083
        %v3096 = vpop.f32.mrb[0].mxu0
        %v3097 = vadd.f32 %v2932, %v3096
        %v3098 = vpop.f32.mrb[0].mxu0
        %3099 = vdwg.mxu0
        %3100 = vmatprep.subr.mxu0 0.0
        %3101 = vmatpush1.msra.mxu0 %v2417
        %3102 = vmatprep.subr.mxu0 0.0
        %3103 = vmatpush1.msra.mxu0 %v2418
        %3104 = vmatprep.subr.mxu0 0.0
        %3105 = vmatpush1.msra.mxu0 %v2419
        %3106 = vmatprep.subr.mxu0 0.0
        %3107 = vmatpush1.msra.mxu0 %v2420
        %3108 = vmatprep.subr.mxu0 0.0
        %3109 = vmatpush1.msra.mxu0 %v2421
        %3110 = vmatprep.subr.mxu0 0.0
        %3111 = vmatpush1.msra.mxu0 %v2422
        %3112 = vmatprep.subr.mxu0 0.0
        %3113 = vmatpush1.msra.mxu0 %v2423
        %3114 = vmatprep.subr.mxu0 0.0
        %3115 = vmatpush1.msra.mxu0 %v2424
        %3116 = vmatprep.subr.mxu0 0.0
        %3117 = vmatpush1.msra.mxu0 %v2425
        %3118 = vmatprep.subr.mxu0 0.0
        %3119 = vmatpush1.msra.mxu0 %v2426
        %3120 = vmatprep.subr.mxu0 0.0
        %3121 = vmatpush1.msra.mxu0 %v2427
        %3122 = vmatprep.subr.mxu0 0.0
        %3123 = vmatpush1.msra.mxu0 %v2428
        %3124 = vmatprep.subr.mxu0 0.0
        %3125 = vmatpush1.msra.mxu0 %v2429
        %3126 = vmatprep.subr.mxu0 0.0
        %3127 = vmatpush1.msra.mxu0 %v2430
        %3128 = vmatprep.subr.mxu0 0.0
        %3129 = vmatpush1.msra.mxu0 %v2431
        %3130 = vmatprep.subr.mxu0 0.0
        %3131 = vmatpush1.msra.mxu0 %v2432
        %3132 = vmatprep.subr.mxu0 0.0
        %3133 = vmatpush1.msra.mxu0 0.0
        %3134 = vmatprep.subr.mxu0 0.0
        %3135 = vmatpush1.msra.mxu0 0.0
        %3136 = vmatprep.subr.mxu0 0.0
        %3137 = vmatpush1.msra.mxu0 0.0
        %3138 = vmatprep.subr.mxu0 0.0
        %3139 = vmatpush1.msra.mxu0 0.0
        %3140 = vmatprep.subr.mxu0 0.0
        %3141 = vmatpush1.msra.mxu0 0.0
        %3142 = vmatprep.subr.mxu0 0.0
        %3143 = vmatpush1.msra.mxu0 0.0
        %3144 = vmatprep.subr.mxu0 0.0
        %3145 = vmatpush1.msra.mxu0 0.0
        %3146 = vmatprep.subr.mxu0 0.0
        %3147 = vmatpush1.msra.mxu0 0.0
        %3148 = vmatprep.subr.mxu0 0.0
        %3149 = vmatpush1.msra.mxu0 0.0
        %3150 = vmatprep.subr.mxu0 0.0
        %3151 = vmatpush1.msra.mxu0 0.0
        %3152 = vmatprep.subr.mxu0 0.0
        %3153 = vmatpush1.msra.mxu0 0.0
        %3154 = vmatprep.subr.mxu0 0.0
        %3155 = vmatpush1.msra.mxu0 0.0
        %3156 = vmatprep.subr.mxu0 0.0
        %3157 = vmatpush1.msra.mxu0 0.0
        %3158 = vmatprep.subr.mxu0 0.0
        %3159 = vmatpush1.msra.mxu0 0.0
        %3160 = vmatprep.subr.mxu0 0.0
        %3161 = vmatpush1.msra.mxu0 0.0
        %3162 = vmatprep.subr.mxu0 0.0
        %3163 = vmatpush1.msra.mxu0 0.0
        %3164 = vmatprep.mubr.f32.mxu0 0.0
        %3165 = vmatmul.mubr.f32.gmra.mrb[0].mxu0 %v2197
        %v3166 = vpop.f32.mrb[0].mxu0
        %v3167 = vadd.f32 %v3002, %v3166
        %v3168 = vpop.f32.mrb[0].mxu0
        %3169 = vmatprep.mubr.f32.mxu0 0.0
        %3170 = vmatmul.mubr.f32.gmra.mrb[0].mxu0 %v2199
        %v3171 = vpop.f32.mrb[0].mxu0
        %v3172 = vadd.f32 %v3007, %v3171
        %v3173 = vpop.f32.mrb[0].mxu0
        %3174 = vmatprep.mubr.f32.mxu0 0.0
        %3175 = vmatmul.mubr.f32.gmra.mrb[0].mxu0 %v2202
        %v3176 = vpop.f32.mrb[0].mxu0
        %v3177 = vadd.f32 %v3012, %v3176
        %v3178 = vpop.f32.mrb[0].mxu0
        %3179 = vmatprep.mubr.f32.mxu0 0.0
        %3180 = vmatmul.mubr.f32.gmra.mrb[0].mxu0 %v2204
        %v3181 = vpop.f32.mrb[0].mxu0
        %v3182 = vadd.f32 %v3017, %v3181
        %v3183 = vpop.f32.mrb[0].mxu0
        %3184 = vmatprep.mubr.f32.mxu0 0.0
        %3185 = vmatmul.mubr.f32.gmra.mrb[0].mxu0 %v2207
        %v3186 = vpop.f32.mrb[0].mxu0
        %v3187 = vadd.f32 %v3022, %v3186
        %v3188 = vpop.f32.mrb[0].mxu0
        %3189 = vmatprep.mubr.f32.mxu0 0.0
        %3190 = vmatmul.mubr.f32.gmra.mrb[0].mxu0 %v2209
        %v3191 = vpop.f32.mrb[0].mxu0
        %v3192 = vadd.f32 %v3027, %v3191
        %v3193 = vpop.f32.mrb[0].mxu0
        %3194 = vmatprep.mubr.f32.mxu0 0.0
        %3195 = vmatmul.mubr.f32.gmra.mrb[0].mxu0 %v2212
        %v3196 = vpop.f32.mrb[0].mxu0
        %v3197 = vadd.f32 %v3032, %v3196
        %v3198 = vpop.f32.mrb[0].mxu0
        %3199 = vmatprep.mubr.f32.mxu0 0.0
        %3200 = vmatmul.mubr.f32.gmra.mrb[0].mxu0 %v2214
        %v3201 = vpop.f32.mrb[0].mxu0
        %v3202 = vadd.f32 %v3037, %v3201
        %v3203 = vpop.f32.mrb[0].mxu0
        %3204 = vmatprep.mubr.f32.mxu0 0.0
        %3205 = vmatmul.mubr.f32.gmra.mrb[0].mxu0 %v2217
        %v3206 = vpop.f32.mrb[0].mxu0
        %v3207 = vadd.f32 %v3042, %v3206
        %v3208 = vpop.f32.mrb[0].mxu0
        %3209 = vmatprep.mubr.f32.mxu0 0.0
        %3210 = vmatmul.mubr.f32.gmra.mrb[0].mxu0 %v2219
        %v3211 = vpop.f32.mrb[0].mxu0
        %v3212 = vadd.f32 %v3047, %v3211
        %v3213 = vpop.f32.mrb[0].mxu0
        %3214 = vmatprep.mubr.f32.mxu0 0.0
        %3215 = vmatmul.mubr.f32.gmra.mrb[0].mxu0 %v2222
        %v3216 = vpop.f32.mrb[0].mxu0
        %v3217 = vadd.f32 %v3052, %v3216
        %v3218 = vpop.f32.mrb[0].mxu0
        %3219 = vmatprep.mubr.f32.mxu0 0.0
        %3220 = vmatmul.mubr.f32.gmra.mrb[0].mxu0 %v2224
        %v3221 = vpop.f32.mrb[0].mxu0
        %v3222 = vadd.f32 %v3057, %v3221
        %v3223 = vpop.f32.mrb[0].mxu0
        %3224 = vmatprep.mubr.f32.mxu0 0.0
        %3225 = vmatmul.mubr.f32.gmra.mrb[0].mxu0 %v2227
        %v3226 = vpop.f32.mrb[0].mxu0
        %v3227 = vadd.f32 %v3062, %v3226
        %v3228 = vpop.f32.mrb[0].mxu0
        %3229 = vmatprep.mubr.f32.mxu0 0.0
        %3230 = vmatmul.mubr.f32.gmra.mrb[0].mxu0 %v2229
        %v3231 = vpop.f32.mrb[0].mxu0
        %v3232 = vadd.f32 %v3067, %v3231
        %v3233 = vpop.f32.mrb[0].mxu0
        %3234 = vmatprep.mubr.f32.mxu0 0.0
        %3235 = vmatmul.mubr.f32.gmra.mrb[0].mxu0 %v2232
        %v3236 = vpop.f32.mrb[0].mxu0
        %v3237 = vadd.f32 %v3072, %v3236
        %v3238 = vpop.f32.mrb[0].mxu0
        %3239 = vmatprep.mubr.f32.mxu0 0.0
        %3240 = vmatmul.mubr.f32.gmra.mrb[0].mxu0 %v2234
        %v3241 = vpop.f32.mrb[0].mxu0
        %v3242 = vadd.f32 %v3077, %v3241
        %v3243 = vpop.f32.mrb[0].mxu0
        %3244 = vmatprep.mubr.f32.mxu0 0.0
        %3245 = vmatmul.mubr.f32.gmra.mrb[0].mxu0 %v2267
        %v3246 = vpop.f32.mrb[0].mxu0
        %v3247 = vadd.f32 %v3082, %v3246
        %v3248 = vpop.f32.mrb[0].mxu0
        %3249 = vmatprep.mubr.f32.mxu0 0.0
        %3250 = vmatmul.mubr.f32.gmra.mrb[0].mxu0 %v2269
        %v3251 = vpop.f32.mrb[0].mxu0
        %v3252 = vadd.f32 %v3087, %v3251
        %v3253 = vpop.f32.mrb[0].mxu0
        %3254 = vmatprep.mubr.f32.mxu0 0.0
        %3255 = vmatmul.mubr.f32.gmra.mrb[0].mxu0 %v2284
        %v3256 = vpop.f32.mrb[0].mxu0
        %v3257 = vadd.f32 %v3092, %v3256
        %v3258 = vpop.f32.mrb[0].mxu0
        %3259 = vmatprep.mubr.f32.mxu0 0.0
        %3260 = vmatmul.mubr.f32.gmra.mrb[0].mxu0 %v2286
        %v3261 = vpop.f32.mrb[0].mxu0
        %v3262 = vadd.f32 %v3097, %v3261
        %v3263 = vpop.f32.mrb[0].mxu0
        %3264 = vdwg.mxu0
        %v3265 = vmax.f32 %v3167, 0.0
        %v3266 = vmax.f32 %v3172, 0.0
        %v3267 = vmax.f32 %v3177, 0.0
        %v3268 = vmax.f32 %v3182, 0.0
        %v3269 = vmax.f32 %v3187, 0.0
        %v3270 = vmax.f32 %v3192, 0.0
        %v3271 = vmax.f32 %v3197, 0.0
        %v3272 = vmax.f32 %v3202, 0.0
        %v3273 = vmax.f32 %v3207, 0.0
        %v3274 = vmax.f32 %v3212, 0.0
        %v3275 = vmax.f32 %v3217, 0.0
        %v3276 = vmax.f32 %v3222, 0.0
        %v3277 = vmax.f32 %v3227, 0.0
        %v3278 = vmax.f32 %v3232, 0.0
        %v3279 = vmax.f32 %v3237, 0.0
        %v3280 = vmax.f32 %v3242, 0.0
        %v3281 = vmax.f32 %v3247, 0.0
        %v3282 = vmax.f32 %v3252, 0.0
        %v3283 = vmax.f32 %v3257, 0.0
        %v3284 = vmax.f32 %v3262, 0.0
        %3285 = vst [vmem:[#allocation2 + $0x1] sm:$0xff] %v3265
        %3286 = vst [vmem:[#allocation2 + $0x9] sm:$0xff] %v3266
        %3287 = vst [vmem:[#allocation2 + $0x19] sm:$0xff] %v3267
        %3288 = vst [vmem:[#allocation2 + $0x21] sm:$0xff] %v3268
        %3289 = vst [vmem:[#allocation2 + $0x31] sm:$0xff] %v3269
        %3290 = vst [vmem:[#allocation2 + $0x39] sm:$0xff] %v3270
        %3291 = vst [vmem:[#allocation2 + $0x49] sm:$0xff] %v3271
        %3292 = vst [vmem:[#allocation2 + $0x51] sm:$0xff] %v3272
        %3293 = vst [vmem:[#allocation2 + $0x61] sm:$0xff] %v3273
        %3294 = vst [vmem:[#allocation2 + $0x69] sm:$0xff] %v3274
        %3295 = vst [vmem:[#allocation2 + $0x79] sm:$0xff] %v3275
        %3296 = vst [vmem:[#allocation2 + $0x81] sm:$0xff] %v3276
        %3297 = vst [vmem:[#allocation2 + $0x91] sm:$0xff] %v3277
        %3298 = vst [vmem:[#allocation2 + $0x99] sm:$0xff] %v3278
        %3299 = vst [vmem:[#allocation2 + $0xa9] sm:$0xff] %v3279
        %3300 = vst [vmem:[#allocation2 + $0xb1] sm:$0xff] %v3280
        %3301 = vst [vmem:[#allocation2 + $0xc1] sm:$0xff] %v3281
        %3302 = vst [vmem:[#allocation2 + $0xc9] sm:$0xff] %v3282
        %3303 = vst [vmem:[#allocation2 + $0xd9] sm:$0xff] %v3283
        %3304 = vst [vmem:[#allocation2 + $0xe1] sm:$0xff] %v3284
        // Predicated region
        $region188: #{tpu_custom_call.1} parent=43 // pred_check
          %p3305 = pneg %p479
        $region189: #{tpu_custom_call.1} parent=43 // pred_check_branch
          %3307 = sbr.rel (%p3305) target = $region191
        $region190: #{tpu_custom_call.1} parent=43 // pred_region
          %3308 = vst [vmem:[#allocation2] sm:$0xff] 0.0
          %3309 = vst [vmem:[#allocation2 + $0x8] sm:$0xff] 0.0
          %3310 = vst [vmem:[#allocation2 + $0x10] sm:$0x3] 0.0
        $region191: #{tpu_custom_call.1} parent=43 // pred_fallthru
          _
        // Predicated region
        $region192: #{tpu_custom_call.1} parent=43 // pred_check
          %p3311 = pneg %p578
        $region193: #{tpu_custom_call.1} parent=43 // pred_check_branch
          %3313 = sbr.rel (%p3311) target = $region195
        $region194: #{tpu_custom_call.1} parent=43 // pred_region
          %s3314 = scalar_lea.vmem [#allocation2], 216
          %3315 = vst [vmem:[%s3314] sm:$0xff] 0.0
          %3316 = vst [vmem:[%s3314 + $0x8] sm:$0xff] 0.0
          %3317 = vst [vmem:[%s3314 + $0x10] sm:$0x3] 0.0
        $region195: #{tpu_custom_call.1} parent=43 // pred_fallthru
          _
        %v3318 = vld [vmem:[#allocation2] sm:$0xff]
        %v3319 = vld [vmem:[#allocation2 + $0x8] sm:$0xff]
        %v3320 = vld [vmem:[#allocation2 + $0x10] sm:$0x3]
        %v3321 = vld [vmem:[#allocation2 + $0x18] sm:$0xff]
        %v3322 = vld [vmem:[#allocation2 + $0x20] sm:$0xff]
        %v3323 = vld [vmem:[#allocation2 + $0x28] sm:$0x3]
        %v3324 = vld [vmem:[#allocation2 + $0x30] sm:$0xff]
        %v3325 = vld [vmem:[#allocation2 + $0x38] sm:$0xff]
        %v3326 = vld [vmem:[#allocation2 + $0x40] sm:$0x3]
        %v3327 = vld [vmem:[#allocation2 + $0x48] sm:$0xff]
        %v3328 = vld [vmem:[#allocation2 + $0x50] sm:$0xff]
        %v3329 = vld [vmem:[#allocation2 + $0x58] sm:$0x3]
        %v3330 = vld [vmem:[#allocation2 + $0x60] sm:$0xff]
        %v3331 = vld [vmem:[#allocation2 + $0x68] sm:$0xff]
        %v3332 = vld [vmem:[#allocation2 + $0x70] sm:$0x3]
        %v3333 = vld [vmem:[#allocation2 + $0x78] sm:$0xff]
        %v3334 = vld [vmem:[#allocation2 + $0x80] sm:$0xff]
        %v3335 = vld [vmem:[#allocation2 + $0x88] sm:$0x3]
        %v3336 = vld [vmem:[#allocation2 + $0x90] sm:$0xff]
        %v3337 = vld [vmem:[#allocation2 + $0x98] sm:$0xff]
        %v3338 = vld [vmem:[#allocation2 + $0xa0] sm:$0x3]
        %v3339 = vld [vmem:[#allocation2 + $0xa8] sm:$0xff]
        %v3340 = vld [vmem:[#allocation2 + $0xb0] sm:$0xff]
        %v3341 = vld [vmem:[#allocation2 + $0xb8] sm:$0x3]
        %v3342 = vld [vmem:[#allocation2 + $0xc0] sm:$0xff]
        %v3343 = vld [vmem:[#allocation2 + $0xc8] sm:$0xff]
        %v3344 = vld [vmem:[#allocation2 + $0xd0] sm:$0x3]
        %v3345 = vld [vmem:[#allocation2 + $0xd8] sm:$0xff]
        %v3346 = vld [vmem:[#allocation2 + $0xe0] sm:$0xff]
        %v3347 = vld [vmem:[#allocation2 + $0xe8] sm:$0x3]
        %v3372 = vrot.slane %v3318, 1
        %v3373 = vrot.slane %v3319, 1
        %v3374 = vsel %vm702, %v3372, %v3373
        %v3375 = vrot.slane %v3320, 1
        %v3376 = vsel %vm702, %v3373, %v3375
        %v3377 = vrot.slane %v3321, 1
        %v3378 = vrot.slane %v3322, 1
        %v3379 = vsel %vm702, %v3377, %v3378
        %v3380 = vrot.slane %v3323, 1
        %v3381 = vsel %vm702, %v3378, %v3380
        %v3382 = vrot.slane %v3324, 1
        %v3383 = vrot.slane %v3325, 1
        %v3384 = vsel %vm702, %v3382, %v3383
        %v3385 = vrot.slane %v3326, 1
        %v3386 = vsel %vm702, %v3383, %v3385
        %v3387 = vrot.slane %v3327, 1
        %v3388 = vrot.slane %v3328, 1
        %v3389 = vsel %vm702, %v3387, %v3388
        %v3390 = vrot.slane %v3329, 1
        %v3391 = vsel %vm702, %v3388, %v3390
        %v3392 = vrot.slane %v3330, 1
        %v3393 = vrot.slane %v3331, 1
        %v3394 = vsel %vm702, %v3392, %v3393
        %v3395 = vrot.slane %v3332, 1
        %v3396 = vsel %vm702, %v3393, %v3395
        %v3397 = vrot.slane %v3333, 1
        %v3398 = vrot.slane %v3334, 1
        %v3399 = vsel %vm702, %v3397, %v3398
        %v3400 = vrot.slane %v3335, 1
        %v3401 = vsel %vm702, %v3398, %v3400
        %v3402 = vrot.slane %v3336, 1
        %v3403 = vrot.slane %v3337, 1
        %v3404 = vsel %vm702, %v3402, %v3403
        %v3405 = vrot.slane %v3338, 1
        %v3406 = vsel %vm702, %v3403, %v3405
        %v3407 = vrot.slane %v3339, 1
        %v3408 = vrot.slane %v3340, 1
        %v3409 = vsel %vm702, %v3407, %v3408
        %v3410 = vrot.slane %v3341, 1
        %v3411 = vsel %vm702, %v3408, %v3410
        %v3428 = vrot.slane %v3318, 2
        %v3429 = vrot.slane %v3319, 2
        %v3430 = vsel %vm787, %v3428, %v3429
        %v3431 = vrot.slane %v3320, 2
        %v3432 = vsel %vm787, %v3429, %v3431
        %v3433 = vrot.slane %v3321, 2
        %v3434 = vrot.slane %v3322, 2
        %v3435 = vsel %vm787, %v3433, %v3434
        %v3436 = vrot.slane %v3323, 2
        %v3437 = vsel %vm787, %v3434, %v3436
        %v3438 = vrot.slane %v3324, 2
        %v3439 = vrot.slane %v3325, 2
        %v3440 = vsel %vm787, %v3438, %v3439
        %v3441 = vrot.slane %v3326, 2
        %v3442 = vsel %vm787, %v3439, %v3441
        %v3443 = vrot.slane %v3327, 2
        %v3444 = vrot.slane %v3328, 2
        %v3445 = vsel %vm787, %v3443, %v3444
        %v3446 = vrot.slane %v3329, 2
        %v3447 = vsel %vm787, %v3444, %v3446
        %v3448 = vrot.slane %v3330, 2
        %v3449 = vrot.slane %v3331, 2
        %v3450 = vsel %vm787, %v3448, %v3449
        %v3451 = vrot.slane %v3332, 2
        %v3452 = vsel %vm787, %v3449, %v3451
        %v3453 = vrot.slane %v3333, 2
        %v3454 = vrot.slane %v3334, 2
        %v3455 = vsel %vm787, %v3453, %v3454
        %v3456 = vrot.slane %v3335, 2
        %v3457 = vsel %vm787, %v3454, %v3456
        %v3458 = vrot.slane %v3336, 2
        %v3459 = vrot.slane %v3337, 2
        %v3460 = vsel %vm787, %v3458, %v3459
        %v3461 = vrot.slane %v3338, 2
        %v3462 = vsel %vm787, %v3459, %v3461
        %v3463 = vrot.slane %v3339, 2
        %v3464 = vrot.slane %v3340, 2
        %v3465 = vsel %vm787, %v3463, %v3464
        %v3466 = vrot.slane %v3341, 2
        %v3467 = vsel %vm787, %v3464, %v3466
        %v3487 = vrot.slane %v3342, 1
        %v3488 = vrot.slane %v3343, 1
        %v3489 = vsel %vm702, %v3487, %v3488
        %v3490 = vrot.slane %v3344, 1
        %v3491 = vsel %vm702, %v3488, %v3490
        %v3494 = vrot.slane %v3342, 2
        %v3495 = vrot.slane %v3343, 2
        %v3496 = vsel %vm787, %v3494, %v3495
        %v3497 = vrot.slane %v3344, 2
        %v3498 = vsel %vm787, %v3495, %v3497
        %v3504 = vrot.slane %v3345, 1
        %v3505 = vrot.slane %v3346, 1
        %v3506 = vsel %vm702, %v3504, %v3505
        %v3507 = vrot.slane %v3347, 1
        %v3508 = vsel %vm702, %v3505, %v3507
        %v3511 = vrot.slane %v3345, 2
        %v3512 = vrot.slane %v3346, 2
        %v3513 = vsel %vm787, %v3511, %v3512
        %v3514 = vrot.slane %v3347, 2
        %v3515 = vsel %vm787, %v3512, %v3514
        %v3518 = vld [vmem:[#allocation8] sm:$0xff]
        %v3519 = vld [vmem:[#allocation8 + $0x8] sm:$0xff]
        %v3520 = vld [vmem:[#allocation8 + $0x10] sm:$0xff]
        %v3521 = vld [vmem:[#allocation8 + $0x18] sm:$0xff]
        %v3522 = vld [vmem:[#allocation8 + $0x20] sm:$0xff]
        %v3523 = vld [vmem:[#allocation8 + $0x28] sm:$0xff]
        %v3524 = vld [vmem:[#allocation8 + $0x30] sm:$0xff]
        %v3525 = vld [vmem:[#allocation8 + $0x38] sm:$0xff]
        %v3526 = vld [vmem:[#allocation8 + $0x40] sm:$0xff]
        %v3527 = vld [vmem:[#allocation8 + $0x48] sm:$0xff]
        %v3528 = vld [vmem:[#allocation8 + $0x50] sm:$0xff]
        %v3529 = vld [vmem:[#allocation8 + $0x58] sm:$0xff]
        %v3530 = vld [vmem:[#allocation8 + $0x60] sm:$0xff]
        %v3531 = vld [vmem:[#allocation8 + $0x68] sm:$0xff]
        %v3532 = vld [vmem:[#allocation8 + $0x70] sm:$0xff]
        %v3533 = vld [vmem:[#allocation8 + $0x78] sm:$0xff]
        %v3534 = vld [vmem:[#allocation8 + $0x80] sm:$0xff]
        %v3535 = vld [vmem:[#allocation8 + $0x88] sm:$0xff]
        %v3536 = vld [vmem:[#allocation8 + $0x90] sm:$0xff]
        %v3537 = vld [vmem:[#allocation8 + $0x98] sm:$0xff]
        %v3538 = vld [vmem:[#allocation8 + $0xa0] sm:$0xff]
        %v3539 = vld [vmem:[#allocation8 + $0xa8] sm:$0xff]
        %v3540 = vld [vmem:[#allocation8 + $0xb0] sm:$0xff]
        %v3541 = vld [vmem:[#allocation8 + $0xb8] sm:$0xff]
        %v3542 = vld [vmem:[#allocation8 + $0xc0] sm:$0xff]
        %v3543 = vld [vmem:[#allocation8 + $0xc8] sm:$0xff]
        %v3544 = vld [vmem:[#allocation8 + $0xd0] sm:$0xff]
        %v3545 = vld [vmem:[#allocation8 + $0xd8] sm:$0xff]
        %v3546 = vld [vmem:[#allocation8 + $0xe0] sm:$0xff]
        %v3547 = vld [vmem:[#allocation8 + $0xe8] sm:$0xff]
        %v3548 = vld [vmem:[#allocation8 + $0xf0] sm:$0xff]
        %v3549 = vld [vmem:[#allocation8 + $0xf8] sm:$0xff]
        %v3550 = vld [vmem:[#allocation8 + $0x100] sm:$0xff]
        %v3551 = vld [vmem:[#allocation8 + $0x108] sm:$0xff]
        %v3552 = vld [vmem:[#allocation8 + $0x110] sm:$0xff]
        %v3553 = vld [vmem:[#allocation8 + $0x118] sm:$0xff]
        %v3554 = vld [vmem:[#allocation8 + $0x120] sm:$0xff]
        %v3555 = vld [vmem:[#allocation8 + $0x128] sm:$0xff]
        %v3556 = vld [vmem:[#allocation8 + $0x130] sm:$0xff]
        %v3557 = vld [vmem:[#allocation8 + $0x138] sm:$0xff]
        %v3558 = vld [vmem:[#allocation8 + $0x140] sm:$0xff]
        %v3559 = vld [vmem:[#allocation8 + $0x148] sm:$0xff]
        %v3560 = vld [vmem:[#allocation8 + $0x150] sm:$0xff]
        %v3561 = vld [vmem:[#allocation8 + $0x158] sm:$0xff]
        %v3562 = vld [vmem:[#allocation8 + $0x160] sm:$0xff]
        %v3563 = vld [vmem:[#allocation8 + $0x168] sm:$0xff]
        %v3564 = vld [vmem:[#allocation8 + $0x170] sm:$0xff]
        %v3565 = vld [vmem:[#allocation8 + $0x178] sm:$0xff]
        %v3566 = vld [vmem:[#allocation8 + $0x180] sm:$0xff]
        %v3567 = vld [vmem:[#allocation8 + $0x188] sm:$0xff]
        %v3568 = vld [vmem:[#allocation8 + $0x190] sm:$0xff]
        %v3569 = vld [vmem:[#allocation8 + $0x198] sm:$0xff]
        %v3570 = vld [vmem:[#allocation8 + $0x1a0] sm:$0xff]
        %v3571 = vld [vmem:[#allocation8 + $0x1a8] sm:$0xff]
        %v3572 = vld [vmem:[#allocation8 + $0x1b0] sm:$0xff]
        %v3573 = vld [vmem:[#allocation8 + $0x1b8] sm:$0xff]
        %v3574 = vld [vmem:[#allocation8 + $0x1c0] sm:$0xff]
        %v3575 = vld [vmem:[#allocation8 + $0x1c8] sm:$0xff]
        %v3576 = vld [vmem:[#allocation8 + $0x1d0] sm:$0xff]
        %v3577 = vld [vmem:[#allocation8 + $0x1d8] sm:$0xff]
        %v3578 = vld [vmem:[#allocation8 + $0x1e0] sm:$0xff]
        %v3579 = vld [vmem:[#allocation8 + $0x1e8] sm:$0xff]
        %v3580 = vld [vmem:[#allocation8 + $0x1f0] sm:$0xff]
        %v3581 = vld [vmem:[#allocation8 + $0x1f8] sm:$0xff]
        %v3582 = vld [vmem:[#allocation8 + $0x200] sm:$0xff]
        %v3583 = vld [vmem:[#allocation8 + $0x208] sm:$0xff]
        %v3584 = vld [vmem:[#allocation8 + $0x210] sm:$0xff]
        %v3585 = vld [vmem:[#allocation8 + $0x218] sm:$0xff]
        %v3586 = vld [vmem:[#allocation8 + $0x220] sm:$0xff]
        %v3587 = vld [vmem:[#allocation8 + $0x228] sm:$0xff]
        %v3588 = vld [vmem:[#allocation8 + $0x230] sm:$0xff]
        %v3589 = vld [vmem:[#allocation8 + $0x238] sm:$0xff]
        %v3590 = vld [vmem:[#allocation8 + $0x240] sm:$0xff]
        %v3591 = vld [vmem:[#allocation8 + $0x248] sm:$0xff]
        %v3592 = vld [vmem:[#allocation8 + $0x250] sm:$0xff]
        %v3593 = vld [vmem:[#allocation8 + $0x258] sm:$0xff]
        %v3594 = vld [vmem:[#allocation8 + $0x260] sm:$0xff]
        %v3595 = vld [vmem:[#allocation8 + $0x268] sm:$0xff]
        %v3596 = vld [vmem:[#allocation8 + $0x270] sm:$0xff]
        %v3597 = vld [vmem:[#allocation8 + $0x278] sm:$0xff]
        %v3598 = vld [vmem:[#allocation8 + $0x280] sm:$0xff]
        %v3599 = vld [vmem:[#allocation8 + $0x288] sm:$0xff]
        %v3600 = vld [vmem:[#allocation8 + $0x290] sm:$0xff]
        %v3601 = vld [vmem:[#allocation8 + $0x298] sm:$0xff]
        %v3602 = vld [vmem:[#allocation8 + $0x2a0] sm:$0xff]
        %v3603 = vld [vmem:[#allocation8 + $0x2a8] sm:$0xff]
        %v3604 = vld [vmem:[#allocation8 + $0x2b0] sm:$0xff]
        %v3605 = vld [vmem:[#allocation8 + $0x2b8] sm:$0xff]
        %v3606 = vld [vmem:[#allocation8 + $0x2c0] sm:$0xff]
        %v3607 = vld [vmem:[#allocation8 + $0x2c8] sm:$0xff]
        %v3608 = vld [vmem:[#allocation8 + $0x2d0] sm:$0xff]
        %v3609 = vld [vmem:[#allocation8 + $0x2d8] sm:$0xff]
        %v3610 = vld [vmem:[#allocation8 + $0x2e0] sm:$0xff]
        %v3611 = vld [vmem:[#allocation8 + $0x2e8] sm:$0xff]
        %v3612 = vld [vmem:[#allocation8 + $0x2f0] sm:$0xff]
        %v3613 = vld [vmem:[#allocation8 + $0x2f8] sm:$0xff]
        %v3614 = vld [vmem:[#allocation8 + $0x300] sm:$0xff]
        %v3615 = vld [vmem:[#allocation8 + $0x308] sm:$0xff]
        %v3616 = vld [vmem:[#allocation8 + $0x310] sm:$0xff]
        %v3617 = vld [vmem:[#allocation8 + $0x318] sm:$0xff]
        %v3618 = vld [vmem:[#allocation8 + $0x320] sm:$0xff]
        %v3619 = vld [vmem:[#allocation8 + $0x328] sm:$0xff]
        %v3620 = vld [vmem:[#allocation8 + $0x330] sm:$0xff]
        %v3621 = vld [vmem:[#allocation8 + $0x338] sm:$0xff]
        %v3622 = vld [vmem:[#allocation8 + $0x340] sm:$0xff]
        %v3623 = vld [vmem:[#allocation8 + $0x348] sm:$0xff]
        %v3624 = vld [vmem:[#allocation8 + $0x350] sm:$0xff]
        %v3625 = vld [vmem:[#allocation8 + $0x358] sm:$0xff]
        %v3626 = vld [vmem:[#allocation8 + $0x360] sm:$0xff]
        %v3627 = vld [vmem:[#allocation8 + $0x368] sm:$0xff]
        %v3628 = vld [vmem:[#allocation8 + $0x370] sm:$0xff]
        %v3629 = vld [vmem:[#allocation8 + $0x378] sm:$0xff]
        %v3630 = vld [vmem:[#allocation8 + $0x380] sm:$0xff]
        %v3631 = vld [vmem:[#allocation8 + $0x388] sm:$0xff]
        %v3632 = vld [vmem:[#allocation8 + $0x390] sm:$0xff]
        %v3633 = vld [vmem:[#allocation8 + $0x398] sm:$0xff]
        %v3634 = vld [vmem:[#allocation8 + $0x3a0] sm:$0xff]
        %v3635 = vld [vmem:[#allocation8 + $0x3a8] sm:$0xff]
        %v3636 = vld [vmem:[#allocation8 + $0x3b0] sm:$0xff]
        %v3637 = vld [vmem:[#allocation8 + $0x3b8] sm:$0xff]
        %v3638 = vld [vmem:[#allocation8 + $0x3c0] sm:$0xff]
        %v3639 = vld [vmem:[#allocation8 + $0x3c8] sm:$0xff]
        %v3640 = vld [vmem:[#allocation8 + $0x3d0] sm:$0xff]
        %v3641 = vld [vmem:[#allocation8 + $0x3d8] sm:$0xff]
        %v3642 = vld [vmem:[#allocation8 + $0x3e0] sm:$0xff]
        %v3643 = vld [vmem:[#allocation8 + $0x3e8] sm:$0xff]
        %v3644 = vld [vmem:[#allocation8 + $0x3f0] sm:$0xff]
        %v3645 = vld [vmem:[#allocation8 + $0x3f8] sm:$0xff]
        %v3646 = vld [vmem:[#allocation8 + $0x400] sm:$0xff]
        %v3647 = vld [vmem:[#allocation8 + $0x408] sm:$0xff]
        %v3648 = vld [vmem:[#allocation8 + $0x410] sm:$0xff]
        %v3649 = vld [vmem:[#allocation8 + $0x418] sm:$0xff]
        %v3650 = vld [vmem:[#allocation8 + $0x420] sm:$0xff]
        %v3651 = vld [vmem:[#allocation8 + $0x428] sm:$0xff]
        %v3652 = vld [vmem:[#allocation8 + $0x430] sm:$0xff]
        %v3653 = vld [vmem:[#allocation8 + $0x438] sm:$0xff]
        %v3654 = vld [vmem:[#allocation8 + $0x440] sm:$0xff]
        %v3655 = vld [vmem:[#allocation8 + $0x448] sm:$0xff]
        %v3656 = vld [vmem:[#allocation8 + $0x450] sm:$0xff]
        %v3657 = vld [vmem:[#allocation8 + $0x458] sm:$0xff]
        %v3658 = vld [vmem:[#allocation8 + $0x460] sm:$0xff]
        %v3659 = vld [vmem:[#allocation8 + $0x468] sm:$0xff]
        %v3660 = vld [vmem:[#allocation8 + $0x470] sm:$0xff]
        %v3661 = vld [vmem:[#allocation8 + $0x478] sm:$0xff]
        %v3662 = vld [vmem:[%s6] sm:$0x1]
        %v3664 = vlaneseq
        %v3665 = vshrl.u32 %v3664, 7
        %v3666 = vsub.s32 0, %v3665
        %v3667 = vrot.slane %v3662, %v3666
        %3669 = vmatprep.subr.mxu0 0.0
        %3670 = vmatpush1.msra.mxu0 %v3518
        %3671 = vmatprep.subr.mxu0 0.0
        %3672 = vmatpush1.msra.mxu0 %v3519
        %3673 = vmatprep.subr.mxu0 0.0
        %3674 = vmatpush1.msra.mxu0 %v3520
        %3675 = vmatprep.subr.mxu0 0.0
        %3676 = vmatpush1.msra.mxu0 %v3521
        %3677 = vmatprep.subr.mxu0 0.0
        %3678 = vmatpush1.msra.mxu0 %v3522
        %3679 = vmatprep.subr.mxu0 0.0
        %3680 = vmatpush1.msra.mxu0 %v3523
        %3681 = vmatprep.subr.mxu0 0.0
        %3682 = vmatpush1.msra.mxu0 %v3524
        %3683 = vmatprep.subr.mxu0 0.0
        %3684 = vmatpush1.msra.mxu0 %v3525
        %3685 = vmatprep.subr.mxu0 0.0
        %3686 = vmatpush1.msra.mxu0 %v3526
        %3687 = vmatprep.subr.mxu0 0.0
        %3688 = vmatpush1.msra.mxu0 %v3527
        %3689 = vmatprep.subr.mxu0 0.0
        %3690 = vmatpush1.msra.mxu0 %v3528
        %3691 = vmatprep.subr.mxu0 0.0
        %3692 = vmatpush1.msra.mxu0 %v3529
        %3693 = vmatprep.subr.mxu0 0.0
        %3694 = vmatpush1.msra.mxu0 %v3530
        %3695 = vmatprep.subr.mxu0 0.0
        %3696 = vmatpush1.msra.mxu0 %v3531
        %3697 = vmatprep.subr.mxu0 0.0
        %3698 = vmatpush1.msra.mxu0 %v3532
        %3699 = vmatprep.subr.mxu0 0.0
        %3700 = vmatpush1.msra.mxu0 %v3533
        %3701 = vmatprep.subr.mxu0 0.0
        %3702 = vmatpush1.msra.mxu0 %v3534
        %3703 = vmatprep.subr.mxu0 0.0
        %3704 = vmatpush1.msra.mxu0 %v3535
        %3705 = vmatprep.subr.mxu0 0.0
        %3706 = vmatpush1.msra.mxu0 %v3536
        %3707 = vmatprep.subr.mxu0 0.0
        %3708 = vmatpush1.msra.mxu0 %v3537
        %3709 = vmatprep.subr.mxu0 0.0
        %3710 = vmatpush1.msra.mxu0 %v3538
        %3711 = vmatprep.subr.mxu0 0.0
        %3712 = vmatpush1.msra.mxu0 %v3539
        %3713 = vmatprep.subr.mxu0 0.0
        %3714 = vmatpush1.msra.mxu0 %v3540
        %3715 = vmatprep.subr.mxu0 0.0
        %3716 = vmatpush1.msra.mxu0 %v3541
        %3717 = vmatprep.subr.mxu0 0.0
        %3718 = vmatpush1.msra.mxu0 %v3542
        %3719 = vmatprep.subr.mxu0 0.0
        %3720 = vmatpush1.msra.mxu0 %v3543
        %3721 = vmatprep.subr.mxu0 0.0
        %3722 = vmatpush1.msra.mxu0 %v3544
        %3723 = vmatprep.subr.mxu0 0.0
        %3724 = vmatpush1.msra.mxu0 %v3545
        %3725 = vmatprep.subr.mxu0 0.0
        %3726 = vmatpush1.msra.mxu0 %v3546
        %3727 = vmatprep.subr.mxu0 0.0
        %3728 = vmatpush1.msra.mxu0 %v3547
        %3729 = vmatprep.subr.mxu0 0.0
        %3730 = vmatpush1.msra.mxu0 %v3548
        %3731 = vmatprep.subr.mxu0 0.0
        %3732 = vmatpush1.msra.mxu0 %v3549
        %3733 = vmatprep.mubr.f32.mxu0 %v3374
        %3734 = vmatmul.mubr.f32.gmra.mrb[0].mxu0 %v3318
        %v3735 = vpop.f32.mrb[0].mxu0
        %v3736 = vadd.f32 %v3667, %v3735
        %v3737 = vpop.f32.mrb[0].mxu0
        %3738 = vmatprep.mubr.f32.mxu0 %v3376
        %3739 = vmatmul.mubr.f32.gmra.mrb[0].mxu0 %v3319
        %v3740 = vpop.f32.mrb[0].mxu0
        %v3741 = vadd.f32 %v3667, %v3740
        %v3742 = vpop.f32.mrb[0].mxu0
        %3743 = vmatprep.mubr.f32.mxu0 %v3379
        %3744 = vmatmul.mubr.f32.gmra.mrb[0].mxu0 %v3321
        %v3745 = vpop.f32.mrb[0].mxu0
        %v3746 = vadd.f32 %v3667, %v3745
        %v3747 = vpop.f32.mrb[0].mxu0
        %3748 = vmatprep.mubr.f32.mxu0 %v3381
        %3749 = vmatmul.mubr.f32.gmra.mrb[0].mxu0 %v3322
        %v3750 = vpop.f32.mrb[0].mxu0
        %v3751 = vadd.f32 %v3667, %v3750
        %v3752 = vpop.f32.mrb[0].mxu0
        %3753 = vmatprep.mubr.f32.mxu0 %v3384
        %3754 = vmatmul.mubr.f32.gmra.mrb[0].mxu0 %v3324
        %v3755 = vpop.f32.mrb[0].mxu0
        %v3756 = vadd.f32 %v3667, %v3755
        %v3757 = vpop.f32.mrb[0].mxu0
        %3758 = vmatprep.mubr.f32.mxu0 %v3386
        %3759 = vmatmul.mubr.f32.gmra.mrb[0].mxu0 %v3325
        %v3760 = vpop.f32.mrb[0].mxu0
        %v3761 = vadd.f32 %v3667, %v3760
        %v3762 = vpop.f32.mrb[0].mxu0
        %3763 = vmatprep.mubr.f32.mxu0 %v3389
        %3764 = vmatmul.mubr.f32.gmra.mrb[0].mxu0 %v3327
        %v3765 = vpop.f32.mrb[0].mxu0
        %v3766 = vadd.f32 %v3667, %v3765
        %v3767 = vpop.f32.mrb[0].mxu0
        %3768 = vmatprep.mubr.f32.mxu0 %v3391
        %3769 = vmatmul.mubr.f32.gmra.mrb[0].mxu0 %v3328
        %v3770 = vpop.f32.mrb[0].mxu0
        %v3771 = vadd.f32 %v3667, %v3770
        %v3772 = vpop.f32.mrb[0].mxu0
        %3773 = vmatprep.mubr.f32.mxu0 %v3394
        %3774 = vmatmul.mubr.f32.gmra.mrb[0].mxu0 %v3330
        %v3775 = vpop.f32.mrb[0].mxu0
        %v3776 = vadd.f32 %v3667, %v3775
        %v3777 = vpop.f32.mrb[0].mxu0
        %3778 = vmatprep.mubr.f32.mxu0 %v3396
        %3779 = vmatmul.mubr.f32.gmra.mrb[0].mxu0 %v3331
        %v3780 = vpop.f32.mrb[0].mxu0
        %v3781 = vadd.f32 %v3667, %v3780
        %v3782 = vpop.f32.mrb[0].mxu0
        %3783 = vmatprep.mubr.f32.mxu0 %v3399
        %3784 = vmatmul.mubr.f32.gmra.mrb[0].mxu0 %v3333
        %v3785 = vpop.f32.mrb[0].mxu0
        %v3786 = vadd.f32 %v3667, %v3785
        %v3787 = vpop.f32.mrb[0].mxu0
        %3788 = vmatprep.mubr.f32.mxu0 %v3401
        %3789 = vmatmul.mubr.f32.gmra.mrb[0].mxu0 %v3334
        %v3790 = vpop.f32.mrb[0].mxu0
        %v3791 = vadd.f32 %v3667, %v3790
        %v3792 = vpop.f32.mrb[0].mxu0
        %3793 = vmatprep.mubr.f32.mxu0 %v3404
        %3794 = vmatmul.mubr.f32.gmra.mrb[0].mxu0 %v3336
        %v3795 = vpop.f32.mrb[0].mxu0
        %v3796 = vadd.f32 %v3667, %v3795
        %v3797 = vpop.f32.mrb[0].mxu0
        %3798 = vmatprep.mubr.f32.mxu0 %v3406
        %3799 = vmatmul.mubr.f32.gmra.mrb[0].mxu0 %v3337
        %v3800 = vpop.f32.mrb[0].mxu0
        %v3801 = vadd.f32 %v3667, %v3800
        %v3802 = vpop.f32.mrb[0].mxu0
        %3803 = vmatprep.mubr.f32.mxu0 %v3409
        %3804 = vmatmul.mubr.f32.gmra.mrb[0].mxu0 %v3339
        %v3805 = vpop.f32.mrb[0].mxu0
        %v3806 = vadd.f32 %v3667, %v3805
        %v3807 = vpop.f32.mrb[0].mxu0
        %3808 = vmatprep.mubr.f32.mxu0 %v3411
        %3809 = vmatmul.mubr.f32.gmra.mrb[0].mxu0 %v3340
        %v3810 = vpop.f32.mrb[0].mxu0
        %v3811 = vadd.f32 %v3667, %v3810
        %v3812 = vpop.f32.mrb[0].mxu0
        %3813 = vdwg.mxu0
        %3814 = vmatprep.subr.mxu0 0.0
        %3815 = vmatpush1.msra.mxu0 %v3550
        %3816 = vmatprep.subr.mxu0 0.0
        %3817 = vmatpush1.msra.mxu0 %v3551
        %3818 = vmatprep.subr.mxu0 0.0
        %3819 = vmatpush1.msra.mxu0 %v3552
        %3820 = vmatprep.subr.mxu0 0.0
        %3821 = vmatpush1.msra.mxu0 %v3553
        %3822 = vmatprep.subr.mxu0 0.0
        %3823 = vmatpush1.msra.mxu0 %v3554
        %3824 = vmatprep.subr.mxu0 0.0
        %3825 = vmatpush1.msra.mxu0 %v3555
        %3826 = vmatprep.subr.mxu0 0.0
        %3827 = vmatpush1.msra.mxu0 %v3556
        %3828 = vmatprep.subr.mxu0 0.0
        %3829 = vmatpush1.msra.mxu0 %v3557
        %3830 = vmatprep.subr.mxu0 0.0
        %3831 = vmatpush1.msra.mxu0 %v3558
        %3832 = vmatprep.subr.mxu0 0.0
        %3833 = vmatpush1.msra.mxu0 %v3559
        %3834 = vmatprep.subr.mxu0 0.0
        %3835 = vmatpush1.msra.mxu0 %v3560
        %3836 = vmatprep.subr.mxu0 0.0
        %3837 = vmatpush1.msra.mxu0 %v3561
        %3838 = vmatprep.subr.mxu0 0.0
        %3839 = vmatpush1.msra.mxu0 %v3562
        %3840 = vmatprep.subr.mxu0 0.0
        %3841 = vmatpush1.msra.mxu0 %v3563
        %3842 = vmatprep.subr.mxu0 0.0
        %3843 = vmatpush1.msra.mxu0 %v3564
        %3844 = vmatprep.subr.mxu0 0.0
        %3845 = vmatpush1.msra.mxu0 %v3565
        %3846 = vmatprep.subr.mxu0 0.0
        %3847 = vmatpush1.msra.mxu0 %v3566
        %3848 = vmatprep.subr.mxu0 0.0
        %3849 = vmatpush1.msra.mxu0 %v3567
        %3850 = vmatprep.subr.mxu0 0.0
        %3851 = vmatpush1.msra.mxu0 %v3568
        %3852 = vmatprep.subr.mxu0 0.0
        %3853 = vmatpush1.msra.mxu0 %v3569
        %3854 = vmatprep.subr.mxu0 0.0
        %3855 = vmatpush1.msra.mxu0 %v3570
        %3856 = vmatprep.subr.mxu0 0.0
        %3857 = vmatpush1.msra.mxu0 %v3571
        %3858 = vmatprep.subr.mxu0 0.0
        %3859 = vmatpush1.msra.mxu0 %v3572
        %3860 = vmatprep.subr.mxu0 0.0
        %3861 = vmatpush1.msra.mxu0 %v3573
        %3862 = vmatprep.subr.mxu0 0.0
        %3863 = vmatpush1.msra.mxu0 %v3574
        %3864 = vmatprep.subr.mxu0 0.0
        %3865 = vmatpush1.msra.mxu0 %v3575
        %3866 = vmatprep.subr.mxu0 0.0
        %3867 = vmatpush1.msra.mxu0 %v3576
        %3868 = vmatprep.subr.mxu0 0.0
        %3869 = vmatpush1.msra.mxu0 %v3577
        %3870 = vmatprep.subr.mxu0 0.0
        %3871 = vmatpush1.msra.mxu0 %v3578
        %3872 = vmatprep.subr.mxu0 0.0
        %3873 = vmatpush1.msra.mxu0 %v3579
        %3874 = vmatprep.subr.mxu0 0.0
        %3875 = vmatpush1.msra.mxu0 %v3580
        %3876 = vmatprep.subr.mxu0 0.0
        %3877 = vmatpush1.msra.mxu0 %v3581
        %3878 = vmatprep.mubr.f32.mxu0 %v3321
        %3879 = vmatmul.mubr.f32.gmra.mrb[0].mxu0 %v3430
        %v3880 = vpop.f32.mrb[0].mxu0
        %v3881 = vadd.f32 %v3736, %v3880
        %v3882 = vpop.f32.mrb[0].mxu0
        %3883 = vmatprep.mubr.f32.mxu0 %v3322
        %3884 = vmatmul.mubr.f32.gmra.mrb[0].mxu0 %v3432
        %v3885 = vpop.f32.mrb[0].mxu0
        %v3886 = vadd.f32 %v3741, %v3885
        %v3887 = vpop.f32.mrb[0].mxu0
        %3888 = vmatprep.mubr.f32.mxu0 %v3324
        %3889 = vmatmul.mubr.f32.gmra.mrb[0].mxu0 %v3435
        %v3890 = vpop.f32.mrb[0].mxu0
        %v3891 = vadd.f32 %v3746, %v3890
        %v3892 = vpop.f32.mrb[0].mxu0
        %3893 = vmatprep.mubr.f32.mxu0 %v3325
        %3894 = vmatmul.mubr.f32.gmra.mrb[0].mxu0 %v3437
        %v3895 = vpop.f32.mrb[0].mxu0
        %v3896 = vadd.f32 %v3751, %v3895
        %v3897 = vpop.f32.mrb[0].mxu0
        %3898 = vmatprep.mubr.f32.mxu0 %v3327
        %3899 = vmatmul.mubr.f32.gmra.mrb[0].mxu0 %v3440
        %v3900 = vpop.f32.mrb[0].mxu0
        %v3901 = vadd.f32 %v3756, %v3900
        %v3902 = vpop.f32.mrb[0].mxu0
        %3903 = vmatprep.mubr.f32.mxu0 %v3328
        %3904 = vmatmul.mubr.f32.gmra.mrb[0].mxu0 %v3442
        %v3905 = vpop.f32.mrb[0].mxu0
        %v3906 = vadd.f32 %v3761, %v3905
        %v3907 = vpop.f32.mrb[0].mxu0
        %3908 = vmatprep.mubr.f32.mxu0 %v3330
        %3909 = vmatmul.mubr.f32.gmra.mrb[0].mxu0 %v3445
        %v3910 = vpop.f32.mrb[0].mxu0
        %v3911 = vadd.f32 %v3766, %v3910
        %v3912 = vpop.f32.mrb[0].mxu0
        %3913 = vmatprep.mubr.f32.mxu0 %v3331
        %3914 = vmatmul.mubr.f32.gmra.mrb[0].mxu0 %v3447
        %v3915 = vpop.f32.mrb[0].mxu0
        %v3916 = vadd.f32 %v3771, %v3915
        %v3917 = vpop.f32.mrb[0].mxu0
        %3918 = vmatprep.mubr.f32.mxu0 %v3333
        %3919 = vmatmul.mubr.f32.gmra.mrb[0].mxu0 %v3450
        %v3920 = vpop.f32.mrb[0].mxu0
        %v3921 = vadd.f32 %v3776, %v3920
        %v3922 = vpop.f32.mrb[0].mxu0
        %3923 = vmatprep.mubr.f32.mxu0 %v3334
        %3924 = vmatmul.mubr.f32.gmra.mrb[0].mxu0 %v3452
        %v3925 = vpop.f32.mrb[0].mxu0
        %v3926 = vadd.f32 %v3781, %v3925
        %v3927 = vpop.f32.mrb[0].mxu0
        %3928 = vmatprep.mubr.f32.mxu0 %v3336
        %3929 = vmatmul.mubr.f32.gmra.mrb[0].mxu0 %v3455
        %v3930 = vpop.f32.mrb[0].mxu0
        %v3931 = vadd.f32 %v3786, %v3930
        %v3932 = vpop.f32.mrb[0].mxu0
        %3933 = vmatprep.mubr.f32.mxu0 %v3337
        %3934 = vmatmul.mubr.f32.gmra.mrb[0].mxu0 %v3457
        %v3935 = vpop.f32.mrb[0].mxu0
        %v3936 = vadd.f32 %v3791, %v3935
        %v3937 = vpop.f32.mrb[0].mxu0
        %3938 = vmatprep.mubr.f32.mxu0 %v3339
        %3939 = vmatmul.mubr.f32.gmra.mrb[0].mxu0 %v3460
        %v3940 = vpop.f32.mrb[0].mxu0
        %v3941 = vadd.f32 %v3796, %v3940
        %v3942 = vpop.f32.mrb[0].mxu0
        %3943 = vmatprep.mubr.f32.mxu0 %v3340
        %3944 = vmatmul.mubr.f32.gmra.mrb[0].mxu0 %v3462
        %v3945 = vpop.f32.mrb[0].mxu0
        %v3946 = vadd.f32 %v3801, %v3945
        %v3947 = vpop.f32.mrb[0].mxu0
        %3948 = vmatprep.mubr.f32.mxu0 %v3342
        %3949 = vmatmul.mubr.f32.gmra.mrb[0].mxu0 %v3465
        %v3950 = vpop.f32.mrb[0].mxu0
        %v3951 = vadd.f32 %v3806, %v3950
        %v3952 = vpop.f32.mrb[0].mxu0
        %3953 = vmatprep.mubr.f32.mxu0 %v3343
        %3954 = vmatmul.mubr.f32.gmra.mrb[0].mxu0 %v3467
        %v3955 = vpop.f32.mrb[0].mxu0
        %v3956 = vadd.f32 %v3811, %v3955
        %v3957 = vpop.f32.mrb[0].mxu0
        %3958 = vdwg.mxu0
        %3959 = vmatprep.subr.mxu0 0.0
        %3960 = vmatpush1.msra.mxu0 %v3582
        %3961 = vmatprep.subr.mxu0 0.0
        %3962 = vmatpush1.msra.mxu0 %v3583
        %3963 = vmatprep.subr.mxu0 0.0
        %3964 = vmatpush1.msra.mxu0 %v3584
        %3965 = vmatprep.subr.mxu0 0.0
        %3966 = vmatpush1.msra.mxu0 %v3585
        %3967 = vmatprep.subr.mxu0 0.0
        %3968 = vmatpush1.msra.mxu0 %v3586
        %3969 = vmatprep.subr.mxu0 0.0
        %3970 = vmatpush1.msra.mxu0 %v3587
        %3971 = vmatprep.subr.mxu0 0.0
        %3972 = vmatpush1.msra.mxu0 %v3588
        %3973 = vmatprep.subr.mxu0 0.0
        %3974 = vmatpush1.msra.mxu0 %v3589
        %3975 = vmatprep.subr.mxu0 0.0
        %3976 = vmatpush1.msra.mxu0 %v3590
        %3977 = vmatprep.subr.mxu0 0.0
        %3978 = vmatpush1.msra.mxu0 %v3591
        %3979 = vmatprep.subr.mxu0 0.0
        %3980 = vmatpush1.msra.mxu0 %v3592
        %3981 = vmatprep.subr.mxu0 0.0
        %3982 = vmatpush1.msra.mxu0 %v3593
        %3983 = vmatprep.subr.mxu0 0.0
        %3984 = vmatpush1.msra.mxu0 %v3594
        %3985 = vmatprep.subr.mxu0 0.0
        %3986 = vmatpush1.msra.mxu0 %v3595
        %3987 = vmatprep.subr.mxu0 0.0
        %3988 = vmatpush1.msra.mxu0 %v3596
        %3989 = vmatprep.subr.mxu0 0.0
        %3990 = vmatpush1.msra.mxu0 %v3597
        %3991 = vmatprep.subr.mxu0 0.0
        %3992 = vmatpush1.msra.mxu0 %v3598
        %3993 = vmatprep.subr.mxu0 0.0
        %3994 = vmatpush1.msra.mxu0 %v3599
        %3995 = vmatprep.subr.mxu0 0.0
        %3996 = vmatpush1.msra.mxu0 %v3600
        %3997 = vmatprep.subr.mxu0 0.0
        %3998 = vmatpush1.msra.mxu0 %v3601
        %3999 = vmatprep.subr.mxu0 0.0
        %4000 = vmatpush1.msra.mxu0 %v3602
        %4001 = vmatprep.subr.mxu0 0.0
        %4002 = vmatpush1.msra.mxu0 %v3603
        %4003 = vmatprep.subr.mxu0 0.0
        %4004 = vmatpush1.msra.mxu0 %v3604
        %4005 = vmatprep.subr.mxu0 0.0
        %4006 = vmatpush1.msra.mxu0 %v3605
        %4007 = vmatprep.subr.mxu0 0.0
        %4008 = vmatpush1.msra.mxu0 %v3606
        %4009 = vmatprep.subr.mxu0 0.0
        %4010 = vmatpush1.msra.mxu0 %v3607
        %4011 = vmatprep.subr.mxu0 0.0
        %4012 = vmatpush1.msra.mxu0 %v3608
        %4013 = vmatprep.subr.mxu0 0.0
        %4014 = vmatpush1.msra.mxu0 %v3609
        %4015 = vmatprep.subr.mxu0 0.0
        %4016 = vmatpush1.msra.mxu0 %v3610
        %4017 = vmatprep.subr.mxu0 0.0
        %4018 = vmatpush1.msra.mxu0 %v3611
        %4019 = vmatprep.subr.mxu0 0.0
        %4020 = vmatpush1.msra.mxu0 %v3612
        %4021 = vmatprep.subr.mxu0 0.0
        %4022 = vmatpush1.msra.mxu0 %v3613
        %4023 = vmatprep.mubr.f32.mxu0 %v3435
        %4024 = vmatmul.mubr.f32.gmra.mrb[0].mxu0 %v3379
        %v4025 = vpop.f32.mrb[0].mxu0
        %v4026 = vadd.f32 %v3881, %v4025
        %v4027 = vpop.f32.mrb[0].mxu0
        %4028 = vmatprep.mubr.f32.mxu0 %v3437
        %4029 = vmatmul.mubr.f32.gmra.mrb[0].mxu0 %v3381
        %v4030 = vpop.f32.mrb[0].mxu0
        %v4031 = vadd.f32 %v3886, %v4030
        %v4032 = vpop.f32.mrb[0].mxu0
        %4033 = vmatprep.mubr.f32.mxu0 %v3440
        %4034 = vmatmul.mubr.f32.gmra.mrb[0].mxu0 %v3384
        %v4035 = vpop.f32.mrb[0].mxu0
        %v4036 = vadd.f32 %v3891, %v4035
        %v4037 = vpop.f32.mrb[0].mxu0
        %4038 = vmatprep.mubr.f32.mxu0 %v3442
        %4039 = vmatmul.mubr.f32.gmra.mrb[0].mxu0 %v3386
        %v4040 = vpop.f32.mrb[0].mxu0
        %v4041 = vadd.f32 %v3896, %v4040
        %v4042 = vpop.f32.mrb[0].mxu0
        %4043 = vmatprep.mubr.f32.mxu0 %v3445
        %4044 = vmatmul.mubr.f32.gmra.mrb[0].mxu0 %v3389
        %v4045 = vpop.f32.mrb[0].mxu0
        %v4046 = vadd.f32 %v3901, %v4045
        %v4047 = vpop.f32.mrb[0].mxu0
        %4048 = vmatprep.mubr.f32.mxu0 %v3447
        %4049 = vmatmul.mubr.f32.gmra.mrb[0].mxu0 %v3391
        %v4050 = vpop.f32.mrb[0].mxu0
        %v4051 = vadd.f32 %v3906, %v4050
        %v4052 = vpop.f32.mrb[0].mxu0
        %4053 = vmatprep.mubr.f32.mxu0 %v3450
        %4054 = vmatmul.mubr.f32.gmra.mrb[0].mxu0 %v3394
        %v4055 = vpop.f32.mrb[0].mxu0
        %v4056 = vadd.f32 %v3911, %v4055
        %v4057 = vpop.f32.mrb[0].mxu0
        %4058 = vmatprep.mubr.f32.mxu0 %v3452
        %4059 = vmatmul.mubr.f32.gmra.mrb[0].mxu0 %v3396
        %v4060 = vpop.f32.mrb[0].mxu0
        %v4061 = vadd.f32 %v3916, %v4060
        %v4062 = vpop.f32.mrb[0].mxu0
        %4063 = vmatprep.mubr.f32.mxu0 %v3455
        %4064 = vmatmul.mubr.f32.gmra.mrb[0].mxu0 %v3399
        %v4065 = vpop.f32.mrb[0].mxu0
        %v4066 = vadd.f32 %v3921, %v4065
        %v4067 = vpop.f32.mrb[0].mxu0
        %4068 = vmatprep.mubr.f32.mxu0 %v3457
        %4069 = vmatmul.mubr.f32.gmra.mrb[0].mxu0 %v3401
        %v4070 = vpop.f32.mrb[0].mxu0
        %v4071 = vadd.f32 %v3926, %v4070
        %v4072 = vpop.f32.mrb[0].mxu0
        %4073 = vmatprep.mubr.f32.mxu0 %v3460
        %4074 = vmatmul.mubr.f32.gmra.mrb[0].mxu0 %v3404
        %v4075 = vpop.f32.mrb[0].mxu0
        %v4076 = vadd.f32 %v3931, %v4075
        %v4077 = vpop.f32.mrb[0].mxu0
        %4078 = vmatprep.mubr.f32.mxu0 %v3462
        %4079 = vmatmul.mubr.f32.gmra.mrb[0].mxu0 %v3406
        %v4080 = vpop.f32.mrb[0].mxu0
        %v4081 = vadd.f32 %v3936, %v4080
        %v4082 = vpop.f32.mrb[0].mxu0
        %4083 = vmatprep.mubr.f32.mxu0 %v3465
        %4084 = vmatmul.mubr.f32.gmra.mrb[0].mxu0 %v3409
        %v4085 = vpop.f32.mrb[0].mxu0
        %v4086 = vadd.f32 %v3941, %v4085
        %v4087 = vpop.f32.mrb[0].mxu0
        %4088 = vmatprep.mubr.f32.mxu0 %v3467
        %4089 = vmatmul.mubr.f32.gmra.mrb[0].mxu0 %v3411
        %v4090 = vpop.f32.mrb[0].mxu0
        %v4091 = vadd.f32 %v3946, %v4090
        %v4092 = vpop.f32.mrb[0].mxu0
        %4093 = vmatprep.mubr.f32.mxu0 %v3496
        %4094 = vmatmul.mubr.f32.gmra.mrb[0].mxu0 %v3489
        %v4095 = vpop.f32.mrb[0].mxu0
        %v4096 = vadd.f32 %v3951, %v4095
        %v4097 = vpop.f32.mrb[0].mxu0
        %4098 = vmatprep.mubr.f32.mxu0 %v3498
        %4099 = vmatmul.mubr.f32.gmra.mrb[0].mxu0 %v3491
        %v4100 = vpop.f32.mrb[0].mxu0
        %v4101 = vadd.f32 %v3956, %v4100
        %v4102 = vpop.f32.mrb[0].mxu0
        %4103 = vdwg.mxu0
        %4104 = vmatprep.subr.mxu0 0.0
        %4105 = vmatpush1.msra.mxu0 %v3614
        %4106 = vmatprep.subr.mxu0 0.0
        %4107 = vmatpush1.msra.mxu0 %v3615
        %4108 = vmatprep.subr.mxu0 0.0
        %4109 = vmatpush1.msra.mxu0 %v3616
        %4110 = vmatprep.subr.mxu0 0.0
        %4111 = vmatpush1.msra.mxu0 %v3617
        %4112 = vmatprep.subr.mxu0 0.0
        %4113 = vmatpush1.msra.mxu0 %v3618
        %4114 = vmatprep.subr.mxu0 0.0
        %4115 = vmatpush1.msra.mxu0 %v3619
        %4116 = vmatprep.subr.mxu0 0.0
        %4117 = vmatpush1.msra.mxu0 %v3620
        %4118 = vmatprep.subr.mxu0 0.0
        %4119 = vmatpush1.msra.mxu0 %v3621
        %4120 = vmatprep.subr.mxu0 0.0
        %4121 = vmatpush1.msra.mxu0 %v3622
        %4122 = vmatprep.subr.mxu0 0.0
        %4123 = vmatpush1.msra.mxu0 %v3623
        %4124 = vmatprep.subr.mxu0 0.0
        %4125 = vmatpush1.msra.mxu0 %v3624
        %4126 = vmatprep.subr.mxu0 0.0
        %4127 = vmatpush1.msra.mxu0 %v3625
        %4128 = vmatprep.subr.mxu0 0.0
        %4129 = vmatpush1.msra.mxu0 %v3626
        %4130 = vmatprep.subr.mxu0 0.0
        %4131 = vmatpush1.msra.mxu0 %v3627
        %4132 = vmatprep.subr.mxu0 0.0
        %4133 = vmatpush1.msra.mxu0 %v3628
        %4134 = vmatprep.subr.mxu0 0.0
        %4135 = vmatpush1.msra.mxu0 %v3629
        %4136 = vmatprep.subr.mxu0 0.0
        %4137 = vmatpush1.msra.mxu0 %v3630
        %4138 = vmatprep.subr.mxu0 0.0
        %4139 = vmatpush1.msra.mxu0 %v3631
        %4140 = vmatprep.subr.mxu0 0.0
        %4141 = vmatpush1.msra.mxu0 %v3632
        %4142 = vmatprep.subr.mxu0 0.0
        %4143 = vmatpush1.msra.mxu0 %v3633
        %4144 = vmatprep.subr.mxu0 0.0
        %4145 = vmatpush1.msra.mxu0 %v3634
        %4146 = vmatprep.subr.mxu0 0.0
        %4147 = vmatpush1.msra.mxu0 %v3635
        %4148 = vmatprep.subr.mxu0 0.0
        %4149 = vmatpush1.msra.mxu0 %v3636
        %4150 = vmatprep.subr.mxu0 0.0
        %4151 = vmatpush1.msra.mxu0 %v3637
        %4152 = vmatprep.subr.mxu0 0.0
        %4153 = vmatpush1.msra.mxu0 %v3638
        %4154 = vmatprep.subr.mxu0 0.0
        %4155 = vmatpush1.msra.mxu0 %v3639
        %4156 = vmatprep.subr.mxu0 0.0
        %4157 = vmatpush1.msra.mxu0 %v3640
        %4158 = vmatprep.subr.mxu0 0.0
        %4159 = vmatpush1.msra.mxu0 %v3641
        %4160 = vmatprep.subr.mxu0 0.0
        %4161 = vmatpush1.msra.mxu0 %v3642
        %4162 = vmatprep.subr.mxu0 0.0
        %4163 = vmatpush1.msra.mxu0 %v3643
        %4164 = vmatprep.subr.mxu0 0.0
        %4165 = vmatpush1.msra.mxu0 %v3644
        %4166 = vmatprep.subr.mxu0 0.0
        %4167 = vmatpush1.msra.mxu0 %v3645
        %4168 = vmatprep.mubr.f32.mxu0 %v3384
        %4169 = vmatmul.mubr.f32.gmra.mrb[0].mxu0 %v3324
        %v4170 = vpop.f32.mrb[0].mxu0
        %v4171 = vadd.f32 %v4026, %v4170
        %v4172 = vpop.f32.mrb[0].mxu0
        %4173 = vmatprep.mubr.f32.mxu0 %v3386
        %4174 = vmatmul.mubr.f32.gmra.mrb[0].mxu0 %v3325
        %v4175 = vpop.f32.mrb[0].mxu0
        %v4176 = vadd.f32 %v4031, %v4175
        %v4177 = vpop.f32.mrb[0].mxu0
        %4178 = vmatprep.mubr.f32.mxu0 %v3389
        %4179 = vmatmul.mubr.f32.gmra.mrb[0].mxu0 %v3327
        %v4180 = vpop.f32.mrb[0].mxu0
        %v4181 = vadd.f32 %v4036, %v4180
        %v4182 = vpop.f32.mrb[0].mxu0
        %4183 = vmatprep.mubr.f32.mxu0 %v3391
        %4184 = vmatmul.mubr.f32.gmra.mrb[0].mxu0 %v3328
        %v4185 = vpop.f32.mrb[0].mxu0
        %v4186 = vadd.f32 %v4041, %v4185
        %v4187 = vpop.f32.mrb[0].mxu0
        %4188 = vmatprep.mubr.f32.mxu0 %v3394
        %4189 = vmatmul.mubr.f32.gmra.mrb[0].mxu0 %v3330
        %v4190 = vpop.f32.mrb[0].mxu0
        %v4191 = vadd.f32 %v4046, %v4190
        %v4192 = vpop.f32.mrb[0].mxu0
        %4193 = vmatprep.mubr.f32.mxu0 %v3396
        %4194 = vmatmul.mubr.f32.gmra.mrb[0].mxu0 %v3331
        %v4195 = vpop.f32.mrb[0].mxu0
        %v4196 = vadd.f32 %v4051, %v4195
        %v4197 = vpop.f32.mrb[0].mxu0
        %4198 = vmatprep.mubr.f32.mxu0 %v3399
        %4199 = vmatmul.mubr.f32.gmra.mrb[0].mxu0 %v3333
        %v4200 = vpop.f32.mrb[0].mxu0
        %v4201 = vadd.f32 %v4056, %v4200
        %v4202 = vpop.f32.mrb[0].mxu0
        %4203 = vmatprep.mubr.f32.mxu0 %v3401
        %4204 = vmatmul.mubr.f32.gmra.mrb[0].mxu0 %v3334
        %v4205 = vpop.f32.mrb[0].mxu0
        %v4206 = vadd.f32 %v4061, %v4205
        %v4207 = vpop.f32.mrb[0].mxu0
        %4208 = vmatprep.mubr.f32.mxu0 %v3404
        %4209 = vmatmul.mubr.f32.gmra.mrb[0].mxu0 %v3336
        %v4210 = vpop.f32.mrb[0].mxu0
        %v4211 = vadd.f32 %v4066, %v4210
        %v4212 = vpop.f32.mrb[0].mxu0
        %4213 = vmatprep.mubr.f32.mxu0 %v3406
        %4214 = vmatmul.mubr.f32.gmra.mrb[0].mxu0 %v3337
        %v4215 = vpop.f32.mrb[0].mxu0
        %v4216 = vadd.f32 %v4071, %v4215
        %v4217 = vpop.f32.mrb[0].mxu0
        %4218 = vmatprep.mubr.f32.mxu0 %v3409
        %4219 = vmatmul.mubr.f32.gmra.mrb[0].mxu0 %v3339
        %v4220 = vpop.f32.mrb[0].mxu0
        %v4221 = vadd.f32 %v4076, %v4220
        %v4222 = vpop.f32.mrb[0].mxu0
        %4223 = vmatprep.mubr.f32.mxu0 %v3411
        %4224 = vmatmul.mubr.f32.gmra.mrb[0].mxu0 %v3340
        %v4225 = vpop.f32.mrb[0].mxu0
        %v4226 = vadd.f32 %v4081, %v4225
        %v4227 = vpop.f32.mrb[0].mxu0
        %4228 = vmatprep.mubr.f32.mxu0 %v3489
        %4229 = vmatmul.mubr.f32.gmra.mrb[0].mxu0 %v3342
        %v4230 = vpop.f32.mrb[0].mxu0
        %v4231 = vadd.f32 %v4086, %v4230
        %v4232 = vpop.f32.mrb[0].mxu0
        %4233 = vmatprep.mubr.f32.mxu0 %v3491
        %4234 = vmatmul.mubr.f32.gmra.mrb[0].mxu0 %v3343
        %v4235 = vpop.f32.mrb[0].mxu0
        %v4236 = vadd.f32 %v4091, %v4235
        %v4237 = vpop.f32.mrb[0].mxu0
        %4238 = vmatprep.mubr.f32.mxu0 %v3506
        %4239 = vmatmul.mubr.f32.gmra.mrb[0].mxu0 %v3345
        %v4240 = vpop.f32.mrb[0].mxu0
        %v4241 = vadd.f32 %v4096, %v4240
        %v4242 = vpop.f32.mrb[0].mxu0
        %4243 = vmatprep.mubr.f32.mxu0 %v3508
        %4244 = vmatmul.mubr.f32.gmra.mrb[0].mxu0 %v3346
        %v4245 = vpop.f32.mrb[0].mxu0
        %v4246 = vadd.f32 %v4101, %v4245
        %v4247 = vpop.f32.mrb[0].mxu0
        %4248 = vdwg.mxu0
        %4249 = vmatprep.subr.mxu0 0.0
        %4250 = vmatpush1.msra.mxu0 %v3646
        %4251 = vmatprep.subr.mxu0 0.0
        %4252 = vmatpush1.msra.mxu0 %v3647
        %4253 = vmatprep.subr.mxu0 0.0
        %4254 = vmatpush1.msra.mxu0 %v3648
        %4255 = vmatprep.subr.mxu0 0.0
        %4256 = vmatpush1.msra.mxu0 %v3649
        %4257 = vmatprep.subr.mxu0 0.0
        %4258 = vmatpush1.msra.mxu0 %v3650
        %4259 = vmatprep.subr.mxu0 0.0
        %4260 = vmatpush1.msra.mxu0 %v3651
        %4261 = vmatprep.subr.mxu0 0.0
        %4262 = vmatpush1.msra.mxu0 %v3652
        %4263 = vmatprep.subr.mxu0 0.0
        %4264 = vmatpush1.msra.mxu0 %v3653
        %4265 = vmatprep.subr.mxu0 0.0
        %4266 = vmatpush1.msra.mxu0 %v3654
        %4267 = vmatprep.subr.mxu0 0.0
        %4268 = vmatpush1.msra.mxu0 %v3655
        %4269 = vmatprep.subr.mxu0 0.0
        %4270 = vmatpush1.msra.mxu0 %v3656
        %4271 = vmatprep.subr.mxu0 0.0
        %4272 = vmatpush1.msra.mxu0 %v3657
        %4273 = vmatprep.subr.mxu0 0.0
        %4274 = vmatpush1.msra.mxu0 %v3658
        %4275 = vmatprep.subr.mxu0 0.0
        %4276 = vmatpush1.msra.mxu0 %v3659
        %4277 = vmatprep.subr.mxu0 0.0
        %4278 = vmatpush1.msra.mxu0 %v3660
        %4279 = vmatprep.subr.mxu0 0.0
        %4280 = vmatpush1.msra.mxu0 %v3661
        %4281 = vmatprep.subr.mxu0 0.0
        %4282 = vmatpush1.msra.mxu0 0.0
        %4283 = vmatprep.subr.mxu0 0.0
        %4284 = vmatpush1.msra.mxu0 0.0
        %4285 = vmatprep.subr.mxu0 0.0
        %4286 = vmatpush1.msra.mxu0 0.0
        %4287 = vmatprep.subr.mxu0 0.0
        %4288 = vmatpush1.msra.mxu0 0.0
        %4289 = vmatprep.subr.mxu0 0.0
        %4290 = vmatpush1.msra.mxu0 0.0
        %4291 = vmatprep.subr.mxu0 0.0
        %4292 = vmatpush1.msra.mxu0 0.0
        %4293 = vmatprep.subr.mxu0 0.0
        %4294 = vmatpush1.msra.mxu0 0.0
        %4295 = vmatprep.subr.mxu0 0.0
        %4296 = vmatpush1.msra.mxu0 0.0
        %4297 = vmatprep.subr.mxu0 0.0
        %4298 = vmatpush1.msra.mxu0 0.0
        %4299 = vmatprep.subr.mxu0 0.0
        %4300 = vmatpush1.msra.mxu0 0.0
        %4301 = vmatprep.subr.mxu0 0.0
        %4302 = vmatpush1.msra.mxu0 0.0
        %4303 = vmatprep.subr.mxu0 0.0
        %4304 = vmatpush1.msra.mxu0 0.0
        %4305 = vmatprep.subr.mxu0 0.0
        %4306 = vmatpush1.msra.mxu0 0.0
        %4307 = vmatprep.subr.mxu0 0.0
        %4308 = vmatpush1.msra.mxu0 0.0
        %4309 = vmatprep.subr.mxu0 0.0
        %4310 = vmatpush1.msra.mxu0 0.0
        %4311 = vmatprep.subr.mxu0 0.0
        %4312 = vmatpush1.msra.mxu0 0.0
        %4313 = vmatprep.mubr.f32.mxu0 0.0
        %4314 = vmatmul.mubr.f32.gmra.mrb[0].mxu0 %v3440
        %v4315 = vpop.f32.mrb[0].mxu0
        %v4316 = vadd.f32 %v4171, %v4315
        %v4317 = vpop.f32.mrb[0].mxu0
        %4318 = vmatprep.mubr.f32.mxu0 0.0
        %4319 = vmatmul.mubr.f32.gmra.mrb[0].mxu0 %v3442
        %v4320 = vpop.f32.mrb[0].mxu0
        %v4321 = vadd.f32 %v4176, %v4320
        %v4322 = vpop.f32.mrb[0].mxu0
        %4323 = vmatprep.mubr.f32.mxu0 0.0
        %4324 = vmatmul.mubr.f32.gmra.mrb[0].mxu0 %v3445
        %v4325 = vpop.f32.mrb[0].mxu0
        %v4326 = vadd.f32 %v4181, %v4325
        %v4327 = vpop.f32.mrb[0].mxu0
        %4328 = vmatprep.mubr.f32.mxu0 0.0
        %4329 = vmatmul.mubr.f32.gmra.mrb[0].mxu0 %v3447
        %v4330 = vpop.f32.mrb[0].mxu0
        %v4331 = vadd.f32 %v4186, %v4330
        %v4332 = vpop.f32.mrb[0].mxu0
        %4333 = vmatprep.mubr.f32.mxu0 0.0
        %4334 = vmatmul.mubr.f32.gmra.mrb[0].mxu0 %v3450
        %v4335 = vpop.f32.mrb[0].mxu0
        %v4336 = vadd.f32 %v4191, %v4335
        %v4337 = vpop.f32.mrb[0].mxu0
        %4338 = vmatprep.mubr.f32.mxu0 0.0
        %4339 = vmatmul.mubr.f32.gmra.mrb[0].mxu0 %v3452
        %v4340 = vpop.f32.mrb[0].mxu0
        %v4341 = vadd.f32 %v4196, %v4340
        %v4342 = vpop.f32.mrb[0].mxu0
        %4343 = vmatprep.mubr.f32.mxu0 0.0
        %4344 = vmatmul.mubr.f32.gmra.mrb[0].mxu0 %v3455
        %v4345 = vpop.f32.mrb[0].mxu0
        %v4346 = vadd.f32 %v4201, %v4345
        %v4347 = vpop.f32.mrb[0].mxu0
        %4348 = vmatprep.mubr.f32.mxu0 0.0
        %4349 = vmatmul.mubr.f32.gmra.mrb[0].mxu0 %v3457
        %v4350 = vpop.f32.mrb[0].mxu0
        %v4351 = vadd.f32 %v4206, %v4350
        %v4352 = vpop.f32.mrb[0].mxu0
        %4353 = vmatprep.mubr.f32.mxu0 0.0
        %4354 = vmatmul.mubr.f32.gmra.mrb[0].mxu0 %v3460
        %v4355 = vpop.f32.mrb[0].mxu0
        %v4356 = vadd.f32 %v4211, %v4355
        %v4357 = vpop.f32.mrb[0].mxu0
        %4358 = vmatprep.mubr.f32.mxu0 0.0
        %4359 = vmatmul.mubr.f32.gmra.mrb[0].mxu0 %v3462
        %v4360 = vpop.f32.mrb[0].mxu0
        %v4361 = vadd.f32 %v4216, %v4360
        %v4362 = vpop.f32.mrb[0].mxu0
        %4363 = vmatprep.mubr.f32.mxu0 0.0
        %4364 = vmatmul.mubr.f32.gmra.mrb[0].mxu0 %v3465
        %v4365 = vpop.f32.mrb[0].mxu0
        %v4366 = vadd.f32 %v4221, %v4365
        %v4367 = vpop.f32.mrb[0].mxu0
        %4368 = vmatprep.mubr.f32.mxu0 0.0
        %4369 = vmatmul.mubr.f32.gmra.mrb[0].mxu0 %v3467
        %v4370 = vpop.f32.mrb[0].mxu0
        %v4371 = vadd.f32 %v4226, %v4370
        %v4372 = vpop.f32.mrb[0].mxu0
        %4373 = vmatprep.mubr.f32.mxu0 0.0
        %4374 = vmatmul.mubr.f32.gmra.mrb[0].mxu0 %v3496
        %v4375 = vpop.f32.mrb[0].mxu0
        %v4376 = vadd.f32 %v4231, %v4375
        %v4377 = vpop.f32.mrb[0].mxu0
        %4378 = vmatprep.mubr.f32.mxu0 0.0
        %4379 = vmatmul.mubr.f32.gmra.mrb[0].mxu0 %v3498
        %v4380 = vpop.f32.mrb[0].mxu0
        %v4381 = vadd.f32 %v4236, %v4380
        %v4382 = vpop.f32.mrb[0].mxu0
        %4383 = vmatprep.mubr.f32.mxu0 0.0
        %4384 = vmatmul.mubr.f32.gmra.mrb[0].mxu0 %v3513
        %v4385 = vpop.f32.mrb[0].mxu0
        %v4386 = vadd.f32 %v4241, %v4385
        %v4387 = vpop.f32.mrb[0].mxu0
        %4388 = vmatprep.mubr.f32.mxu0 0.0
        %4389 = vmatmul.mubr.f32.gmra.mrb[0].mxu0 %v3515
        %v4390 = vpop.f32.mrb[0].mxu0
        %v4391 = vadd.f32 %v4246, %v4390
        %v4392 = vpop.f32.mrb[0].mxu0
        %4393 = vdwg.mxu0
        %v4394 = vxor.u32 %v4316, 2147483648
        %v4395 = vxor.u32 %v4321, 2147483648
        %v4396 = vxor.u32 %v4326, 2147483648
        %v4397 = vxor.u32 %v4331, 2147483648
        %v4398 = vxor.u32 %v4336, 2147483648
        %v4399 = vxor.u32 %v4341, 2147483648
        %v4400 = vxor.u32 %v4346, 2147483648
        %v4401 = vxor.u32 %v4351, 2147483648
        %v4402 = vxor.u32 %v4356, 2147483648
        %v4403 = vxor.u32 %v4361, 2147483648
        %v4404 = vxor.u32 %v4366, 2147483648
        %v4405 = vxor.u32 %v4371, 2147483648
        %v4406 = vxor.u32 %v4376, 2147483648
        %v4407 = vxor.u32 %v4381, 2147483648
        %v4408 = vxor.u32 %v4386, 2147483648
        %v4409 = vxor.u32 %v4391, 2147483648
        %v4410 = vmul.f32 %v4394, 1.442695
        %v4411 = vpow.pop %v4410
        %v4412 = vmul.f32 %v4395, 1.442695
        %v4413 = vpow.pop %v4412
        %v4414 = vmul.f32 %v4396, 1.442695
        %v4415 = vpow.pop %v4414
        %v4416 = vmul.f32 %v4397, 1.442695
        %v4417 = vpow.pop %v4416
        %v4418 = vmul.f32 %v4398, 1.442695
        %v4419 = vpow.pop %v4418
        %v4420 = vmul.f32 %v4399, 1.442695
        %v4421 = vpow.pop %v4420
        %v4422 = vmul.f32 %v4400, 1.442695
        %v4423 = vpow.pop %v4422
        %v4424 = vmul.f32 %v4401, 1.442695
        %v4425 = vpow.pop %v4424
        %v4426 = vmul.f32 %v4402, 1.442695
        %v4427 = vpow.pop %v4426
        %v4428 = vmul.f32 %v4403, 1.442695
        %v4429 = vpow.pop %v4428
        %v4430 = vmul.f32 %v4404, 1.442695
        %v4431 = vpow.pop %v4430
        %v4432 = vmul.f32 %v4405, 1.442695
        %v4433 = vpow.pop %v4432
        %v4434 = vmul.f32 %v4406, 1.442695
        %v4435 = vpow.pop %v4434
        %v4436 = vmul.f32 %v4407, 1.442695
        %v4437 = vpow.pop %v4436
        %v4438 = vmul.f32 %v4408, 1.442695
        %v4439 = vpow.pop %v4438
        %v4440 = vmul.f32 %v4409, 1.442695
        %v4441 = vpow.pop %v4440
        %v4442 = vadd.f32 %v4411, 1.0
        %v4443 = vadd.f32 %v4413, 1.0
        %v4444 = vadd.f32 %v4415, 1.0
        %v4445 = vadd.f32 %v4417, 1.0
        %v4446 = vadd.f32 %v4419, 1.0
        %v4447 = vadd.f32 %v4421, 1.0
        %v4448 = vadd.f32 %v4423, 1.0
        %v4449 = vadd.f32 %v4425, 1.0
        %v4450 = vadd.f32 %v4427, 1.0
        %v4451 = vadd.f32 %v4429, 1.0
        %v4452 = vadd.f32 %v4431, 1.0
        %v4453 = vadd.f32 %v4433, 1.0
        %v4454 = vadd.f32 %v4435, 1.0
        %v4455 = vadd.f32 %v4437, 1.0
        %v4456 = vadd.f32 %v4439, 1.0
        %v4457 = vadd.f32 %v4441, 1.0
        %v4458 = vrcp.pop %v4442
        %v4459 = vmul.f32 1.0, %v4458
        %v4460 = vrcp.pop %v4443
        %v4461 = vmul.f32 1.0, %v4460
        %v4462 = vrcp.pop %v4444
        %v4463 = vmul.f32 1.0, %v4462
        %v4464 = vrcp.pop %v4445
        %v4465 = vmul.f32 1.0, %v4464
        %v4466 = vrcp.pop %v4446
        %v4467 = vmul.f32 1.0, %v4466
        %v4468 = vrcp.pop %v4447
        %v4469 = vmul.f32 1.0, %v4468
        %v4470 = vrcp.pop %v4448
        %v4471 = vmul.f32 1.0, %v4470
        %v4472 = vrcp.pop %v4449
        %v4473 = vmul.f32 1.0, %v4472
        %v4474 = vrcp.pop %v4450
        %v4475 = vmul.f32 1.0, %v4474
        %v4476 = vrcp.pop %v4451
        %v4477 = vmul.f32 1.0, %v4476
        %v4478 = vrcp.pop %v4452
        %v4479 = vmul.f32 1.0, %v4478
        %v4480 = vrcp.pop %v4453
        %v4481 = vmul.f32 1.0, %v4480
        %v4482 = vrcp.pop %v4454
        %v4483 = vmul.f32 1.0, %v4482
        %v4484 = vrcp.pop %v4455
        %v4485 = vmul.f32 1.0, %v4484
        %v4486 = vrcp.pop %v4456
        %v4487 = vmul.f32 1.0, %v4486
        %v4488 = vrcp.pop %v4457
        %v4489 = vmul.f32 1.0, %v4488
        %4490 = vst [vmem:[%s274] sm:$0xff] %v4459
        %4491 = vst [vmem:[%s274 + $0x8] sm:$0xff] %v4461
        %4492 = vst [vmem:[%s274 + $0x10] sm:$0xff] %v4463
        %4493 = vst [vmem:[%s274 + $0x18] sm:$0xff] %v4465
        %4494 = vst [vmem:[%s274 + $0x20] sm:$0xff] %v4467
        %4495 = vst [vmem:[%s274 + $0x28] sm:$0xff] %v4469
        %4496 = vst [vmem:[%s274 + $0x30] sm:$0xff] %v4471
        %4497 = vst [vmem:[%s274 + $0x38] sm:$0xff] %v4473
        %4498 = vst [vmem:[%s274 + $0x40] sm:$0xff] %v4475
        %4499 = vst [vmem:[%s274 + $0x48] sm:$0xff] %v4477
        %4500 = vst [vmem:[%s274 + $0x50] sm:$0xff] %v4479
        %4501 = vst [vmem:[%s274 + $0x58] sm:$0xff] %v4481
        %4502 = vst [vmem:[%s274 + $0x60] sm:$0xff] %v4483
        %4503 = vst [vmem:[%s274 + $0x68] sm:$0xff] %v4485
        %4504 = vst [vmem:[%s274 + $0x70] sm:$0xff] %v4487
        %4505 = vst [vmem:[%s274 + $0x78] sm:$0xff] %v4489
        %s4506 = sand.u32 %s171, 1
        %s4507 = scalar_lea.sflag [#allocation7], %s4506
        %s4508 = sand.u32 %s171, 1
        %s4509 = smul.addr %s4508, 128
        %s4510 = scalar_lea.vmem [#allocation10], %s4509
        // Predicated region
        $region196: #{tpu_custom_call.1} parent=43 // pred_check
          %p4511 = pneg %p181
        $region197: #{tpu_custom_call.1} parent=43 // pred_check_branch
          %4513 = sbr.rel (%p4511) target = $region199
        $region198: #{tpu_custom_call.1} parent=43 // pred_region
          %s4514 = smul.u32 8, %s28
          %s4516 = ssub.s32 2048, 2048
          %4517 = vsyncadd %s4507, %s4516
          %s4518 = smul.addr %s4514, 2
          %s4519 = smul.addr %s27, 32
          %s4520 = sadd.s32 %s4518, %s4519
          %s4521 = smul.addr %s4520, 128
          %s4522 = scalar_lea.hbm %s7, %s4521
          %s4523 = sshll.u32 %s4510, 4
          %s4524 = int_to_ptr.vmem [resolvable:$true] %s4523
          %4529 = dma.vmem_to_hbm [thread:$0]  %s4524, 2048, %s4522, %s4507, 128, 128, 8
        $region199: #{tpu_custom_call.1} parent=43 // pred_fallthru
          _
      $region44: #{tpu_custom_call.1} parent=5 // pred_fallthru
        _
      %p4530 = scmp.le.s32.totalorder 2, %s18
      // Predicated region
      $region200: #{tpu_custom_call.1} parent=5 // pred_check
        %p4531 = pneg %p4530
      $region201: #{tpu_custom_call.1} parent=5 // pred_check_branch
        %4533 = sbr.rel (%p4531) target = $region203
      $region202: #{tpu_custom_call.1} parent=5 // pred_region
        %s4534 = ssub.s32 %s18, 2
        // Predicated region
        $region204: #{tpu_custom_call.1} parent=202 // pred_check
          %p4535 = pneg %p187
        $region205: #{tpu_custom_call.1} parent=202 // pred_check_branch
          %4537 = sbr.rel (%p4535) target = $region207
        $region206: #{tpu_custom_call.1} parent=202 // pred_region
          %s4538 = sand.u32 %s172, 1
          %s4539 = scalar_lea.sflag [#allocation7], %s4538
          %s4540 = sand.u32 %s172, 1
          %s4541 = smul.addr %s4540, 128
          %s4542 = scalar_lea.vmem [#allocation10], %s4541
          %4543 = dma.done %s4539, 2048
        $region207: #{tpu_custom_call.1} parent=202 // pred_fallthru
          _
      $region203: #{tpu_custom_call.1} parent=5 // pred_fallthru
        _
    $region6: #{tpu_custom_call.1} parent=1 // loop_footer
      %s22 = sadd.s32 1, %s18
    $region7: #{tpu_custom_call.1} parent=1 // loop_footer_branch
      %17 = sbr.rel target = $region3
    $region8: #{tpu_custom_call.1} parent=1 // loop_exit
      _
    %4544 = vsyncpa [#allocation6], 1
    %s4545 = scalar_lea.sflag [#allocation6], 1
    %4546 = vsyncpa %s4545, 1
    %4547 = vsyncpa [#allocation9], 1
    %4548 = vsyncpa [#allocation7], 1
    %s4549 = scalar_lea.sflag [#allocation7], 1
    %4550 = vsyncpa %s4549, 1
  %4551 = vsyncmov [#allocation4]
  %s4552 = vpop.sfrf %4551
  %p4553 = scmp.eq.s32.totalorder %s4552, 0
  %p4554 = pneg %p4553
  %4556 = shalt.err (%p4554)
  %s4557 = scalar_lea.sflag [#allocation4], 1
  %4558 = vsyncmov %s4557
  %s4559 = vpop.sfrf %4558
  %p4560 = scmp.eq.s32.totalorder %s4559, 0
  %p4561 = pneg %p4560
  %4563 = shalt.err (%p4561)
  %s4564 = scalar_lea.sflag [#allocation4], 2
  %4565 = vsyncmov %s4564
  %s4566 = vpop.sfrf %4565
  %p4567 = scmp.eq.s32.totalorder %s4566, 0
  %p4568 = pneg %p4567
  %4570 = shalt.err (%p4568)

</llo_original>
